<compile_context>
chip_gen: v7x
topology: tpu7x:2x2x1
jax: 0.10.0
libtpu: 0.0.40
codegen_flags: <defaults>
</compile_context>

<pallas_src>
import functools

import jax
import jax.numpy as jnp
from jax import lax
from jax.experimental import pallas as pl
from jax.experimental.pallas import tpu as pltpu


def _knn_adjacency(pos, col_i, n, k):
    """kNN adjacency (sum of k one-hots per row) over 2-D positions.

    pos: [N, 2] f32 (x[:, :2]); col_i: [N, N] int32 column iota (hoisted).
    Returns A: [N, N] f32 where row i has exactly k ones at the k nearest
    points (self included, since self-distance is the row minimum).
    Ties (distances equal in the top 32-ceil(log2(N)) key bits) are broken by
    lowest column index, which may differ from torch knn's tie order.
    """
    # Gram matrix on the MXU; contract channel axis of both operands.
    gram = lax.dot_general(
        pos, pos, (((1,), (1,)), ((), ())), preferred_element_type=jnp.float32
    )  # [N, N], gram[i, j] = p_i . p_j

    # |p_j|^2 as a [1, N] row via a tiny matmul (no eye mask, no sublane reduce).
    sq = pos * pos                                        # [N, 2]
    ones_row = jnp.ones((1, 2), jnp.float32)
    sq_row = lax.dot_general(
        ones_row, sq, (((1,), (1,)), ((), ())), preferred_element_type=jnp.float32
    )  # [1, N]

    # dist[i, j] = |p_i - p_j|^2 - |p_i|^2  (dropped term is constant per row,
    # so per-row top-k ordering is identical to true squared distance).
    dist = sq_row - 2.0 * gram                            # [N, N], may be negative

    # Pack (distance, column index) into one sortable int32 key so each top-k
    # iteration needs a single lane (XLU) reduction instead of two.
    bits = pltpu.bitcast(dist, jnp.int32)
    # Monotone f32 -> int32 map: flip magnitude bits of negative floats.
    key = jnp.where(bits < 0, bits ^ jnp.int32(0x7FFFFFFF), bits)
    idx_bits = max(1, (n - 1).bit_length())
    idx_mask = (1 << idx_bits) - 1
    packed = (key & jnp.int32(~idx_mask)) | col_i         # low bits carry col index

    int_max = jnp.int32(0x7FFFFFFF)
    adj = jnp.zeros((n, n), jnp.float32)
    for _ in range(k):  # k = n_neighbors + 1 (includes self), small & static
        best = jnp.min(packed, axis=1, keepdims=True)     # [N, 1] single reduction
        arg = best & jnp.int32(idx_mask)                  # decoded neighbor index
        sel = col_i == arg                                # [N, N] one-hot per row
        adj = adj + sel.astype(jnp.float32)
        packed = jnp.where(sel, int_max, packed)          # retire selected entries
    return adj


def npa_kernel(x_ref, w1_ref, b1_ref, w2_ref, b2_ref, o_ref, *,
               n, k, update_rate, n_steps):
    x = x_ref[...]                                        # [N, C] (batch squeezed)
    w1 = w1_ref[...]
    b1 = b1_ref[...]
    w2 = w2_ref[...]
    b2 = b2_ref[...]

    inv_k = jnp.float32(1.0 / k)
    ur = jnp.float32(update_rate)

    # Hoisted: JAX does not CSE iota/broadcasts across unrolled steps.
    col_i = lax.broadcasted_iota(jnp.int32, (n, n), 1)

    def npa_step(xc):
        pos = xc[:, 0:2]                                  # x[:, :2]
        adj = _knn_adjacency(pos, col_i, n, k)            # [N, N]

        # GCN layer 1: mean over kNN neighborhood -> Linear -> ReLU.
        agg1 = jnp.dot(adj, xc, preferred_element_type=jnp.float32) * inv_k
        h = jnp.maximum(
            jnp.dot(agg1, w1, preferred_element_type=jnp.float32) + b1, 0.0
        )                                                 # [N, H]

        # GCN layer 2, reassociated: adj @ (h @ w2) — same math, fewer flops.
        hw2 = jnp.dot(h, w2, preferred_element_type=jnp.float32)        # [N, C]
        update = jnp.dot(adj, hw2, preferred_element_type=jnp.float32) * inv_k + b2

        return xc + update * ur                           # residual NPA update

    if n_steps <= 4:
        for _ in range(n_steps):                          # small static unroll
            x = npa_step(x)
    else:
        x = lax.fori_loop(0, n_steps, lambda _, xc: npa_step(xc), x)

    o_ref[...] = x


def npa_forward(x, w1, b1, w2, b2, *, n_neighbors=8, update_rate=0.001, n_steps=1):
    """Batched NPA.forward (target=None). x: [B, N, C] f32 -> [B, N, C] f32."""
    b, n, c = x.shape
    h = w1.shape[1]
    k = n_neighbors + 1
    assert k <= n, "n_neighbors + 1 must not exceed the number of points"

    kernel = functools.partial(
        npa_kernel, n=n, k=k, update_rate=update_rate, n_steps=n_steps
    )
    shared = lambda s: pl.BlockSpec(s, lambda i: (0, 0))   # weights: same block ∀ clouds
    cloud = pl.BlockSpec((None, n, c), lambda i: (i, 0, 0))  # per-cloud, batch squeezed

    return pl.pallas_call(
        kernel,
        out_shape=jax.ShapeDtypeStruct((b, n, c), jnp.float32),
        grid=(b,),
        in_specs=[
            cloud,            # x
            shared((c, h)),   # W1
            shared((1, h)),   # b1
            shared((h, c)),   # W2
            shared((1, c)),   # b2
        ],
        out_specs=cloud,
        input_output_aliases={0: 0},   # update x in place
        compiler_params=pltpu.CompilerParams(
            dimension_semantics=("parallel",)),   # v7x: shard clouds across TCs
    )(x, w1, b1, w2, b2)


if __name__ == "__main__":
    # Deterministic example: 2 clouds of 128 points (lane-dense [N,N] work),
    # 8 channels (first 2 = xy pos), hidden width 32, 4 neighbors (+ self),
    # 2 NPA steps.
    B, N, C, H = 2, 128, 8, 32
    key = jax.random.PRNGKey(0)
    kx, k1, k2, k3, k4 = jax.random.split(key, 5)

    x = jax.random.normal(kx, (B, N, C), jnp.float32)
    w1 = jax.random.normal(k1, (C, H), jnp.float32) * 0.1
    b1 = jax.random.normal(k2, (1, H), jnp.float32) * 0.1
    w2 = jax.random.normal(k3, (H, C), jnp.float32) * 0.1
    b2 = jax.random.normal(k4, (1, C), jnp.float32) * 0.1

    out = npa_forward(
        x, w1, b1, w2, b2, n_neighbors=4, update_rate=0.001, n_steps=2
    )
    jax.block_until_ready(out)
    assert out.shape == (B, N, C) and out.dtype == jnp.float32
    print("KERNEL_OK")
</pallas_src>

<mosaic_0001>
module attributes {stable_mosaic.version = 11 : i64} {
  func.func @npa_kernel(%arg0: i32, %arg1: memref<1x128x8xf32, #tpu.memory_space<vmem>>, %arg2: memref<8x32xf32, #tpu.memory_space<vmem>>, %arg3: memref<1x32xf32, #tpu.memory_space<vmem>>, %arg4: memref<32x8xf32, #tpu.memory_space<vmem>>, %arg5: memref<1x8xf32, #tpu.memory_space<vmem>>, %arg6: memref<1x128x8xf32, #tpu.memory_space<vmem>>) attributes {dimension_semantics = [#tpu.dimension_semantics<parallel>], iteration_bounds = array<i64: 2>, scalar_prefetch = 0 : i64, scratch_operands = 0 : i64, tpu.core_type = #tpu.core_type<tc>, window_params = [{transform_indices = @transform_0, window_bounds = array<i64: 1, 128, 8>}, {pipeline_mode = #tpu.pipeline_mode<synchronous>, transform_indices = @transform_1, window_bounds = array<i64: 8, 32>}, {pipeline_mode = #tpu.pipeline_mode<synchronous>, transform_indices = @transform_2, window_bounds = array<i64: 1, 32>}, {pipeline_mode = #tpu.pipeline_mode<synchronous>, transform_indices = @transform_3, window_bounds = array<i64: 32, 8>}, {pipeline_mode = #tpu.pipeline_mode<synchronous>, transform_indices = @transform_4, window_bounds = array<i64: 1, 8>}, {transform_indices = @transform_5, window_bounds = array<i64: 1, 128, 8>}]} {
    %c0 = arith.constant 0 : index
    %c0_0 = arith.constant 0 : index
    %c0_1 = arith.constant 0 : index
    %0 = vector.load %arg1[%c0, %c0_0, %c0_1] : memref<1x128x8xf32, #tpu.memory_space<vmem>>, vector<1x128x8xf32>
    %1 = vector.shape_cast %0 : vector<1x128x8xf32> to vector<128x8xf32>
    %c0_2 = arith.constant 0 : index
    %c0_3 = arith.constant 0 : index
    %2 = vector.load %arg2[%c0_2, %c0_3] : memref<8x32xf32, #tpu.memory_space<vmem>>, vector<8x32xf32>
    %c0_4 = arith.constant 0 : index
    %c0_5 = arith.constant 0 : index
    %3 = vector.load %arg3[%c0_4, %c0_5] : memref<1x32xf32, #tpu.memory_space<vmem>>, vector<1x32xf32>
    %c0_6 = arith.constant 0 : index
    %c0_7 = arith.constant 0 : index
    %4 = vector.load %arg4[%c0_6, %c0_7] : memref<32x8xf32, #tpu.memory_space<vmem>>, vector<32x8xf32>
    %c0_8 = arith.constant 0 : index
    %c0_9 = arith.constant 0 : index
    %5 = vector.load %arg5[%c0_8, %c0_9] : memref<1x8xf32, #tpu.memory_space<vmem>>, vector<1x8xf32>
    %6 = tpu.iota {dimensions = array<i32: 1>} : vector<128x128xi32>
    %7 = vector.extract_strided_slice %1 {offsets = [0, 0], sizes = [128, 2], strides = [1, 1]} : vector<128x8xf32> to vector<128x2xf32>
    %cst = arith.constant dense<0.000000e+00> : vector<128x128xf32>
    %8 = tpu.matmul %7, %7, %cst {dimension_numbers = #tpu.dot_dimension_numbers<[1], [1], [0], [0], [0, 0, 1, 0], [], []>} : vector<128x2xf32>, vector<128x2xf32>, vector<128x128xf32> -> vector<128x128xf32>
    %9 = arith.mulf %7, %7 : vector<128x2xf32>
    %cst_10 = arith.constant 1.000000e+00 : f32
    %10 = vector.broadcast %cst_10 : f32 to vector<1x2xf32>
    %cst_11 = arith.constant dense<0.000000e+00> : vector<1x128xf32>
    %11 = tpu.matmul %10, %9, %cst_11 {dimension_numbers = #tpu.dot_dimension_numbers<[1], [1], [0], [0], [0, 0, 1, 0], [], []>} : vector<1x2xf32>, vector<128x2xf32>, vector<1x128xf32> -> vector<1x128xf32>
    %cst_12 = arith.constant 2.000000e+00 : f32
    %12 = vector.broadcast %cst_12 : f32 to vector<128x128xf32>
    %13 = arith.mulf %12, %8 : vector<128x128xf32>
    %14 = vector.broadcast %11 : vector<1x128xf32> to vector<128x128xf32>
    %15 = arith.subf %14, %13 : vector<128x128xf32>
    %16 = tpu.bitcast %15 : vector<128x128xf32> -> vector<128x128xi32>
    %c0_i32 = arith.constant 0 : i32
    %17 = vector.broadcast %c0_i32 : i32 to vector<128x128xi32>
    %18 = arith.cmpi slt, %16, %17 : vector<128x128xi32>
    %c2147483647_i32 = arith.constant 2147483647 : i32
    %19 = vector.broadcast %c2147483647_i32 : i32 to vector<128x128xi32>
    %20 = arith.xori %16, %19 : vector<128x128xi32>
    %21 = arith.select %18, %20, %16 : vector<128x128xi1>, vector<128x128xi32>
    %c-128_i32 = arith.constant -128 : i32
    %22 = vector.broadcast %c-128_i32 : i32 to vector<128x128xi32>
    %23 = arith.andi %21, %22 : vector<128x128xi32>
    %24 = arith.ori %23, %6 : vector<128x128xi32>
    %cst_13 = arith.constant 0.000000e+00 : f32
    %25 = vector.broadcast %cst_13 : f32 to vector<128x128xf32>
    %cst_14 = arith.constant dense<2147483647> : vector<128xi32>
    %26 = vector.multi_reduction <minsi>, %24, %cst_14 [1] : vector<128x128xi32> to vector<128xi32>
    %27 = vector.shape_cast %26 : vector<128xi32> to vector<128x1xi32>
    %c127_i32 = arith.constant 127 : i32
    %28 = vector.broadcast %c127_i32 : i32 to vector<128x1xi32>
    %29 = arith.andi %27, %28 : vector<128x1xi32>
    %30 = vector.broadcast %29 : vector<128x1xi32> to vector<128x128xi32>
    %31 = arith.cmpi eq, %6, %30 : vector<128x128xi32>
    %32 = arith.extui %31 : vector<128x128xi1> to vector<128x128xi32>
    %33 = arith.sitofp %32 : vector<128x128xi32> to vector<128x128xf32>
    %34 = arith.addf %25, %33 : vector<128x128xf32>
    %c2147483647_i32_15 = arith.constant 2147483647 : i32
    %35 = vector.broadcast %c2147483647_i32_15 : i32 to vector<128x128xi32>
    %36 = arith.select %31, %35, %24 : vector<128x128xi1>, vector<128x128xi32>
    %cst_16 = arith.constant dense<2147483647> : vector<128xi32>
    %37 = vector.multi_reduction <minsi>, %36, %cst_16 [1] : vector<128x128xi32> to vector<128xi32>
    %38 = vector.shape_cast %37 : vector<128xi32> to vector<128x1xi32>
    %c127_i32_17 = arith.constant 127 : i32
    %39 = vector.broadcast %c127_i32_17 : i32 to vector<128x1xi32>
    %40 = arith.andi %38, %39 : vector<128x1xi32>
    %41 = vector.broadcast %40 : vector<128x1xi32> to vector<128x128xi32>
    %42 = arith.cmpi eq, %6, %41 : vector<128x128xi32>
    %43 = arith.extui %42 : vector<128x128xi1> to vector<128x128xi32>
    %44 = arith.sitofp %43 : vector<128x128xi32> to vector<128x128xf32>
    %45 = arith.addf %34, %44 : vector<128x128xf32>
    %c2147483647_i32_18 = arith.constant 2147483647 : i32
    %46 = vector.broadcast %c2147483647_i32_18 : i32 to vector<128x128xi32>
    %47 = arith.select %42, %46, %36 : vector<128x128xi1>, vector<128x128xi32>
    %cst_19 = arith.constant dense<2147483647> : vector<128xi32>
    %48 = vector.multi_reduction <minsi>, %47, %cst_19 [1] : vector<128x128xi32> to vector<128xi32>
    %49 = vector.shape_cast %48 : vector<128xi32> to vector<128x1xi32>
    %c127_i32_20 = arith.constant 127 : i32
    %50 = vector.broadcast %c127_i32_20 : i32 to vector<128x1xi32>
    %51 = arith.andi %49, %50 : vector<128x1xi32>
    %52 = vector.broadcast %51 : vector<128x1xi32> to vector<128x128xi32>
    %53 = arith.cmpi eq, %6, %52 : vector<128x128xi32>
    %54 = arith.extui %53 : vector<128x128xi1> to vector<128x128xi32>
    %55 = arith.sitofp %54 : vector<128x128xi32> to vector<128x128xf32>
    %56 = arith.addf %45, %55 : vector<128x128xf32>
    %c2147483647_i32_21 = arith.constant 2147483647 : i32
    %57 = vector.broadcast %c2147483647_i32_21 : i32 to vector<128x128xi32>
    %58 = arith.select %53, %57, %47 : vector<128x128xi1>, vector<128x128xi32>
    %cst_22 = arith.constant dense<2147483647> : vector<128xi32>
    %59 = vector.multi_reduction <minsi>, %58, %cst_22 [1] : vector<128x128xi32> to vector<128xi32>
    %60 = vector.shape_cast %59 : vector<128xi32> to vector<128x1xi32>
    %c127_i32_23 = arith.constant 127 : i32
    %61 = vector.broadcast %c127_i32_23 : i32 to vector<128x1xi32>
    %62 = arith.andi %60, %61 : vector<128x1xi32>
    %63 = vector.broadcast %62 : vector<128x1xi32> to vector<128x128xi32>
    %64 = arith.cmpi eq, %6, %63 : vector<128x128xi32>
    %65 = arith.extui %64 : vector<128x128xi1> to vector<128x128xi32>
    %66 = arith.sitofp %65 : vector<128x128xi32> to vector<128x128xf32>
    %67 = arith.addf %56, %66 : vector<128x128xf32>
    %c2147483647_i32_24 = arith.constant 2147483647 : i32
    %68 = vector.broadcast %c2147483647_i32_24 : i32 to vector<128x128xi32>
    %69 = arith.select %64, %68, %58 : vector<128x128xi1>, vector<128x128xi32>
    %cst_25 = arith.constant dense<2147483647> : vector<128xi32>
    %70 = vector.multi_reduction <minsi>, %69, %cst_25 [1] : vector<128x128xi32> to vector<128xi32>
    %71 = vector.shape_cast %70 : vector<128xi32> to vector<128x1xi32>
    %c127_i32_26 = arith.constant 127 : i32
    %72 = vector.broadcast %c127_i32_26 : i32 to vector<128x1xi32>
    %73 = arith.andi %71, %72 : vector<128x1xi32>
    %74 = vector.broadcast %73 : vector<128x1xi32> to vector<128x128xi32>
    %75 = arith.cmpi eq, %6, %74 : vector<128x128xi32>
    %76 = arith.extui %75 : vector<128x128xi1> to vector<128x128xi32>
    %77 = arith.sitofp %76 : vector<128x128xi32> to vector<128x128xf32>
    %78 = arith.addf %67, %77 : vector<128x128xf32>
    %cst_27 = arith.constant dense<0.000000e+00> : vector<128x8xf32>
    %79 = tpu.matmul %78, %1, %cst_27 {dimension_numbers = #tpu.dot_dimension_numbers<[1], [0], [0], [1], [0, 0, 1, 1], [], []>} : vector<128x128xf32>, vector<128x8xf32>, vector<128x8xf32> -> vector<128x8xf32>
    %cst_28 = arith.constant 2.000000e-01 : f32
    %80 = vector.broadcast %cst_28 : f32 to vector<128x8xf32>
    %81 = arith.mulf %79, %80 : vector<128x8xf32>
    %cst_29 = arith.constant dense<0.000000e+00> : vector<128x32xf32>
    %82 = tpu.matmul %81, %2, %cst_29 {dimension_numbers = #tpu.dot_dimension_numbers<[1], [0], [0], [1], [0, 0, 1, 1], [], []>} : vector<128x8xf32>, vector<8x32xf32>, vector<128x32xf32> -> vector<128x32xf32>
    %83 = vector.broadcast %3 : vector<1x32xf32> to vector<128x32xf32>
    %84 = arith.addf %82, %83 : vector<128x32xf32>
    %cst_30 = arith.constant 0.000000e+00 : f32
    %85 = vector.broadcast %cst_30 : f32 to vector<128x32xf32>
    %86 = arith.maximumf %84, %85 : vector<128x32xf32>
    %cst_31 = arith.constant dense<0.000000e+00> : vector<128x8xf32>
    %87 = tpu.matmul %86, %4, %cst_31 {dimension_numbers = #tpu.dot_dimension_numbers<[1], [0], [0], [1], [0, 0, 1, 1], [], []>} : vector<128x32xf32>, vector<32x8xf32>, vector<128x8xf32> -> vector<128x8xf32>
    %cst_32 = arith.constant dense<0.000000e+00> : vector<128x8xf32>
    %88 = tpu.matmul %78, %87, %cst_32 {dimension_numbers = #tpu.dot_dimension_numbers<[1], [0], [0], [1], [0, 0, 1, 1], [], []>} : vector<128x128xf32>, vector<128x8xf32>, vector<128x8xf32> -> vector<128x8xf32>
    %cst_33 = arith.constant 2.000000e-01 : f32
    %89 = vector.broadcast %cst_33 : f32 to vector<128x8xf32>
    %90 = arith.mulf %88, %89 : vector<128x8xf32>
    %91 = vector.broadcast %5 : vector<1x8xf32> to vector<128x8xf32>
    %92 = arith.addf %90, %91 : vector<128x8xf32>
    %cst_34 = arith.constant 1.000000e-03 : f32
    %93 = vector.broadcast %cst_34 : f32 to vector<128x8xf32>
    %94 = arith.mulf %92, %93 : vector<128x8xf32>
    %95 = arith.addf %1, %94 : vector<128x8xf32>
    %96 = vector.extract_strided_slice %95 {offsets = [0, 0], sizes = [128, 2], strides = [1, 1]} : vector<128x8xf32> to vector<128x2xf32>
    %cst_35 = arith.constant dense<0.000000e+00> : vector<128x128xf32>
    %97 = tpu.matmul %96, %96, %cst_35 {dimension_numbers = #tpu.dot_dimension_numbers<[1], [1], [0], [0], [0, 0, 1, 0], [], []>} : vector<128x2xf32>, vector<128x2xf32>, vector<128x128xf32> -> vector<128x128xf32>
    %98 = arith.mulf %96, %96 : vector<128x2xf32>
    %cst_36 = arith.constant 1.000000e+00 : f32
    %99 = vector.broadcast %cst_36 : f32 to vector<1x2xf32>
    %cst_37 = arith.constant dense<0.000000e+00> : vector<1x128xf32>
    %100 = tpu.matmul %99, %98, %cst_37 {dimension_numbers = #tpu.dot_dimension_numbers<[1], [1], [0], [0], [0, 0, 1, 0], [], []>} : vector<1x2xf32>, vector<128x2xf32>, vector<1x128xf32> -> vector<1x128xf32>
    %cst_38 = arith.constant 2.000000e+00 : f32
    %101 = vector.broadcast %cst_38 : f32 to vector<128x128xf32>
    %102 = arith.mulf %101, %97 : vector<128x128xf32>
    %103 = vector.broadcast %100 : vector<1x128xf32> to vector<128x128xf32>
    %104 = arith.subf %103, %102 : vector<128x128xf32>
    %105 = tpu.bitcast %104 : vector<128x128xf32> -> vector<128x128xi32>
    %c0_i32_39 = arith.constant 0 : i32
    %106 = vector.broadcast %c0_i32_39 : i32 to vector<128x128xi32>
    %107 = arith.cmpi slt, %105, %106 : vector<128x128xi32>
    %c2147483647_i32_40 = arith.constant 2147483647 : i32
    %108 = vector.broadcast %c2147483647_i32_40 : i32 to vector<128x128xi32>
    %109 = arith.xori %105, %108 : vector<128x128xi32>
    %110 = arith.select %107, %109, %105 : vector<128x128xi1>, vector<128x128xi32>
    %c-128_i32_41 = arith.constant -128 : i32
    %111 = vector.broadcast %c-128_i32_41 : i32 to vector<128x128xi32>
    %112 = arith.andi %110, %111 : vector<128x128xi32>
    %113 = arith.ori %112, %6 : vector<128x128xi32>
    %cst_42 = arith.constant 0.000000e+00 : f32
    %114 = vector.broadcast %cst_42 : f32 to vector<128x128xf32>
    %cst_43 = arith.constant dense<2147483647> : vector<128xi32>
    %115 = vector.multi_reduction <minsi>, %113, %cst_43 [1] : vector<128x128xi32> to vector<128xi32>
    %116 = vector.shape_cast %115 : vector<128xi32> to vector<128x1xi32>
    %c127_i32_44 = arith.constant 127 : i32
    %117 = vector.broadcast %c127_i32_44 : i32 to vector<128x1xi32>
    %118 = arith.andi %116, %117 : vector<128x1xi32>
    %119 = vector.broadcast %118 : vector<128x1xi32> to vector<128x128xi32>
    %120 = arith.cmpi eq, %6, %119 : vector<128x128xi32>
    %121 = arith.extui %120 : vector<128x128xi1> to vector<128x128xi32>
    %122 = arith.sitofp %121 : vector<128x128xi32> to vector<128x128xf32>
    %123 = arith.addf %114, %122 : vector<128x128xf32>
    %c2147483647_i32_45 = arith.constant 2147483647 : i32
    %124 = vector.broadcast %c2147483647_i32_45 : i32 to vector<128x128xi32>
    %125 = arith.select %120, %124, %113 : vector<128x128xi1>, vector<128x128xi32>
    %cst_46 = arith.constant dense<2147483647> : vector<128xi32>
    %126 = vector.multi_reduction <minsi>, %125, %cst_46 [1] : vector<128x128xi32> to vector<128xi32>
    %127 = vector.shape_cast %126 : vector<128xi32> to vector<128x1xi32>
    %c127_i32_47 = arith.constant 127 : i32
    %128 = vector.broadcast %c127_i32_47 : i32 to vector<128x1xi32>
    %129 = arith.andi %127, %128 : vector<128x1xi32>
    %130 = vector.broadcast %129 : vector<128x1xi32> to vector<128x128xi32>
    %131 = arith.cmpi eq, %6, %130 : vector<128x128xi32>
    %132 = arith.extui %131 : vector<128x128xi1> to vector<128x128xi32>
    %133 = arith.sitofp %132 : vector<128x128xi32> to vector<128x128xf32>
    %134 = arith.addf %123, %133 : vector<128x128xf32>
    %c2147483647_i32_48 = arith.constant 2147483647 : i32
    %135 = vector.broadcast %c2147483647_i32_48 : i32 to vector<128x128xi32>
    %136 = arith.select %131, %135, %125 : vector<128x128xi1>, vector<128x128xi32>
    %cst_49 = arith.constant dense<2147483647> : vector<128xi32>
    %137 = vector.multi_reduction <minsi>, %136, %cst_49 [1] : vector<128x128xi32> to vector<128xi32>
    %138 = vector.shape_cast %137 : vector<128xi32> to vector<128x1xi32>
    %c127_i32_50 = arith.constant 127 : i32
    %139 = vector.broadcast %c127_i32_50 : i32 to vector<128x1xi32>
    %140 = arith.andi %138, %139 : vector<128x1xi32>
    %141 = vector.broadcast %140 : vector<128x1xi32> to vector<128x128xi32>
    %142 = arith.cmpi eq, %6, %141 : vector<128x128xi32>
    %143 = arith.extui %142 : vector<128x128xi1> to vector<128x128xi32>
    %144 = arith.sitofp %143 : vector<128x128xi32> to vector<128x128xf32>
    %145 = arith.addf %134, %144 : vector<128x128xf32>
    %c2147483647_i32_51 = arith.constant 2147483647 : i32
    %146 = vector.broadcast %c2147483647_i32_51 : i32 to vector<128x128xi32>
    %147 = arith.select %142, %146, %136 : vector<128x128xi1>, vector<128x128xi32>
    %cst_52 = arith.constant dense<2147483647> : vector<128xi32>
    %148 = vector.multi_reduction <minsi>, %147, %cst_52 [1] : vector<128x128xi32> to vector<128xi32>
    %149 = vector.shape_cast %148 : vector<128xi32> to vector<128x1xi32>
    %c127_i32_53 = arith.constant 127 : i32
    %150 = vector.broadcast %c127_i32_53 : i32 to vector<128x1xi32>
    %151 = arith.andi %149, %150 : vector<128x1xi32>
    %152 = vector.broadcast %151 : vector<128x1xi32> to vector<128x128xi32>
    %153 = arith.cmpi eq, %6, %152 : vector<128x128xi32>
    %154 = arith.extui %153 : vector<128x128xi1> to vector<128x128xi32>
    %155 = arith.sitofp %154 : vector<128x128xi32> to vector<128x128xf32>
    %156 = arith.addf %145, %155 : vector<128x128xf32>
    %c2147483647_i32_54 = arith.constant 2147483647 : i32
    %157 = vector.broadcast %c2147483647_i32_54 : i32 to vector<128x128xi32>
    %158 = arith.select %153, %157, %147 : vector<128x128xi1>, vector<128x128xi32>
    %cst_55 = arith.constant dense<2147483647> : vector<128xi32>
    %159 = vector.multi_reduction <minsi>, %158, %cst_55 [1] : vector<128x128xi32> to vector<128xi32>
    %160 = vector.shape_cast %159 : vector<128xi32> to vector<128x1xi32>
    %c127_i32_56 = arith.constant 127 : i32
    %161 = vector.broadcast %c127_i32_56 : i32 to vector<128x1xi32>
    %162 = arith.andi %160, %161 : vector<128x1xi32>
    %163 = vector.broadcast %162 : vector<128x1xi32> to vector<128x128xi32>
    %164 = arith.cmpi eq, %6, %163 : vector<128x128xi32>
    %165 = arith.extui %164 : vector<128x128xi1> to vector<128x128xi32>
    %166 = arith.sitofp %165 : vector<128x128xi32> to vector<128x128xf32>
    %167 = arith.addf %156, %166 : vector<128x128xf32>
    %cst_57 = arith.constant dense<0.000000e+00> : vector<128x8xf32>
    %168 = tpu.matmul %167, %95, %cst_57 {dimension_numbers = #tpu.dot_dimension_numbers<[1], [0], [0], [1], [0, 0, 1, 1], [], []>} : vector<128x128xf32>, vector<128x8xf32>, vector<128x8xf32> -> vector<128x8xf32>
    %cst_58 = arith.constant 2.000000e-01 : f32
    %169 = vector.broadcast %cst_58 : f32 to vector<128x8xf32>
    %170 = arith.mulf %168, %169 : vector<128x8xf32>
    %cst_59 = arith.constant dense<0.000000e+00> : vector<128x32xf32>
    %171 = tpu.matmul %170, %2, %cst_59 {dimension_numbers = #tpu.dot_dimension_numbers<[1], [0], [0], [1], [0, 0, 1, 1], [], []>} : vector<128x8xf32>, vector<8x32xf32>, vector<128x32xf32> -> vector<128x32xf32>
    %172 = vector.broadcast %3 : vector<1x32xf32> to vector<128x32xf32>
    %173 = arith.addf %171, %172 : vector<128x32xf32>
    %cst_60 = arith.constant 0.000000e+00 : f32
    %174 = vector.broadcast %cst_60 : f32 to vector<128x32xf32>
    %175 = arith.maximumf %173, %174 : vector<128x32xf32>
    %cst_61 = arith.constant dense<0.000000e+00> : vector<128x8xf32>
    %176 = tpu.matmul %175, %4, %cst_61 {dimension_numbers = #tpu.dot_dimension_numbers<[1], [0], [0], [1], [0, 0, 1, 1], [], []>} : vector<128x32xf32>, vector<32x8xf32>, vector<128x8xf32> -> vector<128x8xf32>
    %cst_62 = arith.constant dense<0.000000e+00> : vector<128x8xf32>
    %177 = tpu.matmul %167, %176, %cst_62 {dimension_numbers = #tpu.dot_dimension_numbers<[1], [0], [0], [1], [0, 0, 1, 1], [], []>} : vector<128x128xf32>, vector<128x8xf32>, vector<128x8xf32> -> vector<128x8xf32>
    %cst_63 = arith.constant 2.000000e-01 : f32
    %178 = vector.broadcast %cst_63 : f32 to vector<128x8xf32>
    %179 = arith.mulf %177, %178 : vector<128x8xf32>
    %180 = vector.broadcast %5 : vector<1x8xf32> to vector<128x8xf32>
    %181 = arith.addf %179, %180 : vector<128x8xf32>
    %cst_64 = arith.constant 1.000000e-03 : f32
    %182 = vector.broadcast %cst_64 : f32 to vector<128x8xf32>
    %183 = arith.mulf %181, %182 : vector<128x8xf32>
    %184 = arith.addf %95, %183 : vector<128x8xf32>
    %c0_65 = arith.constant 0 : index
    %c0_66 = arith.constant 0 : index
    %c0_67 = arith.constant 0 : index
    %185 = vector.load %arg6[%c0_65, %c0_66, %c0_67] : memref<1x128x8xf32, #tpu.memory_space<vmem>>, vector<1x128x8xf32>
    %186 = vector.shape_cast %185 : vector<1x128x8xf32> to vector<128x8xf32>
    %187 = vector.shape_cast %184 : vector<128x8xf32> to vector<1x128x8xf32>
    tpu.vector_store %arg6[%c0_65, %c0_66, %c0_67], %187 {strides = array<i32>} : memref<1x128x8xf32, #tpu.memory_space<vmem>>, vector<1x128x8xf32>,
    return
  }
  func.func @transform_0(%arg0: i32) -> (i32, i32, i32) {
    %c0_i32 = arith.constant 0 : i32
    %c0_i32_0 = arith.constant 0 : i32
    %c0_i32_1 = arith.constant 0 : i32
    return %arg0, %c0_i32, %c0_i32_0 : i32, i32, i32
  }
  func.func @transform_1(%arg0: i32) -> (i32, i32) {
    %c0_i32 = arith.constant 0 : i32
    %c0_i32_0 = arith.constant 0 : i32
    %c0_i32_1 = arith.constant 0 : i32
    return %c0_i32, %c0_i32_0 : i32, i32
  }
  func.func @transform_2(%arg0: i32) -> (i32, i32) {
    %c0_i32 = arith.constant 0 : i32
    %c0_i32_0 = arith.constant 0 : i32
    %c0_i32_1 = arith.constant 0 : i32
    return %c0_i32, %c0_i32_0 : i32, i32
  }
  func.func @transform_3(%arg0: i32) -> (i32, i32) {
    %c0_i32 = arith.constant 0 : i32
    %c0_i32_0 = arith.constant 0 : i32
    %c0_i32_1 = arith.constant 0 : i32
    return %c0_i32, %c0_i32_0 : i32, i32
  }
  func.func @transform_4(%arg0: i32) -> (i32, i32) {
    %c0_i32 = arith.constant 0 : i32
    %c0_i32_0 = arith.constant 0 : i32
    %c0_i32_1 = arith.constant 0 : i32
    return %c0_i32, %c0_i32_0 : i32, i32
  }
  func.func @transform_5(%arg0: i32) -> (i32, i32, i32) {
    %c0_i32 = arith.constant 0 : i32
    %c0_i32_0 = arith.constant 0 : i32
    %c0_i32_1 = arith.constant 0 : i32
    return %arg0, %c0_i32, %c0_i32_0 : i32, i32, i32
  }
}

</mosaic_0001>

<llo_original>
// kernel: tpu_custom_call.1
$region0: #{tpu_custom_call.1}
  #allocation0 [shape = 'u32[]', space=smem, size = 0x4, offset = 0x4, fixed_abs, tag = 'smem constant byte address 0x4 - core index']
  #allocation1 [shape = 'u32[144,128]{1,0:T(1,128)}', space=vmem, size = 0x12000, scoped, tag = 'internal scratch']
  %s0 = inlined_call_operand.vmem [shape: f32[2,128,8], index: 0, kind: input, shape index: {}, may-alias: {0,5}]
  %s1 = inlined_call_operand.vmem [shape: f32[8,32], index: 1, kind: input, shape index: {}]
  %s2 = inlined_call_operand.vmem [shape: f32[1,32], index: 2, kind: input, shape index: {}]
  %s3 = inlined_call_operand.vmem [shape: f32[32,8], index: 3, kind: input, shape index: {}]
  %s4 = inlined_call_operand.vmem [shape: f32[1,8], index: 4, kind: input, shape index: {}]
  %s5 = inlined_call_operand.vmem [shape: f32[2,128,8], index: 5, kind: output, shape index: {}, may-alias: {0,5}]
  %s6 = sld [smem:[#allocation0]]
  $region53: #{tpu_custom_call.1} parent=0
    _
  %s8 = ssub.s32 1, %s6
  %s9 = scalar_select 0, %s8, %s6
  loop: start=0, step=1, limit=4
  $region2: #{tpu_custom_call.1} parent=0 // loop_pre_header
    _
  $region3: #{tpu_custom_call.1} parent=0 // loop_header
    %s11 = sphi 0, %s15
    %p12 = scmp.ge.s32.totalorder %s11, 4
    %s21 = sphi 0, %s23
    %s24 = sphi 0, %s21
    %s25 = sphi 0, %s24
    %s41 = sphi 0, %s25
    %s45 = sphi 0, %s45
    %s47 = sphi 0, %s45
    %s48 = sphi 0, %s47
    %s62 = sphi 0, %s48
    %s66 = sphi 0, %s66
    %s68 = sphi 0, %s66
    %s69 = sphi 0, %s68
    %s83 = sphi 0, %s69
    %s87 = sphi 0, %s87
    %s89 = sphi 0, %s87
    %s90 = sphi 0, %s89
    %s104 = sphi 0, %s90
    %s108 = sphi 0, %s108
    %s110 = sphi 0, %s108
    %s111 = sphi 0, %s110
    %s125 = sphi 0, %s111
    %s131 = sphi 0, %s133
    %s134 = sphi 0, %s131
    %s135 = sphi 0, %s134
    %s151 = sphi 0, %s135
  $region4: #{tpu_custom_call.1} parent=0 // loop_header_branch
    %14 = sbr.rel (%p12) target = $region8
  $region5: #{tpu_custom_call.1} parent=0 // loop_body
    %s16 = ssub.s32 %s11, 1
    %s17 = ssub.s32 %s11, 2
    %s18 = sadd.s32 %s11, 1
    %s19 = ssub.s32 %s11, %s18
    %p20 = scmp.eq.s32.totalorder %s19, 0
    %s22 = sadd.s32 %s21, 1
    %s23 = scalar_select %p20, %s21, %s22
    %p26 = pneg %p20
    %p27 = scmp.eq.s32.totalorder %s11, 1
    %p28 = por %p26, %p27
    %p29 = scmp.ne.s32.totalorder %s21, %s24
    %p30 = scmp.eq.s32.totalorder %s11, 0
    %p31 = por %p29, %p30
    %p32 = scmp.ne.s32.totalorder %s21, %s24
    %p33 = scmp.eq.s32.totalorder %s16, 1
    %p34 = por %p32, %p33
    %p35 = scmp.ne.s32.totalorder %s24, %s25
    %p36 = scmp.eq.s32.totalorder %s16, 0
    %p37 = por %p35, %p36
    %p38 = scmp.ne.s32.totalorder %s24, %s25
    %p39 = scmp.eq.s32.totalorder %s17, 1
    %p40 = por %p38, %p39
    %p42 = scmp.ne.s32.totalorder %s25, %s41
    %p43 = scmp.eq.s32.totalorder %s17, 0
    %p44 = por %p42, %p43
    %s46 = sadd.s32 %s45, 1
    %p49 = scmp.eq.s32.totalorder %s11, 1
    %p50 = scmp.ne.s32.totalorder %s45, %s47
    %p51 = scmp.eq.s32.totalorder %s11, 0
    %p52 = por %p50, %p51
    %p53 = scmp.ne.s32.totalorder %s45, %s47
    %p54 = scmp.eq.s32.totalorder %s16, 1
    %p55 = por %p53, %p54
    %p56 = scmp.ne.s32.totalorder %s47, %s48
    %p57 = scmp.eq.s32.totalorder %s16, 0
    %p58 = por %p56, %p57
    %p59 = scmp.ne.s32.totalorder %s47, %s48
    %p60 = scmp.eq.s32.totalorder %s17, 1
    %p61 = por %p59, %p60
    %p63 = scmp.ne.s32.totalorder %s48, %s62
    %p64 = scmp.eq.s32.totalorder %s17, 0
    %p65 = por %p63, %p64
    %s67 = sadd.s32 %s66, 1
    %p70 = scmp.eq.s32.totalorder %s11, 1
    %p71 = scmp.ne.s32.totalorder %s66, %s68
    %p72 = scmp.eq.s32.totalorder %s11, 0
    %p73 = por %p71, %p72
    %p74 = scmp.ne.s32.totalorder %s66, %s68
    %p75 = scmp.eq.s32.totalorder %s16, 1
    %p76 = por %p74, %p75
    %p77 = scmp.ne.s32.totalorder %s68, %s69
    %p78 = scmp.eq.s32.totalorder %s16, 0
    %p79 = por %p77, %p78
    %p80 = scmp.ne.s32.totalorder %s68, %s69
    %p81 = scmp.eq.s32.totalorder %s17, 1
    %p82 = por %p80, %p81
    %p84 = scmp.ne.s32.totalorder %s69, %s83
    %p85 = scmp.eq.s32.totalorder %s17, 0
    %p86 = por %p84, %p85
    %s88 = sadd.s32 %s87, 1
    %p91 = scmp.eq.s32.totalorder %s11, 1
    %p92 = scmp.ne.s32.totalorder %s87, %s89
    %p93 = scmp.eq.s32.totalorder %s11, 0
    %p94 = por %p92, %p93
    %p95 = scmp.ne.s32.totalorder %s87, %s89
    %p96 = scmp.eq.s32.totalorder %s16, 1
    %p97 = por %p95, %p96
    %p98 = scmp.ne.s32.totalorder %s89, %s90
    %p99 = scmp.eq.s32.totalorder %s16, 0
    %p100 = por %p98, %p99
    %p101 = scmp.ne.s32.totalorder %s89, %s90
    %p102 = scmp.eq.s32.totalorder %s17, 1
    %p103 = por %p101, %p102
    %p105 = scmp.ne.s32.totalorder %s90, %s104
    %p106 = scmp.eq.s32.totalorder %s17, 0
    %p107 = por %p105, %p106
    %s109 = sadd.s32 %s108, 1
    %p112 = scmp.eq.s32.totalorder %s11, 1
    %p113 = scmp.ne.s32.totalorder %s108, %s110
    %p114 = scmp.eq.s32.totalorder %s11, 0
    %p115 = por %p113, %p114
    %p116 = scmp.ne.s32.totalorder %s108, %s110
    %p117 = scmp.eq.s32.totalorder %s16, 1
    %p118 = por %p116, %p117
    %p119 = scmp.ne.s32.totalorder %s110, %s111
    %p120 = scmp.eq.s32.totalorder %s16, 0
    %p121 = por %p119, %p120
    %p122 = scmp.ne.s32.totalorder %s110, %s111
    %p123 = scmp.eq.s32.totalorder %s17, 1
    %p124 = por %p122, %p123
    %p126 = scmp.ne.s32.totalorder %s111, %s125
    %p127 = scmp.eq.s32.totalorder %s17, 0
    %p128 = por %p126, %p127
    %s129 = ssub.s32 %s11, %s18
    %p130 = scmp.eq.s32.totalorder %s129, 0
    %s132 = sadd.s32 %s131, 1
    %s133 = scalar_select %p130, %s131, %s132
    %p136 = pneg %p130
    %p137 = scmp.eq.s32.totalorder %s11, 1
    %p138 = por %p136, %p137
    %p139 = scmp.ne.s32.totalorder %s131, %s134
    %p140 = scmp.eq.s32.totalorder %s11, 0
    %p141 = por %p139, %p140
    %p142 = scmp.ne.s32.totalorder %s131, %s134
    %p143 = scmp.eq.s32.totalorder %s16, 1
    %p144 = por %p142, %p143
    %p145 = scmp.ne.s32.totalorder %s134, %s135
    %p146 = scmp.eq.s32.totalorder %s16, 0
    %p147 = por %p145, %p146
    %p148 = scmp.ne.s32.totalorder %s134, %s135
    %p149 = scmp.eq.s32.totalorder %s17, 1
    %p150 = por %p148, %p149
    %p152 = scmp.ne.s32.totalorder %s135, %s151
    %p153 = scmp.eq.s32.totalorder %s17, 0
    %p154 = por %p152, %p153
    %p155 = scmp.le.s32.totalorder 1, %s11
    %p156 = scmp.lt.s32.totalorder %s11, 3
    %p157 = pnand %p155, %p156
    %p158 = pneg %p157
    // Predicated region
    $region9: #{tpu_custom_call.1} parent=5 // pred_check
      _
    $region10: #{tpu_custom_call.1} parent=5 // pred_check_branch
      %160 = sbr.rel (%p157) target = $region12
    $region11: #{tpu_custom_call.1} parent=5 // pred_region
      %s161 = ssub.s32 %s11, 1
      // Predicated region
      $region13: #{tpu_custom_call.1} parent=11 // pred_check
        %p162 = pneg %p58
      $region14: #{tpu_custom_call.1} parent=11 // pred_check_branch
        %164 = sbr.rel (%p162) target = $region16
      $region15: #{tpu_custom_call.1} parent=11 // pred_region
        _
      $region16: #{tpu_custom_call.1} parent=11 // pred_fallthru
        _
      // Predicated region
      $region17: #{tpu_custom_call.1} parent=11 // pred_check
        %p165 = pneg %p79
      $region18: #{tpu_custom_call.1} parent=11 // pred_check_branch
        %167 = sbr.rel (%p165) target = $region20
      $region19: #{tpu_custom_call.1} parent=11 // pred_region
        _
      $region20: #{tpu_custom_call.1} parent=11 // pred_fallthru
        _
      // Predicated region
      $region21: #{tpu_custom_call.1} parent=11 // pred_check
        %p168 = pneg %p100
      $region22: #{tpu_custom_call.1} parent=11 // pred_check_branch
        %170 = sbr.rel (%p168) target = $region24
      $region23: #{tpu_custom_call.1} parent=11 // pred_region
        _
      $region24: #{tpu_custom_call.1} parent=11 // pred_fallthru
        _
      // Predicated region
      $region25: #{tpu_custom_call.1} parent=11 // pred_check
        %p171 = pneg %p121
      $region26: #{tpu_custom_call.1} parent=11 // pred_check_branch
        %173 = sbr.rel (%p171) target = $region28
      $region27: #{tpu_custom_call.1} parent=11 // pred_region
        _
      $region28: #{tpu_custom_call.1} parent=11 // pred_fallthru
        _
    $region12: #{tpu_custom_call.1} parent=5 // pred_fallthru
      _
    %p174 = scmp.lt.s32.totalorder %s11, 2
    // Predicated region
    $region29: #{tpu_custom_call.1} parent=5 // pred_check
      %p175 = pneg %p174
    $region30: #{tpu_custom_call.1} parent=5 // pred_check_branch
      %177 = sbr.rel (%p175) target = $region32
    $region31: #{tpu_custom_call.1} parent=5 // pred_region
      // Predicated region
      $region33: #{tpu_custom_call.1} parent=31 // pred_check
        %p178 = pneg %p31
      $region34: #{tpu_custom_call.1} parent=31 // pred_check_branch
        %180 = sbr.rel (%p178) target = $region36
      $region35: #{tpu_custom_call.1} parent=31 // pred_region
        %p181 = scmp.lt.s32.totalorder %s11, 1
        %s182 = scalar_select %p181, %s11, 1
        %s183 = smul.addr %s182, 16
        %s184 = smul.addr %s183, 8
        %s185 = scalar_lea.vmem %s0, %s184
      $region36: #{tpu_custom_call.1} parent=31 // pred_fallthru
        _
    $region32: #{tpu_custom_call.1} parent=5 // pred_fallthru
      _
    %p186 = scmp.le.s32.totalorder 1, %s11
    %p187 = scmp.lt.s32.totalorder %s11, 3
    %p188 = pnand %p186, %p187
    %p189 = pneg %p188
    // Predicated region
    $region37: #{tpu_custom_call.1} parent=5 // pred_check
      _
    $region38: #{tpu_custom_call.1} parent=5 // pred_check_branch
      %191 = sbr.rel (%p188) target = $region40
    $region39: #{tpu_custom_call.1} parent=5 // pred_region
      %s192 = ssub.s32 %s11, 1
      %p193 = scmp.lt.s32.totalorder %s16, 1
      %s194 = scalar_select %p193, %s16, 1
      %s195 = smul.addr %s194, 16
      %s196 = smul.addr %s195, 8
      %s197 = scalar_lea.vmem %s0, %s196
      %p198 = pneg %p37
      %p199 = pneg %p34
      %p200 = pneg %p58
      %p201 = pneg %p55
      %p202 = pneg %p79
      %p203 = pneg %p76
      %p204 = pneg %p100
      %p205 = pneg %p97
      %p206 = pneg %p121
      %p207 = pneg %p118
      %p208 = pneg %p147
      %p209 = pneg %p144
      %p210 = scmp.lt.s32.totalorder %s16, 1
      %s211 = scalar_select %p210, %s16, 1
      %s212 = smul.addr %s211, 16
      %s213 = smul.addr %s212, 8
      %s214 = scalar_lea.vmem %s5, %s213
      %p215 = scmp.lt.s32.totalorder %s16, 1
      %s216 = scalar_select %p215, %s16, 1
      %s217 = smul.addr %s216, 16
      %s218 = smul.addr %s217, 8
      %s219 = scalar_lea.vmem %s0, %s218
      %p220 = scmp.lt.s32.totalorder %s16, 1
      %s221 = scalar_select %p220, %s16, 1
      %s222 = smul.addr %s221, 16
      %s223 = smul.addr %s222, 8
      %s224 = scalar_lea.vmem %s5, %s223
      %v225 = vld [vmem:[%s219] sm:$0xff]
      %v226 = vld [vmem:[%s219 + $0x8] sm:$0xff]
      %v227 = vld [vmem:[%s219 + $0x10] sm:$0xff]
      %v228 = vld [vmem:[%s219 + $0x18] sm:$0xff]
      %v229 = vld [vmem:[%s219 + $0x20] sm:$0xff]
      %v230 = vld [vmem:[%s219 + $0x28] sm:$0xff]
      %v231 = vld [vmem:[%s219 + $0x30] sm:$0xff]
      %v232 = vld [vmem:[%s219 + $0x38] sm:$0xff]
      %v233 = vld [vmem:[%s219 + $0x40] sm:$0xff]
      %v234 = vld [vmem:[%s219 + $0x48] sm:$0xff]
      %v235 = vld [vmem:[%s219 + $0x50] sm:$0xff]
      %v236 = vld [vmem:[%s219 + $0x58] sm:$0xff]
      %v237 = vld [vmem:[%s219 + $0x60] sm:$0xff]
      %v238 = vld [vmem:[%s219 + $0x68] sm:$0xff]
      %v239 = vld [vmem:[%s219 + $0x70] sm:$0xff]
      %v240 = vld [vmem:[%s219 + $0x78] sm:$0xff]
      %v241 = vld [vmem:[%s1] sm:$0xff]
      %v242 = vld [vmem:[%s2] sm:$0x1]
      %v243 = vld [vmem:[%s3] sm:$0xff]
      %v244 = vld [vmem:[%s3 + $0x8] sm:$0xff]
      %v245 = vld [vmem:[%s3 + $0x10] sm:$0xff]
      %v246 = vld [vmem:[%s3 + $0x18] sm:$0xff]
      %v247 = vld [vmem:[%s4] sm:$0x1]
      %v248 = vlaneseq
      %v249 = vand.u32 %v248, 127
      %vm250 = vcmask 15360
      %v252 = vsel %vm250, %v225, 0
      %v255 = vsel %vm250, %v226, 0
      %v258 = vsel %vm250, %v227, 0
      %v261 = vsel %vm250, %v228, 0
      %v264 = vsel %vm250, %v229, 0
      %v267 = vsel %vm250, %v230, 0
      %v270 = vsel %vm250, %v231, 0
      %v273 = vsel %vm250, %v232, 0
      %v276 = vsel %vm250, %v233, 0
      %v279 = vsel %vm250, %v234, 0
      %v282 = vsel %vm250, %v235, 0
      %v285 = vsel %vm250, %v236, 0
      %v288 = vsel %vm250, %v237, 0
      %v291 = vsel %vm250, %v238, 0
      %v294 = vsel %vm250, %v239, 0
      %v297 = vsel %vm250, %v240, 0
      %299 = vmatprep.subr.mxu0 0.0
      %300 = vmatpush1.xpose.msra.mxu0 %v252
      %301 = vmatprep.subr.mxu0 0.0
      %302 = vmatpush1.xpose.msra.mxu0 %v255
      %303 = vmatprep.subr.mxu0 0.0
      %304 = vmatpush1.xpose.msra.mxu0 %v258
      %305 = vmatprep.subr.mxu0 0.0
      %306 = vmatpush1.xpose.msra.mxu0 %v261
      %307 = vmatprep.subr.mxu0 0.0
      %308 = vmatpush1.xpose.msra.mxu0 %v264
      %309 = vmatprep.subr.mxu0 0.0
      %310 = vmatpush1.xpose.msra.mxu0 %v267
      %311 = vmatprep.subr.mxu0 0.0
      %312 = vmatpush1.xpose.msra.mxu0 %v270
      %313 = vmatprep.subr.mxu0 0.0
      %314 = vmatpush1.xpose.msra.mxu0 %v273
      %315 = vmatprep.subr.mxu0 0.0
      %316 = vmatpush1.xpose.msra.mxu0 %v276
      %317 = vmatprep.subr.mxu0 0.0
      %318 = vmatpush1.xpose.msra.mxu0 %v279
      %319 = vmatprep.subr.mxu0 0.0
      %320 = vmatpush1.xpose.msra.mxu0 %v282
      %321 = vmatprep.subr.mxu0 0.0
      %322 = vmatpush1.xpose.msra.mxu0 %v285
      %323 = vmatprep.subr.mxu0 0.0
      %324 = vmatpush1.xpose.msra.mxu0 %v288
      %325 = vmatprep.subr.mxu0 0.0
      %326 = vmatpush1.xpose.msra.mxu0 %v291
      %327 = vmatprep.subr.mxu0 0.0
      %328 = vmatpush1.xpose.msra.mxu0 %v294
      %329 = vmatprep.subr.mxu0 0.0
      %330 = vmatpush1.xpose.msra.mxu0 %v297
      %331 = vmatprep.subr.mxu0 0.0
      %332 = vmatpush1.xpose.msra.mxu0 0.0
      %333 = vmatprep.subr.mxu0 0.0
      %334 = vmatpush1.xpose.msra.mxu0 0.0
      %335 = vmatprep.subr.mxu0 0.0
      %336 = vmatpush1.xpose.msra.mxu0 0.0
      %337 = vmatprep.subr.mxu0 0.0
      %338 = vmatpush1.xpose.msra.mxu0 0.0
      %339 = vmatprep.subr.mxu0 0.0
      %340 = vmatpush1.xpose.msra.mxu0 0.0
      %341 = vmatprep.subr.mxu0 0.0
      %342 = vmatpush1.xpose.msra.mxu0 0.0
      %343 = vmatprep.subr.mxu0 0.0
      %344 = vmatpush1.xpose.msra.mxu0 0.0
      %345 = vmatprep.subr.mxu0 0.0
      %346 = vmatpush1.xpose.msra.mxu0 0.0
      %347 = vmatprep.subr.mxu0 0.0
      %348 = vmatpush1.xpose.msra.mxu0 0.0
      %349 = vmatprep.subr.mxu0 0.0
      %350 = vmatpush1.xpose.msra.mxu0 0.0
      %351 = vmatprep.subr.mxu0 0.0
      %352 = vmatpush1.xpose.msra.mxu0 0.0
      %353 = vmatprep.subr.mxu0 0.0
      %354 = vmatpush1.xpose.msra.mxu0 0.0
      %355 = vmatprep.subr.mxu0 0.0
      %356 = vmatpush1.xpose.msra.mxu0 0.0
      %357 = vmatprep.subr.mxu0 0.0
      %358 = vmatpush1.xpose.msra.mxu0 0.0
      %359 = vmatprep.subr.mxu0 0.0
      %360 = vmatpush1.xpose.msra.mxu0 0.0
      %361 = vmatprep.subr.mxu0 0.0
      %362 = vmatpush1.xpose.msra.mxu0 0.0
      %363 = vmatprep.mubr.f32.mxu0 0.0
      %364 = vmatmul.mubr.f32.gmra.mrb[0].mxu0 %v252
      %v365 = vpop.f32.mrb[0].mxu0
      %v366 = vadd.f32 0.0, %v365
      %v367 = vpop.f32.mrb[0].mxu0
      %368 = vmatprep.mubr.f32.mxu0 0.0
      %369 = vmatmul.mubr.f32.gmra.mrb[0].mxu0 %v255
      %v370 = vpop.f32.mrb[0].mxu0
      %v371 = vadd.f32 0.0, %v370
      %v372 = vpop.f32.mrb[0].mxu0
      %373 = vmatprep.mubr.f32.mxu0 0.0
      %374 = vmatmul.mubr.f32.gmra.mrb[0].mxu0 %v258
      %v375 = vpop.f32.mrb[0].mxu0
      %v376 = vadd.f32 0.0, %v375
      %v377 = vpop.f32.mrb[0].mxu0
      %378 = vmatprep.mubr.f32.mxu0 0.0
      %379 = vmatmul.mubr.f32.gmra.mrb[0].mxu0 %v261
      %v380 = vpop.f32.mrb[0].mxu0
      %v381 = vadd.f32 0.0, %v380
      %v382 = vpop.f32.mrb[0].mxu0
      %383 = vmatprep.mubr.f32.mxu0 0.0
      %384 = vmatmul.mubr.f32.gmra.mrb[0].mxu0 %v264
      %v385 = vpop.f32.mrb[0].mxu0
      %v386 = vadd.f32 0.0, %v385
      %v387 = vpop.f32.mrb[0].mxu0
      %388 = vmatprep.mubr.f32.mxu0 0.0
      %389 = vmatmul.mubr.f32.gmra.mrb[0].mxu0 %v267
      %v390 = vpop.f32.mrb[0].mxu0
      %v391 = vadd.f32 0.0, %v390
      %v392 = vpop.f32.mrb[0].mxu0
      %393 = vmatprep.mubr.f32.mxu0 0.0
      %394 = vmatmul.mubr.f32.gmra.mrb[0].mxu0 %v270
      %v395 = vpop.f32.mrb[0].mxu0
      %v396 = vadd.f32 0.0, %v395
      %v397 = vpop.f32.mrb[0].mxu0
      %398 = vmatprep.mubr.f32.mxu0 0.0
      %399 = vmatmul.mubr.f32.gmra.mrb[0].mxu0 %v273
      %v400 = vpop.f32.mrb[0].mxu0
      %v401 = vadd.f32 0.0, %v400
      %v402 = vpop.f32.mrb[0].mxu0
      %403 = vmatprep.mubr.f32.mxu0 0.0
      %404 = vmatmul.mubr.f32.gmra.mrb[0].mxu0 %v276
      %v405 = vpop.f32.mrb[0].mxu0
      %v406 = vadd.f32 0.0, %v405
      %v407 = vpop.f32.mrb[0].mxu0
      %408 = vmatprep.mubr.f32.mxu0 0.0
      %409 = vmatmul.mubr.f32.gmra.mrb[0].mxu0 %v279
      %v410 = vpop.f32.mrb[0].mxu0
      %v411 = vadd.f32 0.0, %v410
      %v412 = vpop.f32.mrb[0].mxu0
      %413 = vmatprep.mubr.f32.mxu0 0.0
      %414 = vmatmul.mubr.f32.gmra.mrb[0].mxu0 %v282
      %v415 = vpop.f32.mrb[0].mxu0
      %v416 = vadd.f32 0.0, %v415
      %v417 = vpop.f32.mrb[0].mxu0
      %418 = vmatprep.mubr.f32.mxu0 0.0
      %419 = vmatmul.mubr.f32.gmra.mrb[0].mxu0 %v285
      %v420 = vpop.f32.mrb[0].mxu0
      %v421 = vadd.f32 0.0, %v420
      %v422 = vpop.f32.mrb[0].mxu0
      %423 = vmatprep.mubr.f32.mxu0 0.0
      %424 = vmatmul.mubr.f32.gmra.mrb[0].mxu0 %v288
      %v425 = vpop.f32.mrb[0].mxu0
      %v426 = vadd.f32 0.0, %v425
      %v427 = vpop.f32.mrb[0].mxu0
      %428 = vmatprep.mubr.f32.mxu0 0.0
      %429 = vmatmul.mubr.f32.gmra.mrb[0].mxu0 %v291
      %v430 = vpop.f32.mrb[0].mxu0
      %v431 = vadd.f32 0.0, %v430
      %v432 = vpop.f32.mrb[0].mxu0
      %433 = vmatprep.mubr.f32.mxu0 0.0
      %434 = vmatmul.mubr.f32.gmra.mrb[0].mxu0 %v294
      %v435 = vpop.f32.mrb[0].mxu0
      %v436 = vadd.f32 0.0, %v435
      %v437 = vpop.f32.mrb[0].mxu0
      %438 = vmatprep.mubr.f32.mxu0 0.0
      %439 = vmatmul.mubr.f32.gmra.mrb[0].mxu0 %v297
      %v440 = vpop.f32.mrb[0].mxu0
      %v441 = vadd.f32 0.0, %v440
      %v442 = vpop.f32.mrb[0].mxu0
      %443 = vdwg.mxu0
      %v444 = vmul.f32 %v225, %v225
      %v445 = vmul.f32 %v226, %v226
      %v446 = vmul.f32 %v227, %v227
      %v447 = vmul.f32 %v228, %v228
      %v448 = vmul.f32 %v229, %v229
      %v449 = vmul.f32 %v230, %v230
      %v450 = vmul.f32 %v231, %v231
      %v451 = vmul.f32 %v232, %v232
      %v452 = vmul.f32 %v233, %v233
      %v453 = vmul.f32 %v234, %v234
      %v454 = vmul.f32 %v235, %v235
      %v455 = vmul.f32 %v236, %v236
      %v456 = vmul.f32 %v237, %v237
      %v457 = vmul.f32 %v238, %v238
      %v458 = vmul.f32 %v239, %v239
      %v459 = vmul.f32 %v240, %v240
      %v461 = vsel %vm250, 1.0, 0
      %v464 = vsel %vm250, %v444, 0
      %v467 = vsel %vm250, %v445, 0
      %v470 = vsel %vm250, %v446, 0
      %v473 = vsel %vm250, %v447, 0
      %v476 = vsel %vm250, %v448, 0
      %v479 = vsel %vm250, %v449, 0
      %v482 = vsel %vm250, %v450, 0
      %v485 = vsel %vm250, %v451, 0
      %v488 = vsel %vm250, %v452, 0
      %v491 = vsel %vm250, %v453, 0
      %v494 = vsel %vm250, %v454, 0
      %v497 = vsel %vm250, %v455, 0
      %v500 = vsel %vm250, %v456, 0
      %v503 = vsel %vm250, %v457, 0
      %v506 = vsel %vm250, %v458, 0
      %v509 = vsel %vm250, %v459, 0
      %511 = vmatprep.subr.mxu0 0.0
      %512 = vmatpush1.xpose.msra.mxu0 %v464
      %513 = vmatprep.subr.mxu0 0.0
      %514 = vmatpush1.xpose.msra.mxu0 %v467
      %515 = vmatprep.subr.mxu0 0.0
      %516 = vmatpush1.xpose.msra.mxu0 %v470
      %517 = vmatprep.subr.mxu0 0.0
      %518 = vmatpush1.xpose.msra.mxu0 %v473
      %519 = vmatprep.subr.mxu0 0.0
      %520 = vmatpush1.xpose.msra.mxu0 %v476
      %521 = vmatprep.subr.mxu0 0.0
      %522 = vmatpush1.xpose.msra.mxu0 %v479
      %523 = vmatprep.subr.mxu0 0.0
      %524 = vmatpush1.xpose.msra.mxu0 %v482
      %525 = vmatprep.subr.mxu0 0.0
      %526 = vmatpush1.xpose.msra.mxu0 %v485
      %527 = vmatprep.subr.mxu0 0.0
      %528 = vmatpush1.xpose.msra.mxu0 %v488
      %529 = vmatprep.subr.mxu0 0.0
      %530 = vmatpush1.xpose.msra.mxu0 %v491
      %531 = vmatprep.subr.mxu0 0.0
      %532 = vmatpush1.xpose.msra.mxu0 %v494
      %533 = vmatprep.subr.mxu0 0.0
      %534 = vmatpush1.xpose.msra.mxu0 %v497
      %535 = vmatprep.subr.mxu0 0.0
      %536 = vmatpush1.xpose.msra.mxu0 %v500
      %537 = vmatprep.subr.mxu0 0.0
      %538 = vmatpush1.xpose.msra.mxu0 %v503
      %539 = vmatprep.subr.mxu0 0.0
      %540 = vmatpush1.xpose.msra.mxu0 %v506
      %541 = vmatprep.subr.mxu0 0.0
      %542 = vmatpush1.xpose.msra.mxu0 %v509
      %543 = vmatprep.subr.mxu0 0.0
      %544 = vmatpush1.xpose.msra.mxu0 0.0
      %545 = vmatprep.subr.mxu0 0.0
      %546 = vmatpush1.xpose.msra.mxu0 0.0
      %547 = vmatprep.subr.mxu0 0.0
      %548 = vmatpush1.xpose.msra.mxu0 0.0
      %549 = vmatprep.subr.mxu0 0.0
      %550 = vmatpush1.xpose.msra.mxu0 0.0
      %551 = vmatprep.subr.mxu0 0.0
      %552 = vmatpush1.xpose.msra.mxu0 0.0
      %553 = vmatprep.subr.mxu0 0.0
      %554 = vmatpush1.xpose.msra.mxu0 0.0
      %555 = vmatprep.subr.mxu0 0.0
      %556 = vmatpush1.xpose.msra.mxu0 0.0
      %557 = vmatprep.subr.mxu0 0.0
      %558 = vmatpush1.xpose.msra.mxu0 0.0
      %559 = vmatprep.subr.mxu0 0.0
      %560 = vmatpush1.xpose.msra.mxu0 0.0
      %561 = vmatprep.subr.mxu0 0.0
      %562 = vmatpush1.xpose.msra.mxu0 0.0
      %563 = vmatprep.subr.mxu0 0.0
      %564 = vmatpush1.xpose.msra.mxu0 0.0
      %565 = vmatprep.subr.mxu0 0.0
      %566 = vmatpush1.xpose.msra.mxu0 0.0
      %567 = vmatprep.subr.mxu0 0.0
      %568 = vmatpush1.xpose.msra.mxu0 0.0
      %569 = vmatprep.subr.mxu0 0.0
      %570 = vmatpush1.xpose.msra.mxu0 0.0
      %571 = vmatprep.subr.mxu0 0.0
      %572 = vmatpush1.xpose.msra.mxu0 0.0
      %573 = vmatprep.subr.mxu0 0.0
      %574 = vmatpush1.xpose.msra.mxu0 0.0
      %575 = vmatprep.mubr.f32.mxu0 0.0
      %576 = vmatmul.mubr.f32.gmra.mrb[0].mxu0 %v461
      %v577 = vpop.f32.mrb[0].mxu0
      %v578 = vadd.f32 0.0, %v577
      %v579 = vpop.f32.mrb[0].mxu0
      %580 = vdwg.mxu0
      %v581 = vmul.f32 %v366, 2.0
      %v582 = vmul.f32 %v371, 2.0
      %v583 = vmul.f32 %v376, 2.0
      %v584 = vmul.f32 %v381, 2.0
      %v585 = vmul.f32 %v386, 2.0
      %v586 = vmul.f32 %v391, 2.0
      %v587 = vmul.f32 %v396, 2.0
      %v588 = vmul.f32 %v401, 2.0
      %v589 = vmul.f32 %v406, 2.0
      %v590 = vmul.f32 %v411, 2.0
      %v591 = vmul.f32 %v416, 2.0
      %v592 = vmul.f32 %v421, 2.0
      %v593 = vmul.f32 %v426, 2.0
      %v594 = vmul.f32 %v431, 2.0
      %v595 = vmul.f32 %v436, 2.0
      %v596 = vmul.f32 %v441, 2.0
      %v597 = vlaneseq
      %v598 = vshrl.u32 %v597, 7
      %v599 = vsub.s32 0, %v598
      %v600 = vrot.slane %v578, %v599
      %v601 = vsub.f32 %v600, %v581
      %v602 = vsub.f32 %v600, %v582
      %v603 = vsub.f32 %v600, %v583
      %v604 = vsub.f32 %v600, %v584
      %v605 = vsub.f32 %v600, %v585
      %v606 = vsub.f32 %v600, %v586
      %v607 = vsub.f32 %v600, %v587
      %v608 = vsub.f32 %v600, %v588
      %v609 = vsub.f32 %v600, %v589
      %v610 = vsub.f32 %v600, %v590
      %v611 = vsub.f32 %v600, %v591
      %v612 = vsub.f32 %v600, %v592
      %v613 = vsub.f32 %v600, %v593
      %v614 = vsub.f32 %v600, %v594
      %v615 = vsub.f32 %v600, %v595
      %v616 = vsub.f32 %v600, %v596
      %vm633 = vcmp.lt.s32.totalorder %v601, 0
      %vm634 = vcmp.lt.s32.totalorder %v602, 0
      %vm635 = vcmp.lt.s32.totalorder %v603, 0
      %vm636 = vcmp.lt.s32.totalorder %v604, 0
      %vm637 = vcmp.lt.s32.totalorder %v605, 0
      %vm638 = vcmp.lt.s32.totalorder %v606, 0
      %vm639 = vcmp.lt.s32.totalorder %v607, 0
      %vm640 = vcmp.lt.s32.totalorder %v608, 0
      %vm641 = vcmp.lt.s32.totalorder %v609, 0
      %vm642 = vcmp.lt.s32.totalorder %v610, 0
      %vm643 = vcmp.lt.s32.totalorder %v611, 0
      %vm644 = vcmp.lt.s32.totalorder %v612, 0
      %vm645 = vcmp.lt.s32.totalorder %v613, 0
      %vm646 = vcmp.lt.s32.totalorder %v614, 0
      %vm647 = vcmp.lt.s32.totalorder %v615, 0
      %vm648 = vcmp.lt.s32.totalorder %v616, 0
      %v649 = vxor.u32 %v601, 2147483647
      %v650 = vxor.u32 %v602, 2147483647
      %v651 = vxor.u32 %v603, 2147483647
      %v652 = vxor.u32 %v604, 2147483647
      %v653 = vxor.u32 %v605, 2147483647
      %v654 = vxor.u32 %v606, 2147483647
      %v655 = vxor.u32 %v607, 2147483647
      %v656 = vxor.u32 %v608, 2147483647
      %v657 = vxor.u32 %v609, 2147483647
      %v658 = vxor.u32 %v610, 2147483647
      %v659 = vxor.u32 %v611, 2147483647
      %v660 = vxor.u32 %v612, 2147483647
      %v661 = vxor.u32 %v613, 2147483647
      %v662 = vxor.u32 %v614, 2147483647
      %v663 = vxor.u32 %v615, 2147483647
      %v664 = vxor.u32 %v616, 2147483647
      %v665 = vsel %vm633, %v649, %v601
      %v666 = vsel %vm634, %v650, %v602
      %v667 = vsel %vm635, %v651, %v603
      %v668 = vsel %vm636, %v652, %v604
      %v669 = vsel %vm637, %v653, %v605
      %v670 = vsel %vm638, %v654, %v606
      %v671 = vsel %vm639, %v655, %v607
      %v672 = vsel %vm640, %v656, %v608
      %v673 = vsel %vm641, %v657, %v609
      %v674 = vsel %vm642, %v658, %v610
      %v675 = vsel %vm643, %v659, %v611
      %v676 = vsel %vm644, %v660, %v612
      %v677 = vsel %vm645, %v661, %v613
      %v678 = vsel %vm646, %v662, %v614
      %v679 = vsel %vm647, %v663, %v615
      %v680 = vsel %vm648, %v664, %v616
      %v681 = vand.u32 %v665, 4294967168
      %v682 = vand.u32 %v666, 4294967168
      %v683 = vand.u32 %v667, 4294967168
      %v684 = vand.u32 %v668, 4294967168
      %v685 = vand.u32 %v669, 4294967168
      %v686 = vand.u32 %v670, 4294967168
      %v687 = vand.u32 %v671, 4294967168
      %v688 = vand.u32 %v672, 4294967168
      %v689 = vand.u32 %v673, 4294967168
      %v690 = vand.u32 %v674, 4294967168
      %v691 = vand.u32 %v675, 4294967168
      %v692 = vand.u32 %v676, 4294967168
      %v693 = vand.u32 %v677, 4294967168
      %v694 = vand.u32 %v678, 4294967168
      %v695 = vand.u32 %v679, 4294967168
      %v696 = vand.u32 %v680, 4294967168
      %v697 = vor.u32 %v681, %v249
      %v698 = vor.u32 %v682, %v249
      %v699 = vor.u32 %v683, %v249
      %v700 = vor.u32 %v684, %v249
      %v701 = vor.u32 %v685, %v249
      %v702 = vor.u32 %v686, %v249
      %v703 = vor.u32 %v687, %v249
      %v704 = vor.u32 %v688, %v249
      %v705 = vor.u32 %v689, %v249
      %v706 = vor.u32 %v690, %v249
      %v707 = vor.u32 %v691, %v249
      %v708 = vor.u32 %v692, %v249
      %v709 = vor.u32 %v693, %v249
      %v710 = vor.u32 %v694, %v249
      %v711 = vor.u32 %v695, %v249
      %v712 = vor.u32 %v696, %v249
      %v713 = vand.u32 %v697, 65535
      %v714 = vshra.s32 %v697, 16
      %v715 = vcvt.s32.f32 %v713
      %v716 = vcvt.s32.f32 %v714
      %717 = vmin.xlane.f32.xlu0 %v716
      %v718 = vpop.xlane.xlu0 %717
      %vm719 = vcmp.eq.f32.partialorder %v716, %v718
      %v720 = vsel %vm719, %v715, inf
      %721 = vmin.xlane.f32.xlu0 %v720
      %v722 = vpop.xlane.xlu0 %721
      %v723 = vcvt.f32.s32 %v722
      %v724 = vcvt.f32.s32 %v718
      %v725 = vshll.u32 %v724, 16
      %v726 = vadd.s32 %v725, %v723
      %v727 = vand.u32 %v698, 65535
      %v728 = vshra.s32 %v698, 16
      %v729 = vcvt.s32.f32 %v727
      %v730 = vcvt.s32.f32 %v728
      %731 = vmin.xlane.f32.xlu0 %v730
      %v732 = vpop.xlane.xlu0 %731
      %vm733 = vcmp.eq.f32.partialorder %v730, %v732
      %v734 = vsel %vm733, %v729, inf
      %735 = vmin.xlane.f32.xlu0 %v734
      %v736 = vpop.xlane.xlu0 %735
      %v737 = vcvt.f32.s32 %v736
      %v738 = vcvt.f32.s32 %v732
      %v739 = vshll.u32 %v738, 16
      %v740 = vadd.s32 %v739, %v737
      %v741 = vand.u32 %v699, 65535
      %v742 = vshra.s32 %v699, 16
      %v743 = vcvt.s32.f32 %v741
      %v744 = vcvt.s32.f32 %v742
      %745 = vmin.xlane.f32.xlu0 %v744
      %v746 = vpop.xlane.xlu0 %745
      %vm747 = vcmp.eq.f32.partialorder %v744, %v746
      %v748 = vsel %vm747, %v743, inf
      %749 = vmin.xlane.f32.xlu0 %v748
      %v750 = vpop.xlane.xlu0 %749
      %v751 = vcvt.f32.s32 %v750
      %v752 = vcvt.f32.s32 %v746
      %v753 = vshll.u32 %v752, 16
      %v754 = vadd.s32 %v753, %v751
      %v755 = vand.u32 %v700, 65535
      %v756 = vshra.s32 %v700, 16
      %v757 = vcvt.s32.f32 %v755
      %v758 = vcvt.s32.f32 %v756
      %759 = vmin.xlane.f32.xlu0 %v758
      %v760 = vpop.xlane.xlu0 %759
      %vm761 = vcmp.eq.f32.partialorder %v758, %v760
      %v762 = vsel %vm761, %v757, inf
      %763 = vmin.xlane.f32.xlu0 %v762
      %v764 = vpop.xlane.xlu0 %763
      %v765 = vcvt.f32.s32 %v764
      %v766 = vcvt.f32.s32 %v760
      %v767 = vshll.u32 %v766, 16
      %v768 = vadd.s32 %v767, %v765
      %v769 = vand.u32 %v701, 65535
      %v770 = vshra.s32 %v701, 16
      %v771 = vcvt.s32.f32 %v769
      %v772 = vcvt.s32.f32 %v770
      %773 = vmin.xlane.f32.xlu0 %v772
      %v774 = vpop.xlane.xlu0 %773
      %vm775 = vcmp.eq.f32.partialorder %v772, %v774
      %v776 = vsel %vm775, %v771, inf
      %777 = vmin.xlane.f32.xlu0 %v776
      %v778 = vpop.xlane.xlu0 %777
      %v779 = vcvt.f32.s32 %v778
      %v780 = vcvt.f32.s32 %v774
      %v781 = vshll.u32 %v780, 16
      %v782 = vadd.s32 %v781, %v779
      %v783 = vand.u32 %v702, 65535
      %v784 = vshra.s32 %v702, 16
      %v785 = vcvt.s32.f32 %v783
      %v786 = vcvt.s32.f32 %v784
      %787 = vmin.xlane.f32.xlu0 %v786
      %v788 = vpop.xlane.xlu0 %787
      %vm789 = vcmp.eq.f32.partialorder %v786, %v788
      %v790 = vsel %vm789, %v785, inf
      %791 = vmin.xlane.f32.xlu0 %v790
      %v792 = vpop.xlane.xlu0 %791
      %v793 = vcvt.f32.s32 %v792
      %v794 = vcvt.f32.s32 %v788
      %v795 = vshll.u32 %v794, 16
      %v796 = vadd.s32 %v795, %v793
      %v797 = vand.u32 %v703, 65535
      %v798 = vshra.s32 %v703, 16
      %v799 = vcvt.s32.f32 %v797
      %v800 = vcvt.s32.f32 %v798
      %801 = vmin.xlane.f32.xlu0 %v800
      %v802 = vpop.xlane.xlu0 %801
      %vm803 = vcmp.eq.f32.partialorder %v800, %v802
      %v804 = vsel %vm803, %v799, inf
      %805 = vmin.xlane.f32.xlu0 %v804
      %v806 = vpop.xlane.xlu0 %805
      %v807 = vcvt.f32.s32 %v806
      %v808 = vcvt.f32.s32 %v802
      %v809 = vshll.u32 %v808, 16
      %v810 = vadd.s32 %v809, %v807
      %v811 = vand.u32 %v704, 65535
      %v812 = vshra.s32 %v704, 16
      %v813 = vcvt.s32.f32 %v811
      %v814 = vcvt.s32.f32 %v812
      %815 = vmin.xlane.f32.xlu0 %v814
      %v816 = vpop.xlane.xlu0 %815
      %vm817 = vcmp.eq.f32.partialorder %v814, %v816
      %v818 = vsel %vm817, %v813, inf
      %819 = vmin.xlane.f32.xlu0 %v818
      %v820 = vpop.xlane.xlu0 %819
      %v821 = vcvt.f32.s32 %v820
      %v822 = vcvt.f32.s32 %v816
      %v823 = vshll.u32 %v822, 16
      %v824 = vadd.s32 %v823, %v821
      %v825 = vand.u32 %v705, 65535
      %v826 = vshra.s32 %v705, 16
      %v827 = vcvt.s32.f32 %v825
      %v828 = vcvt.s32.f32 %v826
      %829 = vmin.xlane.f32.xlu0 %v828
      %v830 = vpop.xlane.xlu0 %829
      %vm831 = vcmp.eq.f32.partialorder %v828, %v830
      %v832 = vsel %vm831, %v827, inf
      %833 = vmin.xlane.f32.xlu0 %v832
      %v834 = vpop.xlane.xlu0 %833
      %v835 = vcvt.f32.s32 %v834
      %v836 = vcvt.f32.s32 %v830
      %v837 = vshll.u32 %v836, 16
      %v838 = vadd.s32 %v837, %v835
      %v839 = vand.u32 %v706, 65535
      %v840 = vshra.s32 %v706, 16
      %v841 = vcvt.s32.f32 %v839
      %v842 = vcvt.s32.f32 %v840
      %843 = vmin.xlane.f32.xlu0 %v842
      %v844 = vpop.xlane.xlu0 %843
      %vm845 = vcmp.eq.f32.partialorder %v842, %v844
      %v846 = vsel %vm845, %v841, inf
      %847 = vmin.xlane.f32.xlu0 %v846
      %v848 = vpop.xlane.xlu0 %847
      %v849 = vcvt.f32.s32 %v848
      %v850 = vcvt.f32.s32 %v844
      %v851 = vshll.u32 %v850, 16
      %v852 = vadd.s32 %v851, %v849
      %v853 = vand.u32 %v707, 65535
      %v854 = vshra.s32 %v707, 16
      %v855 = vcvt.s32.f32 %v853
      %v856 = vcvt.s32.f32 %v854
      %857 = vmin.xlane.f32.xlu0 %v856
      %v858 = vpop.xlane.xlu0 %857
      %vm859 = vcmp.eq.f32.partialorder %v856, %v858
      %v860 = vsel %vm859, %v855, inf
      %861 = vmin.xlane.f32.xlu0 %v860
      %v862 = vpop.xlane.xlu0 %861
      %v863 = vcvt.f32.s32 %v862
      %v864 = vcvt.f32.s32 %v858
      %v865 = vshll.u32 %v864, 16
      %v866 = vadd.s32 %v865, %v863
      %v867 = vand.u32 %v708, 65535
      %v868 = vshra.s32 %v708, 16
      %v869 = vcvt.s32.f32 %v867
      %v870 = vcvt.s32.f32 %v868
      %871 = vmin.xlane.f32.xlu0 %v870
      %v872 = vpop.xlane.xlu0 %871
      %vm873 = vcmp.eq.f32.partialorder %v870, %v872
      %v874 = vsel %vm873, %v869, inf
      %875 = vmin.xlane.f32.xlu0 %v874
      %v876 = vpop.xlane.xlu0 %875
      %v877 = vcvt.f32.s32 %v876
      %v878 = vcvt.f32.s32 %v872
      %v879 = vshll.u32 %v878, 16
      %v880 = vadd.s32 %v879, %v877
      %v881 = vand.u32 %v709, 65535
      %v882 = vshra.s32 %v709, 16
      %v883 = vcvt.s32.f32 %v881
      %v884 = vcvt.s32.f32 %v882
      %885 = vmin.xlane.f32.xlu0 %v884
      %v886 = vpop.xlane.xlu0 %885
      %vm887 = vcmp.eq.f32.partialorder %v884, %v886
      %v888 = vsel %vm887, %v883, inf
      %889 = vmin.xlane.f32.xlu0 %v888
      %v890 = vpop.xlane.xlu0 %889
      %v891 = vcvt.f32.s32 %v890
      %v892 = vcvt.f32.s32 %v886
      %v893 = vshll.u32 %v892, 16
      %v894 = vadd.s32 %v893, %v891
      %v895 = vand.u32 %v710, 65535
      %v896 = vshra.s32 %v710, 16
      %v897 = vcvt.s32.f32 %v895
      %v898 = vcvt.s32.f32 %v896
      %899 = vmin.xlane.f32.xlu0 %v898
      %v900 = vpop.xlane.xlu0 %899
      %vm901 = vcmp.eq.f32.partialorder %v898, %v900
      %v902 = vsel %vm901, %v897, inf
      %903 = vmin.xlane.f32.xlu0 %v902
      %v904 = vpop.xlane.xlu0 %903
      %v905 = vcvt.f32.s32 %v904
      %v906 = vcvt.f32.s32 %v900
      %v907 = vshll.u32 %v906, 16
      %v908 = vadd.s32 %v907, %v905
      %v909 = vand.u32 %v711, 65535
      %v910 = vshra.s32 %v711, 16
      %v911 = vcvt.s32.f32 %v909
      %v912 = vcvt.s32.f32 %v910
      %913 = vmin.xlane.f32.xlu0 %v912
      %v914 = vpop.xlane.xlu0 %913
      %vm915 = vcmp.eq.f32.partialorder %v912, %v914
      %v916 = vsel %vm915, %v911, inf
      %917 = vmin.xlane.f32.xlu0 %v916
      %v918 = vpop.xlane.xlu0 %917
      %v919 = vcvt.f32.s32 %v918
      %v920 = vcvt.f32.s32 %v914
      %v921 = vshll.u32 %v920, 16
      %v922 = vadd.s32 %v921, %v919
      %v923 = vand.u32 %v712, 65535
      %v924 = vshra.s32 %v712, 16
      %v925 = vcvt.s32.f32 %v923
      %v926 = vcvt.s32.f32 %v924
      %927 = vmin.xlane.f32.xlu0 %v926
      %v928 = vpop.xlane.xlu0 %927
      %vm929 = vcmp.eq.f32.partialorder %v926, %v928
      %v930 = vsel %vm929, %v925, inf
      %931 = vmin.xlane.f32.xlu0 %v930
      %v932 = vpop.xlane.xlu0 %931
      %v933 = vcvt.f32.s32 %v932
      %v934 = vcvt.f32.s32 %v928
      %v935 = vshll.u32 %v934, 16
      %v936 = vadd.s32 %v935, %v933
      %v937 = vand.u32 %v726, 127
      %v938 = vand.u32 %v740, 127
      %v939 = vand.u32 %v754, 127
      %v940 = vand.u32 %v768, 127
      %v941 = vand.u32 %v782, 127
      %v942 = vand.u32 %v796, 127
      %v943 = vand.u32 %v810, 127
      %v944 = vand.u32 %v824, 127
      %v945 = vand.u32 %v838, 127
      %v946 = vand.u32 %v852, 127
      %v947 = vand.u32 %v866, 127
      %v948 = vand.u32 %v880, 127
      %v949 = vand.u32 %v894, 127
      %v950 = vand.u32 %v908, 127
      %v951 = vand.u32 %v922, 127
      %v952 = vand.u32 %v936, 127
      %vm953 = vcmp.eq.s32.totalorder %v249, %v937
      %vm954 = vcmp.eq.s32.totalorder %v249, %v938
      %vm955 = vcmp.eq.s32.totalorder %v249, %v939
      %vm956 = vcmp.eq.s32.totalorder %v249, %v940
      %vm957 = vcmp.eq.s32.totalorder %v249, %v941
      %vm958 = vcmp.eq.s32.totalorder %v249, %v942
      %vm959 = vcmp.eq.s32.totalorder %v249, %v943
      %vm960 = vcmp.eq.s32.totalorder %v249, %v944
      %vm961 = vcmp.eq.s32.totalorder %v249, %v945
      %vm962 = vcmp.eq.s32.totalorder %v249, %v946
      %vm963 = vcmp.eq.s32.totalorder %v249, %v947
      %vm964 = vcmp.eq.s32.totalorder %v249, %v948
      %vm965 = vcmp.eq.s32.totalorder %v249, %v949
      %vm966 = vcmp.eq.s32.totalorder %v249, %v950
      %vm967 = vcmp.eq.s32.totalorder %v249, %v951
      %vm968 = vcmp.eq.s32.totalorder %v249, %v952
      %v969 = vsel %vm953, 1, 0
      %v970 = vsel %vm954, 1, 0
      %v971 = vsel %vm955, 1, 0
      %v972 = vsel %vm956, 1, 0
      %v973 = vsel %vm957, 1, 0
      %v974 = vsel %vm958, 1, 0
      %v975 = vsel %vm959, 1, 0
      %v976 = vsel %vm960, 1, 0
      %v977 = vsel %vm961, 1, 0
      %v978 = vsel %vm962, 1, 0
      %v979 = vsel %vm963, 1, 0
      %v980 = vsel %vm964, 1, 0
      %v981 = vsel %vm965, 1, 0
      %v982 = vsel %vm966, 1, 0
      %v983 = vsel %vm967, 1, 0
      %v984 = vsel %vm968, 1, 0
      %v985 = vcvt.s32.f32 %v969
      %v986 = vcvt.s32.f32 %v970
      %v987 = vcvt.s32.f32 %v971
      %v988 = vcvt.s32.f32 %v972
      %v989 = vcvt.s32.f32 %v973
      %v990 = vcvt.s32.f32 %v974
      %v991 = vcvt.s32.f32 %v975
      %v992 = vcvt.s32.f32 %v976
      %v993 = vcvt.s32.f32 %v977
      %v994 = vcvt.s32.f32 %v978
      %v995 = vcvt.s32.f32 %v979
      %v996 = vcvt.s32.f32 %v980
      %v997 = vcvt.s32.f32 %v981
      %v998 = vcvt.s32.f32 %v982
      %v999 = vcvt.s32.f32 %v983
      %v1000 = vcvt.s32.f32 %v984
      %v1001 = vadd.f32 %v985, 0.0
      %v1002 = vadd.f32 %v986, 0.0
      %v1003 = vadd.f32 %v987, 0.0
      %v1004 = vadd.f32 %v988, 0.0
      %v1005 = vadd.f32 %v989, 0.0
      %v1006 = vadd.f32 %v990, 0.0
      %v1007 = vadd.f32 %v991, 0.0
      %v1008 = vadd.f32 %v992, 0.0
      %v1009 = vadd.f32 %v993, 0.0
      %v1010 = vadd.f32 %v994, 0.0
      %v1011 = vadd.f32 %v995, 0.0
      %v1012 = vadd.f32 %v996, 0.0
      %v1013 = vadd.f32 %v997, 0.0
      %v1014 = vadd.f32 %v998, 0.0
      %v1015 = vadd.f32 %v999, 0.0
      %v1016 = vadd.f32 %v1000, 0.0
      %v1017 = vsel %vm953, 2147483647, %v697
      %v1018 = vsel %vm954, 2147483647, %v698
      %v1019 = vsel %vm955, 2147483647, %v699
      %v1020 = vsel %vm956, 2147483647, %v700
      %v1021 = vsel %vm957, 2147483647, %v701
      %v1022 = vsel %vm958, 2147483647, %v702
      %v1023 = vsel %vm959, 2147483647, %v703
      %v1024 = vsel %vm960, 2147483647, %v704
      %v1025 = vsel %vm961, 2147483647, %v705
      %v1026 = vsel %vm962, 2147483647, %v706
      %v1027 = vsel %vm963, 2147483647, %v707
      %v1028 = vsel %vm964, 2147483647, %v708
      %v1029 = vsel %vm965, 2147483647, %v709
      %v1030 = vsel %vm966, 2147483647, %v710
      %v1031 = vsel %vm967, 2147483647, %v711
      %v1032 = vsel %vm968, 2147483647, %v712
      %v1033 = vand.u32 %v1017, 65535
      %v1034 = vshra.s32 %v1017, 16
      %v1035 = vcvt.s32.f32 %v1033
      %v1036 = vcvt.s32.f32 %v1034
      %1037 = vmin.xlane.f32.xlu0 %v1036
      %v1038 = vpop.xlane.xlu0 %1037
      %vm1039 = vcmp.eq.f32.partialorder %v1036, %v1038
      %v1040 = vsel %vm1039, %v1035, inf
      %1041 = vmin.xlane.f32.xlu0 %v1040
      %v1042 = vpop.xlane.xlu0 %1041
      %v1043 = vcvt.f32.s32 %v1042
      %v1044 = vcvt.f32.s32 %v1038
      %v1045 = vshll.u32 %v1044, 16
      %v1046 = vadd.s32 %v1045, %v1043
      %v1047 = vand.u32 %v1018, 65535
      %v1048 = vshra.s32 %v1018, 16
      %v1049 = vcvt.s32.f32 %v1047
      %v1050 = vcvt.s32.f32 %v1048
      %1051 = vmin.xlane.f32.xlu0 %v1050
      %v1052 = vpop.xlane.xlu0 %1051
      %vm1053 = vcmp.eq.f32.partialorder %v1050, %v1052
      %v1054 = vsel %vm1053, %v1049, inf
      %1055 = vmin.xlane.f32.xlu0 %v1054
      %v1056 = vpop.xlane.xlu0 %1055
      %v1057 = vcvt.f32.s32 %v1056
      %v1058 = vcvt.f32.s32 %v1052
      %v1059 = vshll.u32 %v1058, 16
      %v1060 = vadd.s32 %v1059, %v1057
      %v1061 = vand.u32 %v1019, 65535
      %v1062 = vshra.s32 %v1019, 16
      %v1063 = vcvt.s32.f32 %v1061
      %v1064 = vcvt.s32.f32 %v1062
      %1065 = vmin.xlane.f32.xlu0 %v1064
      %v1066 = vpop.xlane.xlu0 %1065
      %vm1067 = vcmp.eq.f32.partialorder %v1064, %v1066
      %v1068 = vsel %vm1067, %v1063, inf
      %1069 = vmin.xlane.f32.xlu0 %v1068
      %v1070 = vpop.xlane.xlu0 %1069
      %v1071 = vcvt.f32.s32 %v1070
      %v1072 = vcvt.f32.s32 %v1066
      %v1073 = vshll.u32 %v1072, 16
      %v1074 = vadd.s32 %v1073, %v1071
      %v1075 = vand.u32 %v1020, 65535
      %v1076 = vshra.s32 %v1020, 16
      %v1077 = vcvt.s32.f32 %v1075
      %v1078 = vcvt.s32.f32 %v1076
      %1079 = vmin.xlane.f32.xlu0 %v1078
      %v1080 = vpop.xlane.xlu0 %1079
      %vm1081 = vcmp.eq.f32.partialorder %v1078, %v1080
      %v1082 = vsel %vm1081, %v1077, inf
      %1083 = vmin.xlane.f32.xlu0 %v1082
      %v1084 = vpop.xlane.xlu0 %1083
      %v1085 = vcvt.f32.s32 %v1084
      %v1086 = vcvt.f32.s32 %v1080
      %v1087 = vshll.u32 %v1086, 16
      %v1088 = vadd.s32 %v1087, %v1085
      %v1089 = vand.u32 %v1021, 65535
      %v1090 = vshra.s32 %v1021, 16
      %v1091 = vcvt.s32.f32 %v1089
      %v1092 = vcvt.s32.f32 %v1090
      %1093 = vmin.xlane.f32.xlu0 %v1092
      %v1094 = vpop.xlane.xlu0 %1093
      %vm1095 = vcmp.eq.f32.partialorder %v1092, %v1094
      %v1096 = vsel %vm1095, %v1091, inf
      %1097 = vmin.xlane.f32.xlu0 %v1096
      %v1098 = vpop.xlane.xlu0 %1097
      %v1099 = vcvt.f32.s32 %v1098
      %v1100 = vcvt.f32.s32 %v1094
      %v1101 = vshll.u32 %v1100, 16
      %v1102 = vadd.s32 %v1101, %v1099
      %v1103 = vand.u32 %v1022, 65535
      %v1104 = vshra.s32 %v1022, 16
      %v1105 = vcvt.s32.f32 %v1103
      %v1106 = vcvt.s32.f32 %v1104
      %1107 = vmin.xlane.f32.xlu0 %v1106
      %v1108 = vpop.xlane.xlu0 %1107
      %vm1109 = vcmp.eq.f32.partialorder %v1106, %v1108
      %v1110 = vsel %vm1109, %v1105, inf
      %1111 = vmin.xlane.f32.xlu0 %v1110
      %v1112 = vpop.xlane.xlu0 %1111
      %v1113 = vcvt.f32.s32 %v1112
      %v1114 = vcvt.f32.s32 %v1108
      %v1115 = vshll.u32 %v1114, 16
      %v1116 = vadd.s32 %v1115, %v1113
      %v1117 = vand.u32 %v1023, 65535
      %v1118 = vshra.s32 %v1023, 16
      %v1119 = vcvt.s32.f32 %v1117
      %v1120 = vcvt.s32.f32 %v1118
      %1121 = vmin.xlane.f32.xlu0 %v1120
      %v1122 = vpop.xlane.xlu0 %1121
      %vm1123 = vcmp.eq.f32.partialorder %v1120, %v1122
      %v1124 = vsel %vm1123, %v1119, inf
      %1125 = vmin.xlane.f32.xlu0 %v1124
      %v1126 = vpop.xlane.xlu0 %1125
      %v1127 = vcvt.f32.s32 %v1126
      %v1128 = vcvt.f32.s32 %v1122
      %v1129 = vshll.u32 %v1128, 16
      %v1130 = vadd.s32 %v1129, %v1127
      %v1131 = vand.u32 %v1024, 65535
      %v1132 = vshra.s32 %v1024, 16
      %v1133 = vcvt.s32.f32 %v1131
      %v1134 = vcvt.s32.f32 %v1132
      %1135 = vmin.xlane.f32.xlu0 %v1134
      %v1136 = vpop.xlane.xlu0 %1135
      %vm1137 = vcmp.eq.f32.partialorder %v1134, %v1136
      %v1138 = vsel %vm1137, %v1133, inf
      %1139 = vmin.xlane.f32.xlu0 %v1138
      %v1140 = vpop.xlane.xlu0 %1139
      %v1141 = vcvt.f32.s32 %v1140
      %v1142 = vcvt.f32.s32 %v1136
      %v1143 = vshll.u32 %v1142, 16
      %v1144 = vadd.s32 %v1143, %v1141
      %v1145 = vand.u32 %v1025, 65535
      %v1146 = vshra.s32 %v1025, 16
      %v1147 = vcvt.s32.f32 %v1145
      %v1148 = vcvt.s32.f32 %v1146
      %1149 = vmin.xlane.f32.xlu0 %v1148
      %v1150 = vpop.xlane.xlu0 %1149
      %vm1151 = vcmp.eq.f32.partialorder %v1148, %v1150
      %v1152 = vsel %vm1151, %v1147, inf
      %1153 = vmin.xlane.f32.xlu0 %v1152
      %v1154 = vpop.xlane.xlu0 %1153
      %v1155 = vcvt.f32.s32 %v1154
      %v1156 = vcvt.f32.s32 %v1150
      %v1157 = vshll.u32 %v1156, 16
      %v1158 = vadd.s32 %v1157, %v1155
      %v1159 = vand.u32 %v1026, 65535
      %v1160 = vshra.s32 %v1026, 16
      %v1161 = vcvt.s32.f32 %v1159
      %v1162 = vcvt.s32.f32 %v1160
      %1163 = vmin.xlane.f32.xlu0 %v1162
      %v1164 = vpop.xlane.xlu0 %1163
      %vm1165 = vcmp.eq.f32.partialorder %v1162, %v1164
      %v1166 = vsel %vm1165, %v1161, inf
      %1167 = vmin.xlane.f32.xlu0 %v1166
      %v1168 = vpop.xlane.xlu0 %1167
      %v1169 = vcvt.f32.s32 %v1168
      %v1170 = vcvt.f32.s32 %v1164
      %v1171 = vshll.u32 %v1170, 16
      %v1172 = vadd.s32 %v1171, %v1169
      %v1173 = vand.u32 %v1027, 65535
      %v1174 = vshra.s32 %v1027, 16
      %v1175 = vcvt.s32.f32 %v1173
      %v1176 = vcvt.s32.f32 %v1174
      %1177 = vmin.xlane.f32.xlu0 %v1176
      %v1178 = vpop.xlane.xlu0 %1177
      %vm1179 = vcmp.eq.f32.partialorder %v1176, %v1178
      %v1180 = vsel %vm1179, %v1175, inf
      %1181 = vmin.xlane.f32.xlu0 %v1180
      %v1182 = vpop.xlane.xlu0 %1181
      %v1183 = vcvt.f32.s32 %v1182
      %v1184 = vcvt.f32.s32 %v1178
      %v1185 = vshll.u32 %v1184, 16
      %v1186 = vadd.s32 %v1185, %v1183
      %v1187 = vand.u32 %v1028, 65535
      %v1188 = vshra.s32 %v1028, 16
      %v1189 = vcvt.s32.f32 %v1187
      %v1190 = vcvt.s32.f32 %v1188
      %1191 = vmin.xlane.f32.xlu0 %v1190
      %v1192 = vpop.xlane.xlu0 %1191
      %vm1193 = vcmp.eq.f32.partialorder %v1190, %v1192
      %v1194 = vsel %vm1193, %v1189, inf
      %1195 = vmin.xlane.f32.xlu0 %v1194
      %v1196 = vpop.xlane.xlu0 %1195
      %v1197 = vcvt.f32.s32 %v1196
      %v1198 = vcvt.f32.s32 %v1192
      %v1199 = vshll.u32 %v1198, 16
      %v1200 = vadd.s32 %v1199, %v1197
      %v1201 = vand.u32 %v1029, 65535
      %v1202 = vshra.s32 %v1029, 16
      %v1203 = vcvt.s32.f32 %v1201
      %v1204 = vcvt.s32.f32 %v1202
      %1205 = vmin.xlane.f32.xlu0 %v1204
      %v1206 = vpop.xlane.xlu0 %1205
      %vm1207 = vcmp.eq.f32.partialorder %v1204, %v1206
      %v1208 = vsel %vm1207, %v1203, inf
      %1209 = vmin.xlane.f32.xlu0 %v1208
      %v1210 = vpop.xlane.xlu0 %1209
      %v1211 = vcvt.f32.s32 %v1210
      %v1212 = vcvt.f32.s32 %v1206
      %v1213 = vshll.u32 %v1212, 16
      %v1214 = vadd.s32 %v1213, %v1211
      %v1215 = vand.u32 %v1030, 65535
      %v1216 = vshra.s32 %v1030, 16
      %v1217 = vcvt.s32.f32 %v1215
      %v1218 = vcvt.s32.f32 %v1216
      %1219 = vmin.xlane.f32.xlu0 %v1218
      %v1220 = vpop.xlane.xlu0 %1219
      %vm1221 = vcmp.eq.f32.partialorder %v1218, %v1220
      %v1222 = vsel %vm1221, %v1217, inf
      %1223 = vmin.xlane.f32.xlu0 %v1222
      %v1224 = vpop.xlane.xlu0 %1223
      %v1225 = vcvt.f32.s32 %v1224
      %v1226 = vcvt.f32.s32 %v1220
      %v1227 = vshll.u32 %v1226, 16
      %v1228 = vadd.s32 %v1227, %v1225
      %v1229 = vand.u32 %v1031, 65535
      %v1230 = vshra.s32 %v1031, 16
      %v1231 = vcvt.s32.f32 %v1229
      %v1232 = vcvt.s32.f32 %v1230
      %1233 = vmin.xlane.f32.xlu0 %v1232
      %v1234 = vpop.xlane.xlu0 %1233
      %vm1235 = vcmp.eq.f32.partialorder %v1232, %v1234
      %v1236 = vsel %vm1235, %v1231, inf
      %1237 = vmin.xlane.f32.xlu0 %v1236
      %v1238 = vpop.xlane.xlu0 %1237
      %v1239 = vcvt.f32.s32 %v1238
      %v1240 = vcvt.f32.s32 %v1234
      %v1241 = vshll.u32 %v1240, 16
      %v1242 = vadd.s32 %v1241, %v1239
      %v1243 = vand.u32 %v1032, 65535
      %v1244 = vshra.s32 %v1032, 16
      %v1245 = vcvt.s32.f32 %v1243
      %v1246 = vcvt.s32.f32 %v1244
      %1247 = vmin.xlane.f32.xlu0 %v1246
      %v1248 = vpop.xlane.xlu0 %1247
      %vm1249 = vcmp.eq.f32.partialorder %v1246, %v1248
      %v1250 = vsel %vm1249, %v1245, inf
      %1251 = vmin.xlane.f32.xlu0 %v1250
      %v1252 = vpop.xlane.xlu0 %1251
      %v1253 = vcvt.f32.s32 %v1252
      %v1254 = vcvt.f32.s32 %v1248
      %v1255 = vshll.u32 %v1254, 16
      %v1256 = vadd.s32 %v1255, %v1253
      %v1257 = vand.u32 %v1046, 127
      %v1258 = vand.u32 %v1060, 127
      %v1259 = vand.u32 %v1074, 127
      %v1260 = vand.u32 %v1088, 127
      %v1261 = vand.u32 %v1102, 127
      %v1262 = vand.u32 %v1116, 127
      %v1263 = vand.u32 %v1130, 127
      %v1264 = vand.u32 %v1144, 127
      %v1265 = vand.u32 %v1158, 127
      %v1266 = vand.u32 %v1172, 127
      %v1267 = vand.u32 %v1186, 127
      %v1268 = vand.u32 %v1200, 127
      %v1269 = vand.u32 %v1214, 127
      %v1270 = vand.u32 %v1228, 127
      %v1271 = vand.u32 %v1242, 127
      %v1272 = vand.u32 %v1256, 127
      %vm1273 = vcmp.eq.s32.totalorder %v249, %v1257
      %vm1274 = vcmp.eq.s32.totalorder %v249, %v1258
      %vm1275 = vcmp.eq.s32.totalorder %v249, %v1259
      %vm1276 = vcmp.eq.s32.totalorder %v249, %v1260
      %vm1277 = vcmp.eq.s32.totalorder %v249, %v1261
      %vm1278 = vcmp.eq.s32.totalorder %v249, %v1262
      %vm1279 = vcmp.eq.s32.totalorder %v249, %v1263
      %vm1280 = vcmp.eq.s32.totalorder %v249, %v1264
      %vm1281 = vcmp.eq.s32.totalorder %v249, %v1265
      %vm1282 = vcmp.eq.s32.totalorder %v249, %v1266
      %vm1283 = vcmp.eq.s32.totalorder %v249, %v1267
      %vm1284 = vcmp.eq.s32.totalorder %v249, %v1268
      %vm1285 = vcmp.eq.s32.totalorder %v249, %v1269
      %vm1286 = vcmp.eq.s32.totalorder %v249, %v1270
      %vm1287 = vcmp.eq.s32.totalorder %v249, %v1271
      %vm1288 = vcmp.eq.s32.totalorder %v249, %v1272
      %v1289 = vsel %vm1273, 1, 0
      %v1290 = vsel %vm1274, 1, 0
      %v1291 = vsel %vm1275, 1, 0
      %v1292 = vsel %vm1276, 1, 0
      %v1293 = vsel %vm1277, 1, 0
      %v1294 = vsel %vm1278, 1, 0
      %v1295 = vsel %vm1279, 1, 0
      %v1296 = vsel %vm1280, 1, 0
      %v1297 = vsel %vm1281, 1, 0
      %v1298 = vsel %vm1282, 1, 0
      %v1299 = vsel %vm1283, 1, 0
      %v1300 = vsel %vm1284, 1, 0
      %v1301 = vsel %vm1285, 1, 0
      %v1302 = vsel %vm1286, 1, 0
      %v1303 = vsel %vm1287, 1, 0
      %v1304 = vsel %vm1288, 1, 0
      %v1305 = vcvt.s32.f32 %v1289
      %v1306 = vcvt.s32.f32 %v1290
      %v1307 = vcvt.s32.f32 %v1291
      %v1308 = vcvt.s32.f32 %v1292
      %v1309 = vcvt.s32.f32 %v1293
      %v1310 = vcvt.s32.f32 %v1294
      %v1311 = vcvt.s32.f32 %v1295
      %v1312 = vcvt.s32.f32 %v1296
      %v1313 = vcvt.s32.f32 %v1297
      %v1314 = vcvt.s32.f32 %v1298
      %v1315 = vcvt.s32.f32 %v1299
      %v1316 = vcvt.s32.f32 %v1300
      %v1317 = vcvt.s32.f32 %v1301
      %v1318 = vcvt.s32.f32 %v1302
      %v1319 = vcvt.s32.f32 %v1303
      %v1320 = vcvt.s32.f32 %v1304
      %v1321 = vadd.f32 %v1001, %v1305
      %v1322 = vadd.f32 %v1002, %v1306
      %v1323 = vadd.f32 %v1003, %v1307
      %v1324 = vadd.f32 %v1004, %v1308
      %v1325 = vadd.f32 %v1005, %v1309
      %v1326 = vadd.f32 %v1006, %v1310
      %v1327 = vadd.f32 %v1007, %v1311
      %v1328 = vadd.f32 %v1008, %v1312
      %v1329 = vadd.f32 %v1009, %v1313
      %v1330 = vadd.f32 %v1010, %v1314
      %v1331 = vadd.f32 %v1011, %v1315
      %v1332 = vadd.f32 %v1012, %v1316
      %v1333 = vadd.f32 %v1013, %v1317
      %v1334 = vadd.f32 %v1014, %v1318
      %v1335 = vadd.f32 %v1015, %v1319
      %v1336 = vadd.f32 %v1016, %v1320
      %v1337 = vsel %vm1273, 2147483647, %v1017
      %v1338 = vsel %vm1274, 2147483647, %v1018
      %v1339 = vsel %vm1275, 2147483647, %v1019
      %v1340 = vsel %vm1276, 2147483647, %v1020
      %v1341 = vsel %vm1277, 2147483647, %v1021
      %v1342 = vsel %vm1278, 2147483647, %v1022
      %v1343 = vsel %vm1279, 2147483647, %v1023
      %v1344 = vsel %vm1280, 2147483647, %v1024
      %v1345 = vsel %vm1281, 2147483647, %v1025
      %v1346 = vsel %vm1282, 2147483647, %v1026
      %v1347 = vsel %vm1283, 2147483647, %v1027
      %v1348 = vsel %vm1284, 2147483647, %v1028
      %v1349 = vsel %vm1285, 2147483647, %v1029
      %v1350 = vsel %vm1286, 2147483647, %v1030
      %v1351 = vsel %vm1287, 2147483647, %v1031
      %v1352 = vsel %vm1288, 2147483647, %v1032
      %v1353 = vand.u32 %v1337, 65535
      %v1354 = vshra.s32 %v1337, 16
      %v1355 = vcvt.s32.f32 %v1353
      %v1356 = vcvt.s32.f32 %v1354
      %1357 = vmin.xlane.f32.xlu0 %v1356
      %v1358 = vpop.xlane.xlu0 %1357
      %vm1359 = vcmp.eq.f32.partialorder %v1356, %v1358
      %v1360 = vsel %vm1359, %v1355, inf
      %1361 = vmin.xlane.f32.xlu0 %v1360
      %v1362 = vpop.xlane.xlu0 %1361
      %v1363 = vcvt.f32.s32 %v1362
      %v1364 = vcvt.f32.s32 %v1358
      %v1365 = vshll.u32 %v1364, 16
      %v1366 = vadd.s32 %v1365, %v1363
      %v1367 = vand.u32 %v1338, 65535
      %v1368 = vshra.s32 %v1338, 16
      %v1369 = vcvt.s32.f32 %v1367
      %v1370 = vcvt.s32.f32 %v1368
      %1371 = vmin.xlane.f32.xlu0 %v1370
      %v1372 = vpop.xlane.xlu0 %1371
      %vm1373 = vcmp.eq.f32.partialorder %v1370, %v1372
      %v1374 = vsel %vm1373, %v1369, inf
      %1375 = vmin.xlane.f32.xlu0 %v1374
      %v1376 = vpop.xlane.xlu0 %1375
      %v1377 = vcvt.f32.s32 %v1376
      %v1378 = vcvt.f32.s32 %v1372
      %v1379 = vshll.u32 %v1378, 16
      %v1380 = vadd.s32 %v1379, %v1377
      %v1381 = vand.u32 %v1339, 65535
      %v1382 = vshra.s32 %v1339, 16
      %v1383 = vcvt.s32.f32 %v1381
      %v1384 = vcvt.s32.f32 %v1382
      %1385 = vmin.xlane.f32.xlu0 %v1384
      %v1386 = vpop.xlane.xlu0 %1385
      %vm1387 = vcmp.eq.f32.partialorder %v1384, %v1386
      %v1388 = vsel %vm1387, %v1383, inf
      %1389 = vmin.xlane.f32.xlu0 %v1388
      %v1390 = vpop.xlane.xlu0 %1389
      %v1391 = vcvt.f32.s32 %v1390
      %v1392 = vcvt.f32.s32 %v1386
      %v1393 = vshll.u32 %v1392, 16
      %v1394 = vadd.s32 %v1393, %v1391
      %v1395 = vand.u32 %v1340, 65535
      %v1396 = vshra.s32 %v1340, 16
      %v1397 = vcvt.s32.f32 %v1395
      %v1398 = vcvt.s32.f32 %v1396
      %1399 = vmin.xlane.f32.xlu0 %v1398
      %v1400 = vpop.xlane.xlu0 %1399
      %vm1401 = vcmp.eq.f32.partialorder %v1398, %v1400
      %v1402 = vsel %vm1401, %v1397, inf
      %1403 = vmin.xlane.f32.xlu0 %v1402
      %v1404 = vpop.xlane.xlu0 %1403
      %v1405 = vcvt.f32.s32 %v1404
      %v1406 = vcvt.f32.s32 %v1400
      %v1407 = vshll.u32 %v1406, 16
      %v1408 = vadd.s32 %v1407, %v1405
      %v1409 = vand.u32 %v1341, 65535
      %v1410 = vshra.s32 %v1341, 16
      %v1411 = vcvt.s32.f32 %v1409
      %v1412 = vcvt.s32.f32 %v1410
      %1413 = vmin.xlane.f32.xlu0 %v1412
      %v1414 = vpop.xlane.xlu0 %1413
      %vm1415 = vcmp.eq.f32.partialorder %v1412, %v1414
      %v1416 = vsel %vm1415, %v1411, inf
      %1417 = vmin.xlane.f32.xlu0 %v1416
      %v1418 = vpop.xlane.xlu0 %1417
      %v1419 = vcvt.f32.s32 %v1418
      %v1420 = vcvt.f32.s32 %v1414
      %v1421 = vshll.u32 %v1420, 16
      %v1422 = vadd.s32 %v1421, %v1419
      %v1423 = vand.u32 %v1342, 65535
      %v1424 = vshra.s32 %v1342, 16
      %v1425 = vcvt.s32.f32 %v1423
      %v1426 = vcvt.s32.f32 %v1424
      %1427 = vmin.xlane.f32.xlu0 %v1426
      %v1428 = vpop.xlane.xlu0 %1427
      %vm1429 = vcmp.eq.f32.partialorder %v1426, %v1428
      %v1430 = vsel %vm1429, %v1425, inf
      %1431 = vmin.xlane.f32.xlu0 %v1430
      %v1432 = vpop.xlane.xlu0 %1431
      %v1433 = vcvt.f32.s32 %v1432
      %v1434 = vcvt.f32.s32 %v1428
      %v1435 = vshll.u32 %v1434, 16
      %v1436 = vadd.s32 %v1435, %v1433
      %v1437 = vand.u32 %v1343, 65535
      %v1438 = vshra.s32 %v1343, 16
      %v1439 = vcvt.s32.f32 %v1437
      %v1440 = vcvt.s32.f32 %v1438
      %1441 = vmin.xlane.f32.xlu0 %v1440
      %v1442 = vpop.xlane.xlu0 %1441
      %vm1443 = vcmp.eq.f32.partialorder %v1440, %v1442
      %v1444 = vsel %vm1443, %v1439, inf
      %1445 = vmin.xlane.f32.xlu0 %v1444
      %v1446 = vpop.xlane.xlu0 %1445
      %v1447 = vcvt.f32.s32 %v1446
      %v1448 = vcvt.f32.s32 %v1442
      %v1449 = vshll.u32 %v1448, 16
      %v1450 = vadd.s32 %v1449, %v1447
      %v1451 = vand.u32 %v1344, 65535
      %v1452 = vshra.s32 %v1344, 16
      %v1453 = vcvt.s32.f32 %v1451
      %v1454 = vcvt.s32.f32 %v1452
      %1455 = vmin.xlane.f32.xlu0 %v1454
      %v1456 = vpop.xlane.xlu0 %1455
      %vm1457 = vcmp.eq.f32.partialorder %v1454, %v1456
      %v1458 = vsel %vm1457, %v1453, inf
      %1459 = vmin.xlane.f32.xlu0 %v1458
      %v1460 = vpop.xlane.xlu0 %1459
      %v1461 = vcvt.f32.s32 %v1460
      %v1462 = vcvt.f32.s32 %v1456
      %v1463 = vshll.u32 %v1462, 16
      %v1464 = vadd.s32 %v1463, %v1461
      %v1465 = vand.u32 %v1345, 65535
      %v1466 = vshra.s32 %v1345, 16
      %v1467 = vcvt.s32.f32 %v1465
      %v1468 = vcvt.s32.f32 %v1466
      %1469 = vmin.xlane.f32.xlu0 %v1468
      %v1470 = vpop.xlane.xlu0 %1469
      %vm1471 = vcmp.eq.f32.partialorder %v1468, %v1470
      %v1472 = vsel %vm1471, %v1467, inf
      %1473 = vmin.xlane.f32.xlu0 %v1472
      %v1474 = vpop.xlane.xlu0 %1473
      %v1475 = vcvt.f32.s32 %v1474
      %v1476 = vcvt.f32.s32 %v1470
      %v1477 = vshll.u32 %v1476, 16
      %v1478 = vadd.s32 %v1477, %v1475
      %v1479 = vand.u32 %v1346, 65535
      %v1480 = vshra.s32 %v1346, 16
      %v1481 = vcvt.s32.f32 %v1479
      %v1482 = vcvt.s32.f32 %v1480
      %1483 = vmin.xlane.f32.xlu0 %v1482
      %v1484 = vpop.xlane.xlu0 %1483
      %vm1485 = vcmp.eq.f32.partialorder %v1482, %v1484
      %v1486 = vsel %vm1485, %v1481, inf
      %1487 = vmin.xlane.f32.xlu0 %v1486
      %v1488 = vpop.xlane.xlu0 %1487
      %v1489 = vcvt.f32.s32 %v1488
      %v1490 = vcvt.f32.s32 %v1484
      %v1491 = vshll.u32 %v1490, 16
      %v1492 = vadd.s32 %v1491, %v1489
      %v1493 = vand.u32 %v1347, 65535
      %v1494 = vshra.s32 %v1347, 16
      %v1495 = vcvt.s32.f32 %v1493
      %v1496 = vcvt.s32.f32 %v1494
      %1497 = vmin.xlane.f32.xlu0 %v1496
      %v1498 = vpop.xlane.xlu0 %1497
      %vm1499 = vcmp.eq.f32.partialorder %v1496, %v1498
      %v1500 = vsel %vm1499, %v1495, inf
      %1501 = vmin.xlane.f32.xlu0 %v1500
      %v1502 = vpop.xlane.xlu0 %1501
      %v1503 = vcvt.f32.s32 %v1502
      %v1504 = vcvt.f32.s32 %v1498
      %v1505 = vshll.u32 %v1504, 16
      %v1506 = vadd.s32 %v1505, %v1503
      %v1507 = vand.u32 %v1348, 65535
      %v1508 = vshra.s32 %v1348, 16
      %v1509 = vcvt.s32.f32 %v1507
      %v1510 = vcvt.s32.f32 %v1508
      %1511 = vmin.xlane.f32.xlu0 %v1510
      %v1512 = vpop.xlane.xlu0 %1511
      %vm1513 = vcmp.eq.f32.partialorder %v1510, %v1512
      %v1514 = vsel %vm1513, %v1509, inf
      %1515 = vmin.xlane.f32.xlu0 %v1514
      %v1516 = vpop.xlane.xlu0 %1515
      %v1517 = vcvt.f32.s32 %v1516
      %v1518 = vcvt.f32.s32 %v1512
      %v1519 = vshll.u32 %v1518, 16
      %v1520 = vadd.s32 %v1519, %v1517
      %v1521 = vand.u32 %v1349, 65535
      %v1522 = vshra.s32 %v1349, 16
      %v1523 = vcvt.s32.f32 %v1521
      %v1524 = vcvt.s32.f32 %v1522
      %1525 = vmin.xlane.f32.xlu0 %v1524
      %v1526 = vpop.xlane.xlu0 %1525
      %vm1527 = vcmp.eq.f32.partialorder %v1524, %v1526
      %v1528 = vsel %vm1527, %v1523, inf
      %1529 = vmin.xlane.f32.xlu0 %v1528
      %v1530 = vpop.xlane.xlu0 %1529
      %v1531 = vcvt.f32.s32 %v1530
      %v1532 = vcvt.f32.s32 %v1526
      %v1533 = vshll.u32 %v1532, 16
      %v1534 = vadd.s32 %v1533, %v1531
      %v1535 = vand.u32 %v1350, 65535
      %v1536 = vshra.s32 %v1350, 16
      %v1537 = vcvt.s32.f32 %v1535
      %v1538 = vcvt.s32.f32 %v1536
      %1539 = vmin.xlane.f32.xlu0 %v1538
      %v1540 = vpop.xlane.xlu0 %1539
      %vm1541 = vcmp.eq.f32.partialorder %v1538, %v1540
      %v1542 = vsel %vm1541, %v1537, inf
      %1543 = vmin.xlane.f32.xlu0 %v1542
      %v1544 = vpop.xlane.xlu0 %1543
      %v1545 = vcvt.f32.s32 %v1544
      %v1546 = vcvt.f32.s32 %v1540
      %v1547 = vshll.u32 %v1546, 16
      %v1548 = vadd.s32 %v1547, %v1545
      %v1549 = vand.u32 %v1351, 65535
      %v1550 = vshra.s32 %v1351, 16
      %v1551 = vcvt.s32.f32 %v1549
      %v1552 = vcvt.s32.f32 %v1550
      %1553 = vmin.xlane.f32.xlu0 %v1552
      %v1554 = vpop.xlane.xlu0 %1553
      %vm1555 = vcmp.eq.f32.partialorder %v1552, %v1554
      %v1556 = vsel %vm1555, %v1551, inf
      %1557 = vmin.xlane.f32.xlu0 %v1556
      %v1558 = vpop.xlane.xlu0 %1557
      %v1559 = vcvt.f32.s32 %v1558
      %v1560 = vcvt.f32.s32 %v1554
      %v1561 = vshll.u32 %v1560, 16
      %v1562 = vadd.s32 %v1561, %v1559
      %v1563 = vand.u32 %v1352, 65535
      %v1564 = vshra.s32 %v1352, 16
      %v1565 = vcvt.s32.f32 %v1563
      %v1566 = vcvt.s32.f32 %v1564
      %1567 = vmin.xlane.f32.xlu0 %v1566
      %v1568 = vpop.xlane.xlu0 %1567
      %vm1569 = vcmp.eq.f32.partialorder %v1566, %v1568
      %v1570 = vsel %vm1569, %v1565, inf
      %1571 = vmin.xlane.f32.xlu0 %v1570
      %v1572 = vpop.xlane.xlu0 %1571
      %v1573 = vcvt.f32.s32 %v1572
      %v1574 = vcvt.f32.s32 %v1568
      %v1575 = vshll.u32 %v1574, 16
      %v1576 = vadd.s32 %v1575, %v1573
      %v1577 = vand.u32 %v1366, 127
      %v1578 = vand.u32 %v1380, 127
      %v1579 = vand.u32 %v1394, 127
      %v1580 = vand.u32 %v1408, 127
      %v1581 = vand.u32 %v1422, 127
      %v1582 = vand.u32 %v1436, 127
      %v1583 = vand.u32 %v1450, 127
      %v1584 = vand.u32 %v1464, 127
      %v1585 = vand.u32 %v1478, 127
      %v1586 = vand.u32 %v1492, 127
      %v1587 = vand.u32 %v1506, 127
      %v1588 = vand.u32 %v1520, 127
      %v1589 = vand.u32 %v1534, 127
      %v1590 = vand.u32 %v1548, 127
      %v1591 = vand.u32 %v1562, 127
      %v1592 = vand.u32 %v1576, 127
      %vm1593 = vcmp.eq.s32.totalorder %v249, %v1577
      %vm1594 = vcmp.eq.s32.totalorder %v249, %v1578
      %vm1595 = vcmp.eq.s32.totalorder %v249, %v1579
      %vm1596 = vcmp.eq.s32.totalorder %v249, %v1580
      %vm1597 = vcmp.eq.s32.totalorder %v249, %v1581
      %vm1598 = vcmp.eq.s32.totalorder %v249, %v1582
      %vm1599 = vcmp.eq.s32.totalorder %v249, %v1583
      %vm1600 = vcmp.eq.s32.totalorder %v249, %v1584
      %vm1601 = vcmp.eq.s32.totalorder %v249, %v1585
      %vm1602 = vcmp.eq.s32.totalorder %v249, %v1586
      %vm1603 = vcmp.eq.s32.totalorder %v249, %v1587
      %vm1604 = vcmp.eq.s32.totalorder %v249, %v1588
      %vm1605 = vcmp.eq.s32.totalorder %v249, %v1589
      %vm1606 = vcmp.eq.s32.totalorder %v249, %v1590
      %vm1607 = vcmp.eq.s32.totalorder %v249, %v1591
      %vm1608 = vcmp.eq.s32.totalorder %v249, %v1592
      %v1609 = vsel %vm1593, 1, 0
      %v1610 = vsel %vm1594, 1, 0
      %v1611 = vsel %vm1595, 1, 0
      %v1612 = vsel %vm1596, 1, 0
      %v1613 = vsel %vm1597, 1, 0
      %v1614 = vsel %vm1598, 1, 0
      %v1615 = vsel %vm1599, 1, 0
      %v1616 = vsel %vm1600, 1, 0
      %v1617 = vsel %vm1601, 1, 0
      %v1618 = vsel %vm1602, 1, 0
      %v1619 = vsel %vm1603, 1, 0
      %v1620 = vsel %vm1604, 1, 0
      %v1621 = vsel %vm1605, 1, 0
      %v1622 = vsel %vm1606, 1, 0
      %v1623 = vsel %vm1607, 1, 0
      %v1624 = vsel %vm1608, 1, 0
      %v1625 = vcvt.s32.f32 %v1609
      %v1626 = vcvt.s32.f32 %v1610
      %v1627 = vcvt.s32.f32 %v1611
      %v1628 = vcvt.s32.f32 %v1612
      %v1629 = vcvt.s32.f32 %v1613
      %v1630 = vcvt.s32.f32 %v1614
      %v1631 = vcvt.s32.f32 %v1615
      %v1632 = vcvt.s32.f32 %v1616
      %v1633 = vcvt.s32.f32 %v1617
      %v1634 = vcvt.s32.f32 %v1618
      %v1635 = vcvt.s32.f32 %v1619
      %v1636 = vcvt.s32.f32 %v1620
      %v1637 = vcvt.s32.f32 %v1621
      %v1638 = vcvt.s32.f32 %v1622
      %v1639 = vcvt.s32.f32 %v1623
      %v1640 = vcvt.s32.f32 %v1624
      %v1641 = vadd.f32 %v1321, %v1625
      %v1642 = vadd.f32 %v1322, %v1626
      %v1643 = vadd.f32 %v1323, %v1627
      %v1644 = vadd.f32 %v1324, %v1628
      %v1645 = vadd.f32 %v1325, %v1629
      %v1646 = vadd.f32 %v1326, %v1630
      %v1647 = vadd.f32 %v1327, %v1631
      %v1648 = vadd.f32 %v1328, %v1632
      %v1649 = vadd.f32 %v1329, %v1633
      %v1650 = vadd.f32 %v1330, %v1634
      %v1651 = vadd.f32 %v1331, %v1635
      %v1652 = vadd.f32 %v1332, %v1636
      %v1653 = vadd.f32 %v1333, %v1637
      %v1654 = vadd.f32 %v1334, %v1638
      %v1655 = vadd.f32 %v1335, %v1639
      %v1656 = vadd.f32 %v1336, %v1640
      %v1657 = vsel %vm1593, 2147483647, %v1337
      %v1658 = vsel %vm1594, 2147483647, %v1338
      %v1659 = vsel %vm1595, 2147483647, %v1339
      %v1660 = vsel %vm1596, 2147483647, %v1340
      %v1661 = vsel %vm1597, 2147483647, %v1341
      %v1662 = vsel %vm1598, 2147483647, %v1342
      %v1663 = vsel %vm1599, 2147483647, %v1343
      %v1664 = vsel %vm1600, 2147483647, %v1344
      %v1665 = vsel %vm1601, 2147483647, %v1345
      %v1666 = vsel %vm1602, 2147483647, %v1346
      %v1667 = vsel %vm1603, 2147483647, %v1347
      %v1668 = vsel %vm1604, 2147483647, %v1348
      %v1669 = vsel %vm1605, 2147483647, %v1349
      %v1670 = vsel %vm1606, 2147483647, %v1350
      %v1671 = vsel %vm1607, 2147483647, %v1351
      %v1672 = vsel %vm1608, 2147483647, %v1352
      %v1673 = vand.u32 %v1657, 65535
      %v1674 = vshra.s32 %v1657, 16
      %v1675 = vcvt.s32.f32 %v1673
      %v1676 = vcvt.s32.f32 %v1674
      %1677 = vmin.xlane.f32.xlu0 %v1676
      %v1678 = vpop.xlane.xlu0 %1677
      %vm1679 = vcmp.eq.f32.partialorder %v1676, %v1678
      %v1680 = vsel %vm1679, %v1675, inf
      %1681 = vmin.xlane.f32.xlu0 %v1680
      %v1682 = vpop.xlane.xlu0 %1681
      %v1683 = vcvt.f32.s32 %v1682
      %v1684 = vcvt.f32.s32 %v1678
      %v1685 = vshll.u32 %v1684, 16
      %v1686 = vadd.s32 %v1685, %v1683
      %v1687 = vand.u32 %v1658, 65535
      %v1688 = vshra.s32 %v1658, 16
      %v1689 = vcvt.s32.f32 %v1687
      %v1690 = vcvt.s32.f32 %v1688
      %1691 = vmin.xlane.f32.xlu0 %v1690
      %v1692 = vpop.xlane.xlu0 %1691
      %vm1693 = vcmp.eq.f32.partialorder %v1690, %v1692
      %v1694 = vsel %vm1693, %v1689, inf
      %1695 = vmin.xlane.f32.xlu0 %v1694
      %v1696 = vpop.xlane.xlu0 %1695
      %v1697 = vcvt.f32.s32 %v1696
      %v1698 = vcvt.f32.s32 %v1692
      %v1699 = vshll.u32 %v1698, 16
      %v1700 = vadd.s32 %v1699, %v1697
      %v1701 = vand.u32 %v1659, 65535
      %v1702 = vshra.s32 %v1659, 16
      %v1703 = vcvt.s32.f32 %v1701
      %v1704 = vcvt.s32.f32 %v1702
      %1705 = vmin.xlane.f32.xlu0 %v1704
      %v1706 = vpop.xlane.xlu0 %1705
      %vm1707 = vcmp.eq.f32.partialorder %v1704, %v1706
      %v1708 = vsel %vm1707, %v1703, inf
      %1709 = vmin.xlane.f32.xlu0 %v1708
      %v1710 = vpop.xlane.xlu0 %1709
      %v1711 = vcvt.f32.s32 %v1710
      %v1712 = vcvt.f32.s32 %v1706
      %v1713 = vshll.u32 %v1712, 16
      %v1714 = vadd.s32 %v1713, %v1711
      %v1715 = vand.u32 %v1660, 65535
      %v1716 = vshra.s32 %v1660, 16
      %v1717 = vcvt.s32.f32 %v1715
      %v1718 = vcvt.s32.f32 %v1716
      %1719 = vmin.xlane.f32.xlu0 %v1718
      %v1720 = vpop.xlane.xlu0 %1719
      %vm1721 = vcmp.eq.f32.partialorder %v1718, %v1720
      %v1722 = vsel %vm1721, %v1717, inf
      %1723 = vmin.xlane.f32.xlu0 %v1722
      %v1724 = vpop.xlane.xlu0 %1723
      %v1725 = vcvt.f32.s32 %v1724
      %v1726 = vcvt.f32.s32 %v1720
      %v1727 = vshll.u32 %v1726, 16
      %v1728 = vadd.s32 %v1727, %v1725
      %v1729 = vand.u32 %v1661, 65535
      %v1730 = vshra.s32 %v1661, 16
      %v1731 = vcvt.s32.f32 %v1729
      %v1732 = vcvt.s32.f32 %v1730
      %1733 = vmin.xlane.f32.xlu0 %v1732
      %v1734 = vpop.xlane.xlu0 %1733
      %vm1735 = vcmp.eq.f32.partialorder %v1732, %v1734
      %v1736 = vsel %vm1735, %v1731, inf
      %1737 = vmin.xlane.f32.xlu0 %v1736
      %v1738 = vpop.xlane.xlu0 %1737
      %v1739 = vcvt.f32.s32 %v1738
      %v1740 = vcvt.f32.s32 %v1734
      %v1741 = vshll.u32 %v1740, 16
      %v1742 = vadd.s32 %v1741, %v1739
      %v1743 = vand.u32 %v1662, 65535
      %v1744 = vshra.s32 %v1662, 16
      %v1745 = vcvt.s32.f32 %v1743
      %v1746 = vcvt.s32.f32 %v1744
      %1747 = vmin.xlane.f32.xlu0 %v1746
      %v1748 = vpop.xlane.xlu0 %1747
      %vm1749 = vcmp.eq.f32.partialorder %v1746, %v1748
      %v1750 = vsel %vm1749, %v1745, inf
      %1751 = vmin.xlane.f32.xlu0 %v1750
      %v1752 = vpop.xlane.xlu0 %1751
      %v1753 = vcvt.f32.s32 %v1752
      %v1754 = vcvt.f32.s32 %v1748
      %v1755 = vshll.u32 %v1754, 16
      %v1756 = vadd.s32 %v1755, %v1753
      %v1757 = vand.u32 %v1663, 65535
      %v1758 = vshra.s32 %v1663, 16
      %v1759 = vcvt.s32.f32 %v1757
      %v1760 = vcvt.s32.f32 %v1758
      %1761 = vmin.xlane.f32.xlu0 %v1760
      %v1762 = vpop.xlane.xlu0 %1761
      %vm1763 = vcmp.eq.f32.partialorder %v1760, %v1762
      %v1764 = vsel %vm1763, %v1759, inf
      %1765 = vmin.xlane.f32.xlu0 %v1764
      %v1766 = vpop.xlane.xlu0 %1765
      %v1767 = vcvt.f32.s32 %v1766
      %v1768 = vcvt.f32.s32 %v1762
      %v1769 = vshll.u32 %v1768, 16
      %v1770 = vadd.s32 %v1769, %v1767
      %v1771 = vand.u32 %v1664, 65535
      %v1772 = vshra.s32 %v1664, 16
      %v1773 = vcvt.s32.f32 %v1771
      %v1774 = vcvt.s32.f32 %v1772
      %1775 = vmin.xlane.f32.xlu0 %v1774
      %v1776 = vpop.xlane.xlu0 %1775
      %vm1777 = vcmp.eq.f32.partialorder %v1774, %v1776
      %v1778 = vsel %vm1777, %v1773, inf
      %1779 = vmin.xlane.f32.xlu0 %v1778
      %v1780 = vpop.xlane.xlu0 %1779
      %v1781 = vcvt.f32.s32 %v1780
      %v1782 = vcvt.f32.s32 %v1776
      %v1783 = vshll.u32 %v1782, 16
      %v1784 = vadd.s32 %v1783, %v1781
      %v1785 = vand.u32 %v1665, 65535
      %v1786 = vshra.s32 %v1665, 16
      %v1787 = vcvt.s32.f32 %v1785
      %v1788 = vcvt.s32.f32 %v1786
      %1789 = vmin.xlane.f32.xlu0 %v1788
      %v1790 = vpop.xlane.xlu0 %1789
      %vm1791 = vcmp.eq.f32.partialorder %v1788, %v1790
      %v1792 = vsel %vm1791, %v1787, inf
      %1793 = vmin.xlane.f32.xlu0 %v1792
      %v1794 = vpop.xlane.xlu0 %1793
      %v1795 = vcvt.f32.s32 %v1794
      %v1796 = vcvt.f32.s32 %v1790
      %v1797 = vshll.u32 %v1796, 16
      %v1798 = vadd.s32 %v1797, %v1795
      %v1799 = vand.u32 %v1666, 65535
      %v1800 = vshra.s32 %v1666, 16
      %v1801 = vcvt.s32.f32 %v1799
      %v1802 = vcvt.s32.f32 %v1800
      %1803 = vmin.xlane.f32.xlu0 %v1802
      %v1804 = vpop.xlane.xlu0 %1803
      %vm1805 = vcmp.eq.f32.partialorder %v1802, %v1804
      %v1806 = vsel %vm1805, %v1801, inf
      %1807 = vmin.xlane.f32.xlu0 %v1806
      %v1808 = vpop.xlane.xlu0 %1807
      %v1809 = vcvt.f32.s32 %v1808
      %v1810 = vcvt.f32.s32 %v1804
      %v1811 = vshll.u32 %v1810, 16
      %v1812 = vadd.s32 %v1811, %v1809
      %v1813 = vand.u32 %v1667, 65535
      %v1814 = vshra.s32 %v1667, 16
      %v1815 = vcvt.s32.f32 %v1813
      %v1816 = vcvt.s32.f32 %v1814
      %1817 = vmin.xlane.f32.xlu0 %v1816
      %v1818 = vpop.xlane.xlu0 %1817
      %vm1819 = vcmp.eq.f32.partialorder %v1816, %v1818
      %v1820 = vsel %vm1819, %v1815, inf
      %1821 = vmin.xlane.f32.xlu0 %v1820
      %v1822 = vpop.xlane.xlu0 %1821
      %v1823 = vcvt.f32.s32 %v1822
      %v1824 = vcvt.f32.s32 %v1818
      %v1825 = vshll.u32 %v1824, 16
      %v1826 = vadd.s32 %v1825, %v1823
      %v1827 = vand.u32 %v1668, 65535
      %v1828 = vshra.s32 %v1668, 16
      %v1829 = vcvt.s32.f32 %v1827
      %v1830 = vcvt.s32.f32 %v1828
      %1831 = vmin.xlane.f32.xlu0 %v1830
      %v1832 = vpop.xlane.xlu0 %1831
      %vm1833 = vcmp.eq.f32.partialorder %v1830, %v1832
      %v1834 = vsel %vm1833, %v1829, inf
      %1835 = vmin.xlane.f32.xlu0 %v1834
      %v1836 = vpop.xlane.xlu0 %1835
      %v1837 = vcvt.f32.s32 %v1836
      %v1838 = vcvt.f32.s32 %v1832
      %v1839 = vshll.u32 %v1838, 16
      %v1840 = vadd.s32 %v1839, %v1837
      %v1841 = vand.u32 %v1669, 65535
      %v1842 = vshra.s32 %v1669, 16
      %v1843 = vcvt.s32.f32 %v1841
      %v1844 = vcvt.s32.f32 %v1842
      %1845 = vmin.xlane.f32.xlu0 %v1844
      %v1846 = vpop.xlane.xlu0 %1845
      %vm1847 = vcmp.eq.f32.partialorder %v1844, %v1846
      %v1848 = vsel %vm1847, %v1843, inf
      %1849 = vmin.xlane.f32.xlu0 %v1848
      %v1850 = vpop.xlane.xlu0 %1849
      %v1851 = vcvt.f32.s32 %v1850
      %v1852 = vcvt.f32.s32 %v1846
      %v1853 = vshll.u32 %v1852, 16
      %v1854 = vadd.s32 %v1853, %v1851
      %v1855 = vand.u32 %v1670, 65535
      %v1856 = vshra.s32 %v1670, 16
      %v1857 = vcvt.s32.f32 %v1855
      %v1858 = vcvt.s32.f32 %v1856
      %1859 = vmin.xlane.f32.xlu0 %v1858
      %v1860 = vpop.xlane.xlu0 %1859
      %vm1861 = vcmp.eq.f32.partialorder %v1858, %v1860
      %v1862 = vsel %vm1861, %v1857, inf
      %1863 = vmin.xlane.f32.xlu0 %v1862
      %v1864 = vpop.xlane.xlu0 %1863
      %v1865 = vcvt.f32.s32 %v1864
      %v1866 = vcvt.f32.s32 %v1860
      %v1867 = vshll.u32 %v1866, 16
      %v1868 = vadd.s32 %v1867, %v1865
      %v1869 = vand.u32 %v1671, 65535
      %v1870 = vshra.s32 %v1671, 16
      %v1871 = vcvt.s32.f32 %v1869
      %v1872 = vcvt.s32.f32 %v1870
      %1873 = vmin.xlane.f32.xlu0 %v1872
      %v1874 = vpop.xlane.xlu0 %1873
      %vm1875 = vcmp.eq.f32.partialorder %v1872, %v1874
      %v1876 = vsel %vm1875, %v1871, inf
      %1877 = vmin.xlane.f32.xlu0 %v1876
      %v1878 = vpop.xlane.xlu0 %1877
      %v1879 = vcvt.f32.s32 %v1878
      %v1880 = vcvt.f32.s32 %v1874
      %v1881 = vshll.u32 %v1880, 16
      %v1882 = vadd.s32 %v1881, %v1879
      %v1883 = vand.u32 %v1672, 65535
      %v1884 = vshra.s32 %v1672, 16
      %v1885 = vcvt.s32.f32 %v1883
      %v1886 = vcvt.s32.f32 %v1884
      %1887 = vmin.xlane.f32.xlu0 %v1886
      %v1888 = vpop.xlane.xlu0 %1887
      %vm1889 = vcmp.eq.f32.partialorder %v1886, %v1888
      %v1890 = vsel %vm1889, %v1885, inf
      %1891 = vmin.xlane.f32.xlu0 %v1890
      %v1892 = vpop.xlane.xlu0 %1891
      %v1893 = vcvt.f32.s32 %v1892
      %v1894 = vcvt.f32.s32 %v1888
      %v1895 = vshll.u32 %v1894, 16
      %v1896 = vadd.s32 %v1895, %v1893
      %v1897 = vand.u32 %v1686, 127
      %v1898 = vand.u32 %v1700, 127
      %v1899 = vand.u32 %v1714, 127
      %v1900 = vand.u32 %v1728, 127
      %v1901 = vand.u32 %v1742, 127
      %v1902 = vand.u32 %v1756, 127
      %v1903 = vand.u32 %v1770, 127
      %v1904 = vand.u32 %v1784, 127
      %v1905 = vand.u32 %v1798, 127
      %v1906 = vand.u32 %v1812, 127
      %v1907 = vand.u32 %v1826, 127
      %v1908 = vand.u32 %v1840, 127
      %v1909 = vand.u32 %v1854, 127
      %v1910 = vand.u32 %v1868, 127
      %v1911 = vand.u32 %v1882, 127
      %v1912 = vand.u32 %v1896, 127
      %vm1913 = vcmp.eq.s32.totalorder %v249, %v1897
      %vm1914 = vcmp.eq.s32.totalorder %v249, %v1898
      %vm1915 = vcmp.eq.s32.totalorder %v249, %v1899
      %vm1916 = vcmp.eq.s32.totalorder %v249, %v1900
      %vm1917 = vcmp.eq.s32.totalorder %v249, %v1901
      %vm1918 = vcmp.eq.s32.totalorder %v249, %v1902
      %vm1919 = vcmp.eq.s32.totalorder %v249, %v1903
      %vm1920 = vcmp.eq.s32.totalorder %v249, %v1904
      %vm1921 = vcmp.eq.s32.totalorder %v249, %v1905
      %vm1922 = vcmp.eq.s32.totalorder %v249, %v1906
      %vm1923 = vcmp.eq.s32.totalorder %v249, %v1907
      %vm1924 = vcmp.eq.s32.totalorder %v249, %v1908
      %vm1925 = vcmp.eq.s32.totalorder %v249, %v1909
      %vm1926 = vcmp.eq.s32.totalorder %v249, %v1910
      %vm1927 = vcmp.eq.s32.totalorder %v249, %v1911
      %vm1928 = vcmp.eq.s32.totalorder %v249, %v1912
      %v1929 = vsel %vm1913, 1, 0
      %v1930 = vsel %vm1914, 1, 0
      %v1931 = vsel %vm1915, 1, 0
      %v1932 = vsel %vm1916, 1, 0
      %v1933 = vsel %vm1917, 1, 0
      %v1934 = vsel %vm1918, 1, 0
      %v1935 = vsel %vm1919, 1, 0
      %v1936 = vsel %vm1920, 1, 0
      %v1937 = vsel %vm1921, 1, 0
      %v1938 = vsel %vm1922, 1, 0
      %v1939 = vsel %vm1923, 1, 0
      %v1940 = vsel %vm1924, 1, 0
      %v1941 = vsel %vm1925, 1, 0
      %v1942 = vsel %vm1926, 1, 0
      %v1943 = vsel %vm1927, 1, 0
      %v1944 = vsel %vm1928, 1, 0
      %v1945 = vcvt.s32.f32 %v1929
      %v1946 = vcvt.s32.f32 %v1930
      %v1947 = vcvt.s32.f32 %v1931
      %v1948 = vcvt.s32.f32 %v1932
      %v1949 = vcvt.s32.f32 %v1933
      %v1950 = vcvt.s32.f32 %v1934
      %v1951 = vcvt.s32.f32 %v1935
      %v1952 = vcvt.s32.f32 %v1936
      %v1953 = vcvt.s32.f32 %v1937
      %v1954 = vcvt.s32.f32 %v1938
      %v1955 = vcvt.s32.f32 %v1939
      %v1956 = vcvt.s32.f32 %v1940
      %v1957 = vcvt.s32.f32 %v1941
      %v1958 = vcvt.s32.f32 %v1942
      %v1959 = vcvt.s32.f32 %v1943
      %v1960 = vcvt.s32.f32 %v1944
      %v1961 = vadd.f32 %v1641, %v1945
      %v1962 = vadd.f32 %v1642, %v1946
      %v1963 = vadd.f32 %v1643, %v1947
      %v1964 = vadd.f32 %v1644, %v1948
      %v1965 = vadd.f32 %v1645, %v1949
      %v1966 = vadd.f32 %v1646, %v1950
      %v1967 = vadd.f32 %v1647, %v1951
      %v1968 = vadd.f32 %v1648, %v1952
      %v1969 = vadd.f32 %v1649, %v1953
      %v1970 = vadd.f32 %v1650, %v1954
      %v1971 = vadd.f32 %v1651, %v1955
      %v1972 = vadd.f32 %v1652, %v1956
      %v1973 = vadd.f32 %v1653, %v1957
      %v1974 = vadd.f32 %v1654, %v1958
      %v1975 = vadd.f32 %v1655, %v1959
      %v1976 = vadd.f32 %v1656, %v1960
      %v1977 = vsel %vm1913, 2147483647, %v1657
      %v1978 = vsel %vm1914, 2147483647, %v1658
      %v1979 = vsel %vm1915, 2147483647, %v1659
      %v1980 = vsel %vm1916, 2147483647, %v1660
      %v1981 = vsel %vm1917, 2147483647, %v1661
      %v1982 = vsel %vm1918, 2147483647, %v1662
      %v1983 = vsel %vm1919, 2147483647, %v1663
      %v1984 = vsel %vm1920, 2147483647, %v1664
      %v1985 = vsel %vm1921, 2147483647, %v1665
      %v1986 = vsel %vm1922, 2147483647, %v1666
      %v1987 = vsel %vm1923, 2147483647, %v1667
      %v1988 = vsel %vm1924, 2147483647, %v1668
      %v1989 = vsel %vm1925, 2147483647, %v1669
      %v1990 = vsel %vm1926, 2147483647, %v1670
      %v1991 = vsel %vm1927, 2147483647, %v1671
      %v1992 = vsel %vm1928, 2147483647, %v1672
      %v1993 = vand.u32 %v1977, 65535
      %v1994 = vshra.s32 %v1977, 16
      %v1995 = vcvt.s32.f32 %v1993
      %v1996 = vcvt.s32.f32 %v1994
      %1997 = vmin.xlane.f32.xlu0 %v1996
      %v1998 = vpop.xlane.xlu0 %1997
      %vm1999 = vcmp.eq.f32.partialorder %v1996, %v1998
      %v2000 = vsel %vm1999, %v1995, inf
      %2001 = vmin.xlane.f32.xlu0 %v2000
      %v2002 = vpop.xlane.xlu0 %2001
      %v2003 = vcvt.f32.s32 %v2002
      %v2004 = vcvt.f32.s32 %v1998
      %v2005 = vshll.u32 %v2004, 16
      %v2006 = vadd.s32 %v2005, %v2003
      %v2007 = vand.u32 %v1978, 65535
      %v2008 = vshra.s32 %v1978, 16
      %v2009 = vcvt.s32.f32 %v2007
      %v2010 = vcvt.s32.f32 %v2008
      %2011 = vmin.xlane.f32.xlu0 %v2010
      %v2012 = vpop.xlane.xlu0 %2011
      %vm2013 = vcmp.eq.f32.partialorder %v2010, %v2012
      %v2014 = vsel %vm2013, %v2009, inf
      %2015 = vmin.xlane.f32.xlu0 %v2014
      %v2016 = vpop.xlane.xlu0 %2015
      %v2017 = vcvt.f32.s32 %v2016
      %v2018 = vcvt.f32.s32 %v2012
      %v2019 = vshll.u32 %v2018, 16
      %v2020 = vadd.s32 %v2019, %v2017
      %v2021 = vand.u32 %v1979, 65535
      %v2022 = vshra.s32 %v1979, 16
      %v2023 = vcvt.s32.f32 %v2021
      %v2024 = vcvt.s32.f32 %v2022
      %2025 = vmin.xlane.f32.xlu0 %v2024
      %v2026 = vpop.xlane.xlu0 %2025
      %vm2027 = vcmp.eq.f32.partialorder %v2024, %v2026
      %v2028 = vsel %vm2027, %v2023, inf
      %2029 = vmin.xlane.f32.xlu0 %v2028
      %v2030 = vpop.xlane.xlu0 %2029
      %v2031 = vcvt.f32.s32 %v2030
      %v2032 = vcvt.f32.s32 %v2026
      %v2033 = vshll.u32 %v2032, 16
      %v2034 = vadd.s32 %v2033, %v2031
      %v2035 = vand.u32 %v1980, 65535
      %v2036 = vshra.s32 %v1980, 16
      %v2037 = vcvt.s32.f32 %v2035
      %v2038 = vcvt.s32.f32 %v2036
      %2039 = vmin.xlane.f32.xlu0 %v2038
      %v2040 = vpop.xlane.xlu0 %2039
      %vm2041 = vcmp.eq.f32.partialorder %v2038, %v2040
      %v2042 = vsel %vm2041, %v2037, inf
      %2043 = vmin.xlane.f32.xlu0 %v2042
      %v2044 = vpop.xlane.xlu0 %2043
      %v2045 = vcvt.f32.s32 %v2044
      %v2046 = vcvt.f32.s32 %v2040
      %v2047 = vshll.u32 %v2046, 16
      %v2048 = vadd.s32 %v2047, %v2045
      %v2049 = vand.u32 %v1981, 65535
      %v2050 = vshra.s32 %v1981, 16
      %v2051 = vcvt.s32.f32 %v2049
      %v2052 = vcvt.s32.f32 %v2050
      %2053 = vmin.xlane.f32.xlu0 %v2052
      %v2054 = vpop.xlane.xlu0 %2053
      %vm2055 = vcmp.eq.f32.partialorder %v2052, %v2054
      %v2056 = vsel %vm2055, %v2051, inf
      %2057 = vmin.xlane.f32.xlu0 %v2056
      %v2058 = vpop.xlane.xlu0 %2057
      %v2059 = vcvt.f32.s32 %v2058
      %v2060 = vcvt.f32.s32 %v2054
      %v2061 = vshll.u32 %v2060, 16
      %v2062 = vadd.s32 %v2061, %v2059
      %v2063 = vand.u32 %v1982, 65535
      %v2064 = vshra.s32 %v1982, 16
      %v2065 = vcvt.s32.f32 %v2063
      %v2066 = vcvt.s32.f32 %v2064
      %2067 = vmin.xlane.f32.xlu0 %v2066
      %v2068 = vpop.xlane.xlu0 %2067
      %vm2069 = vcmp.eq.f32.partialorder %v2066, %v2068
      %v2070 = vsel %vm2069, %v2065, inf
      %2071 = vmin.xlane.f32.xlu0 %v2070
      %v2072 = vpop.xlane.xlu0 %2071
      %v2073 = vcvt.f32.s32 %v2072
      %v2074 = vcvt.f32.s32 %v2068
      %v2075 = vshll.u32 %v2074, 16
      %v2076 = vadd.s32 %v2075, %v2073
      %v2077 = vand.u32 %v1983, 65535
      %v2078 = vshra.s32 %v1983, 16
      %v2079 = vcvt.s32.f32 %v2077
      %v2080 = vcvt.s32.f32 %v2078
      %2081 = vmin.xlane.f32.xlu0 %v2080
      %v2082 = vpop.xlane.xlu0 %2081
      %vm2083 = vcmp.eq.f32.partialorder %v2080, %v2082
      %v2084 = vsel %vm2083, %v2079, inf
      %2085 = vmin.xlane.f32.xlu0 %v2084
      %v2086 = vpop.xlane.xlu0 %2085
      %v2087 = vcvt.f32.s32 %v2086
      %v2088 = vcvt.f32.s32 %v2082
      %v2089 = vshll.u32 %v2088, 16
      %v2090 = vadd.s32 %v2089, %v2087
      %v2091 = vand.u32 %v1984, 65535
      %v2092 = vshra.s32 %v1984, 16
      %v2093 = vcvt.s32.f32 %v2091
      %v2094 = vcvt.s32.f32 %v2092
      %2095 = vmin.xlane.f32.xlu0 %v2094
      %v2096 = vpop.xlane.xlu0 %2095
      %vm2097 = vcmp.eq.f32.partialorder %v2094, %v2096
      %v2098 = vsel %vm2097, %v2093, inf
      %2099 = vmin.xlane.f32.xlu0 %v2098
      %v2100 = vpop.xlane.xlu0 %2099
      %v2101 = vcvt.f32.s32 %v2100
      %v2102 = vcvt.f32.s32 %v2096
      %v2103 = vshll.u32 %v2102, 16
      %v2104 = vadd.s32 %v2103, %v2101
      %v2105 = vand.u32 %v1985, 65535
      %v2106 = vshra.s32 %v1985, 16
      %v2107 = vcvt.s32.f32 %v2105
      %v2108 = vcvt.s32.f32 %v2106
      %2109 = vmin.xlane.f32.xlu0 %v2108
      %v2110 = vpop.xlane.xlu0 %2109
      %vm2111 = vcmp.eq.f32.partialorder %v2108, %v2110
      %v2112 = vsel %vm2111, %v2107, inf
      %2113 = vmin.xlane.f32.xlu0 %v2112
      %v2114 = vpop.xlane.xlu0 %2113
      %v2115 = vcvt.f32.s32 %v2114
      %v2116 = vcvt.f32.s32 %v2110
      %v2117 = vshll.u32 %v2116, 16
      %v2118 = vadd.s32 %v2117, %v2115
      %v2119 = vand.u32 %v1986, 65535
      %v2120 = vshra.s32 %v1986, 16
      %v2121 = vcvt.s32.f32 %v2119
      %v2122 = vcvt.s32.f32 %v2120
      %2123 = vmin.xlane.f32.xlu0 %v2122
      %v2124 = vpop.xlane.xlu0 %2123
      %vm2125 = vcmp.eq.f32.partialorder %v2122, %v2124
      %v2126 = vsel %vm2125, %v2121, inf
      %2127 = vmin.xlane.f32.xlu0 %v2126
      %v2128 = vpop.xlane.xlu0 %2127
      %v2129 = vcvt.f32.s32 %v2128
      %v2130 = vcvt.f32.s32 %v2124
      %v2131 = vshll.u32 %v2130, 16
      %v2132 = vadd.s32 %v2131, %v2129
      %v2133 = vand.u32 %v1987, 65535
      %v2134 = vshra.s32 %v1987, 16
      %v2135 = vcvt.s32.f32 %v2133
      %v2136 = vcvt.s32.f32 %v2134
      %2137 = vmin.xlane.f32.xlu0 %v2136
      %v2138 = vpop.xlane.xlu0 %2137
      %vm2139 = vcmp.eq.f32.partialorder %v2136, %v2138
      %v2140 = vsel %vm2139, %v2135, inf
      %2141 = vmin.xlane.f32.xlu0 %v2140
      %v2142 = vpop.xlane.xlu0 %2141
      %v2143 = vcvt.f32.s32 %v2142
      %v2144 = vcvt.f32.s32 %v2138
      %v2145 = vshll.u32 %v2144, 16
      %v2146 = vadd.s32 %v2145, %v2143
      %v2147 = vand.u32 %v1988, 65535
      %v2148 = vshra.s32 %v1988, 16
      %v2149 = vcvt.s32.f32 %v2147
      %v2150 = vcvt.s32.f32 %v2148
      %2151 = vmin.xlane.f32.xlu0 %v2150
      %v2152 = vpop.xlane.xlu0 %2151
      %vm2153 = vcmp.eq.f32.partialorder %v2150, %v2152
      %v2154 = vsel %vm2153, %v2149, inf
      %2155 = vmin.xlane.f32.xlu0 %v2154
      %v2156 = vpop.xlane.xlu0 %2155
      %v2157 = vcvt.f32.s32 %v2156
      %v2158 = vcvt.f32.s32 %v2152
      %v2159 = vshll.u32 %v2158, 16
      %v2160 = vadd.s32 %v2159, %v2157
      %v2161 = vand.u32 %v1989, 65535
      %v2162 = vshra.s32 %v1989, 16
      %v2163 = vcvt.s32.f32 %v2161
      %v2164 = vcvt.s32.f32 %v2162
      %2165 = vmin.xlane.f32.xlu0 %v2164
      %v2166 = vpop.xlane.xlu0 %2165
      %vm2167 = vcmp.eq.f32.partialorder %v2164, %v2166
      %v2168 = vsel %vm2167, %v2163, inf
      %2169 = vmin.xlane.f32.xlu0 %v2168
      %v2170 = vpop.xlane.xlu0 %2169
      %v2171 = vcvt.f32.s32 %v2170
      %v2172 = vcvt.f32.s32 %v2166
      %v2173 = vshll.u32 %v2172, 16
      %v2174 = vadd.s32 %v2173, %v2171
      %v2175 = vand.u32 %v1990, 65535
      %v2176 = vshra.s32 %v1990, 16
      %v2177 = vcvt.s32.f32 %v2175
      %v2178 = vcvt.s32.f32 %v2176
      %2179 = vmin.xlane.f32.xlu0 %v2178
      %v2180 = vpop.xlane.xlu0 %2179
      %vm2181 = vcmp.eq.f32.partialorder %v2178, %v2180
      %v2182 = vsel %vm2181, %v2177, inf
      %2183 = vmin.xlane.f32.xlu0 %v2182
      %v2184 = vpop.xlane.xlu0 %2183
      %v2185 = vcvt.f32.s32 %v2184
      %v2186 = vcvt.f32.s32 %v2180
      %v2187 = vshll.u32 %v2186, 16
      %v2188 = vadd.s32 %v2187, %v2185
      %v2189 = vand.u32 %v1991, 65535
      %v2190 = vshra.s32 %v1991, 16
      %v2191 = vcvt.s32.f32 %v2189
      %v2192 = vcvt.s32.f32 %v2190
      %2193 = vmin.xlane.f32.xlu0 %v2192
      %v2194 = vpop.xlane.xlu0 %2193
      %vm2195 = vcmp.eq.f32.partialorder %v2192, %v2194
      %v2196 = vsel %vm2195, %v2191, inf
      %2197 = vmin.xlane.f32.xlu0 %v2196
      %v2198 = vpop.xlane.xlu0 %2197
      %v2199 = vcvt.f32.s32 %v2198
      %v2200 = vcvt.f32.s32 %v2194
      %v2201 = vshll.u32 %v2200, 16
      %v2202 = vadd.s32 %v2201, %v2199
      %v2203 = vand.u32 %v1992, 65535
      %v2204 = vshra.s32 %v1992, 16
      %v2205 = vcvt.s32.f32 %v2203
      %v2206 = vcvt.s32.f32 %v2204
      %2207 = vmin.xlane.f32.xlu0 %v2206
      %v2208 = vpop.xlane.xlu0 %2207
      %vm2209 = vcmp.eq.f32.partialorder %v2206, %v2208
      %v2210 = vsel %vm2209, %v2205, inf
      %2211 = vmin.xlane.f32.xlu0 %v2210
      %v2212 = vpop.xlane.xlu0 %2211
      %v2213 = vcvt.f32.s32 %v2212
      %v2214 = vcvt.f32.s32 %v2208
      %v2215 = vshll.u32 %v2214, 16
      %v2216 = vadd.s32 %v2215, %v2213
      %v2217 = vand.u32 %v2006, 127
      %v2218 = vand.u32 %v2020, 127
      %v2219 = vand.u32 %v2034, 127
      %v2220 = vand.u32 %v2048, 127
      %v2221 = vand.u32 %v2062, 127
      %v2222 = vand.u32 %v2076, 127
      %v2223 = vand.u32 %v2090, 127
      %v2224 = vand.u32 %v2104, 127
      %v2225 = vand.u32 %v2118, 127
      %v2226 = vand.u32 %v2132, 127
      %v2227 = vand.u32 %v2146, 127
      %v2228 = vand.u32 %v2160, 127
      %v2229 = vand.u32 %v2174, 127
      %v2230 = vand.u32 %v2188, 127
      %v2231 = vand.u32 %v2202, 127
      %v2232 = vand.u32 %v2216, 127
      %vm2233 = vcmp.eq.s32.totalorder %v249, %v2217
      %vm2234 = vcmp.eq.s32.totalorder %v249, %v2218
      %vm2235 = vcmp.eq.s32.totalorder %v249, %v2219
      %vm2236 = vcmp.eq.s32.totalorder %v249, %v2220
      %vm2237 = vcmp.eq.s32.totalorder %v249, %v2221
      %vm2238 = vcmp.eq.s32.totalorder %v249, %v2222
      %vm2239 = vcmp.eq.s32.totalorder %v249, %v2223
      %vm2240 = vcmp.eq.s32.totalorder %v249, %v2224
      %vm2241 = vcmp.eq.s32.totalorder %v249, %v2225
      %vm2242 = vcmp.eq.s32.totalorder %v249, %v2226
      %vm2243 = vcmp.eq.s32.totalorder %v249, %v2227
      %vm2244 = vcmp.eq.s32.totalorder %v249, %v2228
      %vm2245 = vcmp.eq.s32.totalorder %v249, %v2229
      %vm2246 = vcmp.eq.s32.totalorder %v249, %v2230
      %vm2247 = vcmp.eq.s32.totalorder %v249, %v2231
      %vm2248 = vcmp.eq.s32.totalorder %v249, %v2232
      %v2249 = vsel %vm2233, 1, 0
      %v2250 = vsel %vm2234, 1, 0
      %v2251 = vsel %vm2235, 1, 0
      %v2252 = vsel %vm2236, 1, 0
      %v2253 = vsel %vm2237, 1, 0
      %v2254 = vsel %vm2238, 1, 0
      %v2255 = vsel %vm2239, 1, 0
      %v2256 = vsel %vm2240, 1, 0
      %v2257 = vsel %vm2241, 1, 0
      %v2258 = vsel %vm2242, 1, 0
      %v2259 = vsel %vm2243, 1, 0
      %v2260 = vsel %vm2244, 1, 0
      %v2261 = vsel %vm2245, 1, 0
      %v2262 = vsel %vm2246, 1, 0
      %v2263 = vsel %vm2247, 1, 0
      %v2264 = vsel %vm2248, 1, 0
      %v2265 = vcvt.s32.f32 %v2249
      %v2266 = vcvt.s32.f32 %v2250
      %v2267 = vcvt.s32.f32 %v2251
      %v2268 = vcvt.s32.f32 %v2252
      %v2269 = vcvt.s32.f32 %v2253
      %v2270 = vcvt.s32.f32 %v2254
      %v2271 = vcvt.s32.f32 %v2255
      %v2272 = vcvt.s32.f32 %v2256
      %v2273 = vcvt.s32.f32 %v2257
      %v2274 = vcvt.s32.f32 %v2258
      %v2275 = vcvt.s32.f32 %v2259
      %v2276 = vcvt.s32.f32 %v2260
      %v2277 = vcvt.s32.f32 %v2261
      %v2278 = vcvt.s32.f32 %v2262
      %v2279 = vcvt.s32.f32 %v2263
      %v2280 = vcvt.s32.f32 %v2264
      %v2281 = vadd.f32 %v1961, %v2265
      %v2282 = vadd.f32 %v1962, %v2266
      %v2283 = vadd.f32 %v1963, %v2267
      %v2284 = vadd.f32 %v1964, %v2268
      %v2285 = vadd.f32 %v1965, %v2269
      %v2286 = vadd.f32 %v1966, %v2270
      %v2287 = vadd.f32 %v1967, %v2271
      %v2288 = vadd.f32 %v1968, %v2272
      %v2289 = vadd.f32 %v1969, %v2273
      %v2290 = vadd.f32 %v1970, %v2274
      %v2291 = vadd.f32 %v1971, %v2275
      %v2292 = vadd.f32 %v1972, %v2276
      %v2293 = vadd.f32 %v1973, %v2277
      %v2294 = vadd.f32 %v1974, %v2278
      %v2295 = vadd.f32 %v1975, %v2279
      %v2296 = vadd.f32 %v1976, %v2280
      %2297 = vmatprep.subr.mxu0 0.0
      %2298 = vmatpush1.msra.mxu0 %v225
      %2299 = vmatprep.subr.mxu0 0.0
      %2300 = vmatpush1.msra.mxu0 %v226
      %2301 = vmatprep.subr.mxu0 0.0
      %2302 = vmatpush1.msra.mxu0 %v227
      %2303 = vmatprep.subr.mxu0 0.0
      %2304 = vmatpush1.msra.mxu0 %v228
      %2305 = vmatprep.subr.mxu0 0.0
      %2306 = vmatpush1.msra.mxu0 %v229
      %2307 = vmatprep.subr.mxu0 0.0
      %2308 = vmatpush1.msra.mxu0 %v230
      %2309 = vmatprep.subr.mxu0 0.0
      %2310 = vmatpush1.msra.mxu0 %v231
      %2311 = vmatprep.subr.mxu0 0.0
      %2312 = vmatpush1.msra.mxu0 %v232
      %2313 = vmatprep.subr.mxu0 0.0
      %2314 = vmatpush1.msra.mxu0 %v233
      %2315 = vmatprep.subr.mxu0 0.0
      %2316 = vmatpush1.msra.mxu0 %v234
      %2317 = vmatprep.subr.mxu0 0.0
      %2318 = vmatpush1.msra.mxu0 %v235
      %2319 = vmatprep.subr.mxu0 0.0
      %2320 = vmatpush1.msra.mxu0 %v236
      %2321 = vmatprep.subr.mxu0 0.0
      %2322 = vmatpush1.msra.mxu0 %v237
      %2323 = vmatprep.subr.mxu0 0.0
      %2324 = vmatpush1.msra.mxu0 %v238
      %2325 = vmatprep.subr.mxu0 0.0
      %2326 = vmatpush1.msra.mxu0 %v239
      %2327 = vmatprep.subr.mxu0 0.0
      %2328 = vmatpush1.msra.mxu0 %v240
      %2329 = vmatprep.subr.mxu0 0.0
      %2330 = vmatpush1.msra.mxu0 0.0
      %2331 = vmatprep.subr.mxu0 0.0
      %2332 = vmatpush1.msra.mxu0 0.0
      %2333 = vmatprep.subr.mxu0 0.0
      %2334 = vmatpush1.msra.mxu0 0.0
      %2335 = vmatprep.subr.mxu0 0.0
      %2336 = vmatpush1.msra.mxu0 0.0
      %2337 = vmatprep.subr.mxu0 0.0
      %2338 = vmatpush1.msra.mxu0 0.0
      %2339 = vmatprep.subr.mxu0 0.0
      %2340 = vmatpush1.msra.mxu0 0.0
      %2341 = vmatprep.subr.mxu0 0.0
      %2342 = vmatpush1.msra.mxu0 0.0
      %2343 = vmatprep.subr.mxu0 0.0
      %2344 = vmatpush1.msra.mxu0 0.0
      %2345 = vmatprep.subr.mxu0 0.0
      %2346 = vmatpush1.msra.mxu0 0.0
      %2347 = vmatprep.subr.mxu0 0.0
      %2348 = vmatpush1.msra.mxu0 0.0
      %2349 = vmatprep.subr.mxu0 0.0
      %2350 = vmatpush1.msra.mxu0 0.0
      %2351 = vmatprep.subr.mxu0 0.0
      %2352 = vmatpush1.msra.mxu0 0.0
      %2353 = vmatprep.subr.mxu0 0.0
      %2354 = vmatpush1.msra.mxu0 0.0
      %2355 = vmatprep.subr.mxu0 0.0
      %2356 = vmatpush1.msra.mxu0 0.0
      %2357 = vmatprep.subr.mxu0 0.0
      %2358 = vmatpush1.msra.mxu0 0.0
      %2359 = vmatprep.subr.mxu0 0.0
      %2360 = vmatpush1.msra.mxu0 0.0
      %2361 = vmatprep.mubr.f32.mxu0 0.0
      %2362 = vmatmul.mubr.f32.gmra.mrb[0].mxu0 %v2281
      %v2363 = vpop.f32.mrb[0].mxu0
      %v2364 = vadd.f32 0.0, %v2363
      %v2365 = vpop.f32.mrb[0].mxu0
      %2366 = vmatprep.mubr.f32.mxu0 0.0
      %2367 = vmatmul.mubr.f32.gmra.mrb[0].mxu0 %v2282
      %v2368 = vpop.f32.mrb[0].mxu0
      %v2369 = vadd.f32 0.0, %v2368
      %v2370 = vpop.f32.mrb[0].mxu0
      %2371 = vmatprep.mubr.f32.mxu0 0.0
      %2372 = vmatmul.mubr.f32.gmra.mrb[0].mxu0 %v2283
      %v2373 = vpop.f32.mrb[0].mxu0
      %v2374 = vadd.f32 0.0, %v2373
      %v2375 = vpop.f32.mrb[0].mxu0
      %2376 = vmatprep.mubr.f32.mxu0 0.0
      %2377 = vmatmul.mubr.f32.gmra.mrb[0].mxu0 %v2284
      %v2378 = vpop.f32.mrb[0].mxu0
      %v2379 = vadd.f32 0.0, %v2378
      %v2380 = vpop.f32.mrb[0].mxu0
      %2381 = vmatprep.mubr.f32.mxu0 0.0
      %2382 = vmatmul.mubr.f32.gmra.mrb[0].mxu0 %v2285
      %v2383 = vpop.f32.mrb[0].mxu0
      %v2384 = vadd.f32 0.0, %v2383
      %v2385 = vpop.f32.mrb[0].mxu0
      %2386 = vmatprep.mubr.f32.mxu0 0.0
      %2387 = vmatmul.mubr.f32.gmra.mrb[0].mxu0 %v2286
      %v2388 = vpop.f32.mrb[0].mxu0
      %v2389 = vadd.f32 0.0, %v2388
      %v2390 = vpop.f32.mrb[0].mxu0
      %2391 = vmatprep.mubr.f32.mxu0 0.0
      %2392 = vmatmul.mubr.f32.gmra.mrb[0].mxu0 %v2287
      %v2393 = vpop.f32.mrb[0].mxu0
      %v2394 = vadd.f32 0.0, %v2393
      %v2395 = vpop.f32.mrb[0].mxu0
      %2396 = vmatprep.mubr.f32.mxu0 0.0
      %2397 = vmatmul.mubr.f32.gmra.mrb[0].mxu0 %v2288
      %v2398 = vpop.f32.mrb[0].mxu0
      %v2399 = vadd.f32 0.0, %v2398
      %v2400 = vpop.f32.mrb[0].mxu0
      %2401 = vmatprep.mubr.f32.mxu0 0.0
      %2402 = vmatmul.mubr.f32.gmra.mrb[0].mxu0 %v2289
      %v2403 = vpop.f32.mrb[0].mxu0
      %v2404 = vadd.f32 0.0, %v2403
      %v2405 = vpop.f32.mrb[0].mxu0
      %2406 = vmatprep.mubr.f32.mxu0 0.0
      %2407 = vmatmul.mubr.f32.gmra.mrb[0].mxu0 %v2290
      %v2408 = vpop.f32.mrb[0].mxu0
      %v2409 = vadd.f32 0.0, %v2408
      %v2410 = vpop.f32.mrb[0].mxu0
      %2411 = vmatprep.mubr.f32.mxu0 0.0
      %2412 = vmatmul.mubr.f32.gmra.mrb[0].mxu0 %v2291
      %v2413 = vpop.f32.mrb[0].mxu0
      %v2414 = vadd.f32 0.0, %v2413
      %v2415 = vpop.f32.mrb[0].mxu0
      %2416 = vmatprep.mubr.f32.mxu0 0.0
      %2417 = vmatmul.mubr.f32.gmra.mrb[0].mxu0 %v2292
      %v2418 = vpop.f32.mrb[0].mxu0
      %v2419 = vadd.f32 0.0, %v2418
      %v2420 = vpop.f32.mrb[0].mxu0
      %2421 = vmatprep.mubr.f32.mxu0 0.0
      %2422 = vmatmul.mubr.f32.gmra.mrb[0].mxu0 %v2293
      %v2423 = vpop.f32.mrb[0].mxu0
      %v2424 = vadd.f32 0.0, %v2423
      %v2425 = vpop.f32.mrb[0].mxu0
      %2426 = vmatprep.mubr.f32.mxu0 0.0
      %2427 = vmatmul.mubr.f32.gmra.mrb[0].mxu0 %v2294
      %v2428 = vpop.f32.mrb[0].mxu0
      %v2429 = vadd.f32 0.0, %v2428
      %v2430 = vpop.f32.mrb[0].mxu0
      %2431 = vmatprep.mubr.f32.mxu0 0.0
      %2432 = vmatmul.mubr.f32.gmra.mrb[0].mxu0 %v2295
      %v2433 = vpop.f32.mrb[0].mxu0
      %v2434 = vadd.f32 0.0, %v2433
      %v2435 = vpop.f32.mrb[0].mxu0
      %2436 = vmatprep.mubr.f32.mxu0 0.0
      %2437 = vmatmul.mubr.f32.gmra.mrb[0].mxu0 %v2296
      %v2438 = vpop.f32.mrb[0].mxu0
      %v2439 = vadd.f32 0.0, %v2438
      %v2440 = vpop.f32.mrb[0].mxu0
      %2441 = vdwg.mxu0
      %v2442 = vmul.f32 %v2364, 0.2
      %v2443 = vmul.f32 %v2369, 0.2
      %v2444 = vmul.f32 %v2374, 0.2
      %v2445 = vmul.f32 %v2379, 0.2
      %v2446 = vmul.f32 %v2384, 0.2
      %v2447 = vmul.f32 %v2389, 0.2
      %v2448 = vmul.f32 %v2394, 0.2
      %v2449 = vmul.f32 %v2399, 0.2
      %v2450 = vmul.f32 %v2404, 0.2
      %v2451 = vmul.f32 %v2409, 0.2
      %v2452 = vmul.f32 %v2414, 0.2
      %v2453 = vmul.f32 %v2419, 0.2
      %v2454 = vmul.f32 %v2424, 0.2
      %v2455 = vmul.f32 %v2429, 0.2
      %v2456 = vmul.f32 %v2434, 0.2
      %v2457 = vmul.f32 %v2439, 0.2
      %v2459 = vlaneseq
      %v2460 = vshrl.u32 %v2459, 7
      %v2461 = vsub.s32 0, %v2460
      %v2462 = vrot.slane %v242, %v2461
      %vm2464 = vcmask 64512
      %v2466 = vsel %vm2464, %v2442, 0
      %v2469 = vsel %vm2464, %v2443, 0
      %v2472 = vsel %vm2464, %v2444, 0
      %v2475 = vsel %vm2464, %v2445, 0
      %v2478 = vsel %vm2464, %v2446, 0
      %v2481 = vsel %vm2464, %v2447, 0
      %v2484 = vsel %vm2464, %v2448, 0
      %v2487 = vsel %vm2464, %v2449, 0
      %v2490 = vsel %vm2464, %v2450, 0
      %v2493 = vsel %vm2464, %v2451, 0
      %v2496 = vsel %vm2464, %v2452, 0
      %v2499 = vsel %vm2464, %v2453, 0
      %v2502 = vsel %vm2464, %v2454, 0
      %v2505 = vsel %vm2464, %v2455, 0
      %v2508 = vsel %vm2464, %v2456, 0
      %v2511 = vsel %vm2464, %v2457, 0
      %2513 = vmatprep.subr.mxu0 0.0
      %2514 = vmatpush1.msra.mxu0 %v241
      %2515 = vmatprep.subr.mxu0 0.0
      %2516 = vmatpush1.msra.mxu0 0.0
      %2517 = vmatprep.subr.mxu0 0.0
      %2518 = vmatpush1.msra.mxu0 0.0
      %2519 = vmatprep.subr.mxu0 0.0
      %2520 = vmatpush1.msra.mxu0 0.0
      %2521 = vmatprep.subr.mxu0 0.0
      %2522 = vmatpush1.msra.mxu0 0.0
      %2523 = vmatprep.subr.mxu0 0.0
      %2524 = vmatpush1.msra.mxu0 0.0
      %2525 = vmatprep.subr.mxu0 0.0
      %2526 = vmatpush1.msra.mxu0 0.0
      %2527 = vmatprep.subr.mxu0 0.0
      %2528 = vmatpush1.msra.mxu0 0.0
      %2529 = vmatprep.subr.mxu0 0.0
      %2530 = vmatpush1.msra.mxu0 0.0
      %2531 = vmatprep.subr.mxu0 0.0
      %2532 = vmatpush1.msra.mxu0 0.0
      %2533 = vmatprep.subr.mxu0 0.0
      %2534 = vmatpush1.msra.mxu0 0.0
      %2535 = vmatprep.subr.mxu0 0.0
      %2536 = vmatpush1.msra.mxu0 0.0
      %2537 = vmatprep.subr.mxu0 0.0
      %2538 = vmatpush1.msra.mxu0 0.0
      %2539 = vmatprep.subr.mxu0 0.0
      %2540 = vmatpush1.msra.mxu0 0.0
      %2541 = vmatprep.subr.mxu0 0.0
      %2542 = vmatpush1.msra.mxu0 0.0
      %2543 = vmatprep.subr.mxu0 0.0
      %2544 = vmatpush1.msra.mxu0 0.0
      %2545 = vmatprep.subr.mxu0 0.0
      %2546 = vmatpush1.msra.mxu0 0.0
      %2547 = vmatprep.subr.mxu0 0.0
      %2548 = vmatpush1.msra.mxu0 0.0
      %2549 = vmatprep.subr.mxu0 0.0
      %2550 = vmatpush1.msra.mxu0 0.0
      %2551 = vmatprep.subr.mxu0 0.0
      %2552 = vmatpush1.msra.mxu0 0.0
      %2553 = vmatprep.subr.mxu0 0.0
      %2554 = vmatpush1.msra.mxu0 0.0
      %2555 = vmatprep.subr.mxu0 0.0
      %2556 = vmatpush1.msra.mxu0 0.0
      %2557 = vmatprep.subr.mxu0 0.0
      %2558 = vmatpush1.msra.mxu0 0.0
      %2559 = vmatprep.subr.mxu0 0.0
      %2560 = vmatpush1.msra.mxu0 0.0
      %2561 = vmatprep.subr.mxu0 0.0
      %2562 = vmatpush1.msra.mxu0 0.0
      %2563 = vmatprep.subr.mxu0 0.0
      %2564 = vmatpush1.msra.mxu0 0.0
      %2565 = vmatprep.subr.mxu0 0.0
      %2566 = vmatpush1.msra.mxu0 0.0
      %2567 = vmatprep.subr.mxu0 0.0
      %2568 = vmatpush1.msra.mxu0 0.0
      %2569 = vmatprep.subr.mxu0 0.0
      %2570 = vmatpush1.msra.mxu0 0.0
      %2571 = vmatprep.subr.mxu0 0.0
      %2572 = vmatpush1.msra.mxu0 0.0
      %2573 = vmatprep.subr.mxu0 0.0
      %2574 = vmatpush1.msra.mxu0 0.0
      %2575 = vmatprep.subr.mxu0 0.0
      %2576 = vmatpush1.msra.mxu0 0.0
      %2577 = vmatprep.mubr.f32.mxu0 0.0
      %2578 = vmatmul.mubr.f32.gmra.mrb[0].mxu0 %v2466
      %v2579 = vpop.f32.mrb[0].mxu0
      %v2580 = vadd.f32 %v2462, %v2579
      %v2581 = vpop.f32.mrb[0].mxu0
      %2582 = vmatprep.mubr.f32.mxu0 0.0
      %2583 = vmatmul.mubr.f32.gmra.mrb[0].mxu0 %v2469
      %v2584 = vpop.f32.mrb[0].mxu0
      %v2585 = vadd.f32 %v2462, %v2584
      %v2586 = vpop.f32.mrb[0].mxu0
      %2587 = vmatprep.mubr.f32.mxu0 0.0
      %2588 = vmatmul.mubr.f32.gmra.mrb[0].mxu0 %v2472
      %v2589 = vpop.f32.mrb[0].mxu0
      %v2590 = vadd.f32 %v2462, %v2589
      %v2591 = vpop.f32.mrb[0].mxu0
      %2592 = vmatprep.mubr.f32.mxu0 0.0
      %2593 = vmatmul.mubr.f32.gmra.mrb[0].mxu0 %v2475
      %v2594 = vpop.f32.mrb[0].mxu0
      %v2595 = vadd.f32 %v2462, %v2594
      %v2596 = vpop.f32.mrb[0].mxu0
      %2597 = vmatprep.mubr.f32.mxu0 0.0
      %2598 = vmatmul.mubr.f32.gmra.mrb[0].mxu0 %v2478
      %v2599 = vpop.f32.mrb[0].mxu0
      %v2600 = vadd.f32 %v2462, %v2599
      %v2601 = vpop.f32.mrb[0].mxu0
      %2602 = vmatprep.mubr.f32.mxu0 0.0
      %2603 = vmatmul.mubr.f32.gmra.mrb[0].mxu0 %v2481
      %v2604 = vpop.f32.mrb[0].mxu0
      %v2605 = vadd.f32 %v2462, %v2604
      %v2606 = vpop.f32.mrb[0].mxu0
      %2607 = vmatprep.mubr.f32.mxu0 0.0
      %2608 = vmatmul.mubr.f32.gmra.mrb[0].mxu0 %v2484
      %v2609 = vpop.f32.mrb[0].mxu0
      %v2610 = vadd.f32 %v2462, %v2609
      %v2611 = vpop.f32.mrb[0].mxu0
      %2612 = vmatprep.mubr.f32.mxu0 0.0
      %2613 = vmatmul.mubr.f32.gmra.mrb[0].mxu0 %v2487
      %v2614 = vpop.f32.mrb[0].mxu0
      %v2615 = vadd.f32 %v2462, %v2614
      %v2616 = vpop.f32.mrb[0].mxu0
      %2617 = vmatprep.mubr.f32.mxu0 0.0
      %2618 = vmatmul.mubr.f32.gmra.mrb[0].mxu0 %v2490
      %v2619 = vpop.f32.mrb[0].mxu0
      %v2620 = vadd.f32 %v2462, %v2619
      %v2621 = vpop.f32.mrb[0].mxu0
      %2622 = vmatprep.mubr.f32.mxu0 0.0
      %2623 = vmatmul.mubr.f32.gmra.mrb[0].mxu0 %v2493
      %v2624 = vpop.f32.mrb[0].mxu0
      %v2625 = vadd.f32 %v2462, %v2624
      %v2626 = vpop.f32.mrb[0].mxu0
      %2627 = vmatprep.mubr.f32.mxu0 0.0
      %2628 = vmatmul.mubr.f32.gmra.mrb[0].mxu0 %v2496
      %v2629 = vpop.f32.mrb[0].mxu0
      %v2630 = vadd.f32 %v2462, %v2629
      %v2631 = vpop.f32.mrb[0].mxu0
      %2632 = vmatprep.mubr.f32.mxu0 0.0
      %2633 = vmatmul.mubr.f32.gmra.mrb[0].mxu0 %v2499
      %v2634 = vpop.f32.mrb[0].mxu0
      %v2635 = vadd.f32 %v2462, %v2634
      %v2636 = vpop.f32.mrb[0].mxu0
      %2637 = vmatprep.mubr.f32.mxu0 0.0
      %2638 = vmatmul.mubr.f32.gmra.mrb[0].mxu0 %v2502
      %v2639 = vpop.f32.mrb[0].mxu0
      %v2640 = vadd.f32 %v2462, %v2639
      %v2641 = vpop.f32.mrb[0].mxu0
      %2642 = vmatprep.mubr.f32.mxu0 0.0
      %2643 = vmatmul.mubr.f32.gmra.mrb[0].mxu0 %v2505
      %v2644 = vpop.f32.mrb[0].mxu0
      %v2645 = vadd.f32 %v2462, %v2644
      %v2646 = vpop.f32.mrb[0].mxu0
      %2647 = vmatprep.mubr.f32.mxu0 0.0
      %2648 = vmatmul.mubr.f32.gmra.mrb[0].mxu0 %v2508
      %v2649 = vpop.f32.mrb[0].mxu0
      %v2650 = vadd.f32 %v2462, %v2649
      %v2651 = vpop.f32.mrb[0].mxu0
      %2652 = vmatprep.mubr.f32.mxu0 0.0
      %2653 = vmatmul.mubr.f32.gmra.mrb[0].mxu0 %v2511
      %v2654 = vpop.f32.mrb[0].mxu0
      %v2655 = vadd.f32 %v2462, %v2654
      %v2656 = vpop.f32.mrb[0].mxu0
      %2657 = vdwg.mxu0
      %v2658 = vmax.f32 %v2580, 0.0
      %v2659 = vmax.f32 %v2585, 0.0
      %v2660 = vmax.f32 %v2590, 0.0
      %v2661 = vmax.f32 %v2595, 0.0
      %v2662 = vmax.f32 %v2600, 0.0
      %v2663 = vmax.f32 %v2605, 0.0
      %v2664 = vmax.f32 %v2610, 0.0
      %v2665 = vmax.f32 %v2615, 0.0
      %v2666 = vmax.f32 %v2620, 0.0
      %v2667 = vmax.f32 %v2625, 0.0
      %v2668 = vmax.f32 %v2630, 0.0
      %v2669 = vmax.f32 %v2635, 0.0
      %v2670 = vmax.f32 %v2640, 0.0
      %v2671 = vmax.f32 %v2645, 0.0
      %v2672 = vmax.f32 %v2650, 0.0
      %v2673 = vmax.f32 %v2655, 0.0
      %vm2674 = vcmask 261120
      %v2676 = vsel %vm2674, %v2658, 0
      %v2679 = vsel %vm2674, %v2659, 0
      %v2682 = vsel %vm2674, %v2660, 0
      %v2685 = vsel %vm2674, %v2661, 0
      %v2688 = vsel %vm2674, %v2662, 0
      %v2691 = vsel %vm2674, %v2663, 0
      %v2694 = vsel %vm2674, %v2664, 0
      %v2697 = vsel %vm2674, %v2665, 0
      %v2700 = vsel %vm2674, %v2666, 0
      %v2703 = vsel %vm2674, %v2667, 0
      %v2706 = vsel %vm2674, %v2668, 0
      %v2709 = vsel %vm2674, %v2669, 0
      %v2712 = vsel %vm2674, %v2670, 0
      %v2715 = vsel %vm2674, %v2671, 0
      %v2718 = vsel %vm2674, %v2672, 0
      %v2721 = vsel %vm2674, %v2673, 0
      %2723 = vmatprep.subr.mxu0 0.0
      %2724 = vmatpush1.msra.mxu0 %v243
      %2725 = vmatprep.subr.mxu0 0.0
      %2726 = vmatpush1.msra.mxu0 %v244
      %2727 = vmatprep.subr.mxu0 0.0
      %2728 = vmatpush1.msra.mxu0 %v245
      %2729 = vmatprep.subr.mxu0 0.0
      %2730 = vmatpush1.msra.mxu0 %v246
      %2731 = vmatprep.subr.mxu0 0.0
      %2732 = vmatpush1.msra.mxu0 0.0
      %2733 = vmatprep.subr.mxu0 0.0
      %2734 = vmatpush1.msra.mxu0 0.0
      %2735 = vmatprep.subr.mxu0 0.0
      %2736 = vmatpush1.msra.mxu0 0.0
      %2737 = vmatprep.subr.mxu0 0.0
      %2738 = vmatpush1.msra.mxu0 0.0
      %2739 = vmatprep.subr.mxu0 0.0
      %2740 = vmatpush1.msra.mxu0 0.0
      %2741 = vmatprep.subr.mxu0 0.0
      %2742 = vmatpush1.msra.mxu0 0.0
      %2743 = vmatprep.subr.mxu0 0.0
      %2744 = vmatpush1.msra.mxu0 0.0
      %2745 = vmatprep.subr.mxu0 0.0
      %2746 = vmatpush1.msra.mxu0 0.0
      %2747 = vmatprep.subr.mxu0 0.0
      %2748 = vmatpush1.msra.mxu0 0.0
      %2749 = vmatprep.subr.mxu0 0.0
      %2750 = vmatpush1.msra.mxu0 0.0
      %2751 = vmatprep.subr.mxu0 0.0
      %2752 = vmatpush1.msra.mxu0 0.0
      %2753 = vmatprep.subr.mxu0 0.0
      %2754 = vmatpush1.msra.mxu0 0.0
      %2755 = vmatprep.subr.mxu0 0.0
      %2756 = vmatpush1.msra.mxu0 0.0
      %2757 = vmatprep.subr.mxu0 0.0
      %2758 = vmatpush1.msra.mxu0 0.0
      %2759 = vmatprep.subr.mxu0 0.0
      %2760 = vmatpush1.msra.mxu0 0.0
      %2761 = vmatprep.subr.mxu0 0.0
      %2762 = vmatpush1.msra.mxu0 0.0
      %2763 = vmatprep.subr.mxu0 0.0
      %2764 = vmatpush1.msra.mxu0 0.0
      %2765 = vmatprep.subr.mxu0 0.0
      %2766 = vmatpush1.msra.mxu0 0.0
      %2767 = vmatprep.subr.mxu0 0.0
      %2768 = vmatpush1.msra.mxu0 0.0
      %2769 = vmatprep.subr.mxu0 0.0
      %2770 = vmatpush1.msra.mxu0 0.0
      %2771 = vmatprep.subr.mxu0 0.0
      %2772 = vmatpush1.msra.mxu0 0.0
      %2773 = vmatprep.subr.mxu0 0.0
      %2774 = vmatpush1.msra.mxu0 0.0
      %2775 = vmatprep.subr.mxu0 0.0
      %2776 = vmatpush1.msra.mxu0 0.0
      %2777 = vmatprep.subr.mxu0 0.0
      %2778 = vmatpush1.msra.mxu0 0.0
      %2779 = vmatprep.subr.mxu0 0.0
      %2780 = vmatpush1.msra.mxu0 0.0
      %2781 = vmatprep.subr.mxu0 0.0
      %2782 = vmatpush1.msra.mxu0 0.0
      %2783 = vmatprep.subr.mxu0 0.0
      %2784 = vmatpush1.msra.mxu0 0.0
      %2785 = vmatprep.subr.mxu0 0.0
      %2786 = vmatpush1.msra.mxu0 0.0
      %2787 = vmatprep.mubr.f32.mxu0 0.0
      %2788 = vmatmul.mubr.f32.gmra.mrb[0].mxu0 %v2676
      %v2789 = vpop.f32.mrb[0].mxu0
      %v2790 = vadd.f32 0.0, %v2789
      %v2791 = vpop.f32.mrb[0].mxu0
      %2792 = vmatprep.mubr.f32.mxu0 0.0
      %2793 = vmatmul.mubr.f32.gmra.mrb[0].mxu0 %v2679
      %v2794 = vpop.f32.mrb[0].mxu0
      %v2795 = vadd.f32 0.0, %v2794
      %v2796 = vpop.f32.mrb[0].mxu0
      %2797 = vmatprep.mubr.f32.mxu0 0.0
      %2798 = vmatmul.mubr.f32.gmra.mrb[0].mxu0 %v2682
      %v2799 = vpop.f32.mrb[0].mxu0
      %v2800 = vadd.f32 0.0, %v2799
      %v2801 = vpop.f32.mrb[0].mxu0
      %2802 = vmatprep.mubr.f32.mxu0 0.0
      %2803 = vmatmul.mubr.f32.gmra.mrb[0].mxu0 %v2685
      %v2804 = vpop.f32.mrb[0].mxu0
      %v2805 = vadd.f32 0.0, %v2804
      %v2806 = vpop.f32.mrb[0].mxu0
      %2807 = vmatprep.mubr.f32.mxu0 0.0
      %2808 = vmatmul.mubr.f32.gmra.mrb[0].mxu0 %v2688
      %v2809 = vpop.f32.mrb[0].mxu0
      %v2810 = vadd.f32 0.0, %v2809
      %v2811 = vpop.f32.mrb[0].mxu0
      %2812 = vmatprep.mubr.f32.mxu0 0.0
      %2813 = vmatmul.mubr.f32.gmra.mrb[0].mxu0 %v2691
      %v2814 = vpop.f32.mrb[0].mxu0
      %v2815 = vadd.f32 0.0, %v2814
      %v2816 = vpop.f32.mrb[0].mxu0
      %2817 = vmatprep.mubr.f32.mxu0 0.0
      %2818 = vmatmul.mubr.f32.gmra.mrb[0].mxu0 %v2694
      %v2819 = vpop.f32.mrb[0].mxu0
      %v2820 = vadd.f32 0.0, %v2819
      %v2821 = vpop.f32.mrb[0].mxu0
      %2822 = vmatprep.mubr.f32.mxu0 0.0
      %2823 = vmatmul.mubr.f32.gmra.mrb[0].mxu0 %v2697
      %v2824 = vpop.f32.mrb[0].mxu0
      %v2825 = vadd.f32 0.0, %v2824
      %v2826 = vpop.f32.mrb[0].mxu0
      %2827 = vmatprep.mubr.f32.mxu0 0.0
      %2828 = vmatmul.mubr.f32.gmra.mrb[0].mxu0 %v2700
      %v2829 = vpop.f32.mrb[0].mxu0
      %v2830 = vadd.f32 0.0, %v2829
      %v2831 = vpop.f32.mrb[0].mxu0
      %2832 = vmatprep.mubr.f32.mxu0 0.0
      %2833 = vmatmul.mubr.f32.gmra.mrb[0].mxu0 %v2703
      %v2834 = vpop.f32.mrb[0].mxu0
      %v2835 = vadd.f32 0.0, %v2834
      %v2836 = vpop.f32.mrb[0].mxu0
      %2837 = vmatprep.mubr.f32.mxu0 0.0
      %2838 = vmatmul.mubr.f32.gmra.mrb[0].mxu0 %v2706
      %v2839 = vpop.f32.mrb[0].mxu0
      %v2840 = vadd.f32 0.0, %v2839
      %v2841 = vpop.f32.mrb[0].mxu0
      %2842 = vmatprep.mubr.f32.mxu0 0.0
      %2843 = vmatmul.mubr.f32.gmra.mrb[0].mxu0 %v2709
      %v2844 = vpop.f32.mrb[0].mxu0
      %v2845 = vadd.f32 0.0, %v2844
      %v2846 = vpop.f32.mrb[0].mxu0
      %2847 = vmatprep.mubr.f32.mxu0 0.0
      %2848 = vmatmul.mubr.f32.gmra.mrb[0].mxu0 %v2712
      %v2849 = vpop.f32.mrb[0].mxu0
      %v2850 = vadd.f32 0.0, %v2849
      %v2851 = vpop.f32.mrb[0].mxu0
      %2852 = vmatprep.mubr.f32.mxu0 0.0
      %2853 = vmatmul.mubr.f32.gmra.mrb[0].mxu0 %v2715
      %v2854 = vpop.f32.mrb[0].mxu0
      %v2855 = vadd.f32 0.0, %v2854
      %v2856 = vpop.f32.mrb[0].mxu0
      %2857 = vmatprep.mubr.f32.mxu0 0.0
      %2858 = vmatmul.mubr.f32.gmra.mrb[0].mxu0 %v2718
      %v2859 = vpop.f32.mrb[0].mxu0
      %v2860 = vadd.f32 0.0, %v2859
      %v2861 = vpop.f32.mrb[0].mxu0
      %2862 = vmatprep.mubr.f32.mxu0 0.0
      %2863 = vmatmul.mubr.f32.gmra.mrb[0].mxu0 %v2721
      %v2864 = vpop.f32.mrb[0].mxu0
      %v2865 = vadd.f32 0.0, %v2864
      %v2866 = vpop.f32.mrb[0].mxu0
      %2867 = vdwg.mxu0
      %2868 = vmatprep.subr.mxu0 0.0
      %2869 = vmatpush1.msra.mxu0 %v2790
      %2870 = vmatprep.subr.mxu0 0.0
      %2871 = vmatpush1.msra.mxu0 %v2795
      %2872 = vmatprep.subr.mxu0 0.0
      %2873 = vmatpush1.msra.mxu0 %v2800
      %2874 = vmatprep.subr.mxu0 0.0
      %2875 = vmatpush1.msra.mxu0 %v2805
      %2876 = vmatprep.subr.mxu0 0.0
      %2877 = vmatpush1.msra.mxu0 %v2810
      %2878 = vmatprep.subr.mxu0 0.0
      %2879 = vmatpush1.msra.mxu0 %v2815
      %2880 = vmatprep.subr.mxu0 0.0
      %2881 = vmatpush1.msra.mxu0 %v2820
      %2882 = vmatprep.subr.mxu0 0.0
      %2883 = vmatpush1.msra.mxu0 %v2825
      %2884 = vmatprep.subr.mxu0 0.0
      %2885 = vmatpush1.msra.mxu0 %v2830
      %2886 = vmatprep.subr.mxu0 0.0
      %2887 = vmatpush1.msra.mxu0 %v2835
      %2888 = vmatprep.subr.mxu0 0.0
      %2889 = vmatpush1.msra.mxu0 %v2840
      %2890 = vmatprep.subr.mxu0 0.0
      %2891 = vmatpush1.msra.mxu0 %v2845
      %2892 = vmatprep.subr.mxu0 0.0
      %2893 = vmatpush1.msra.mxu0 %v2850
      %2894 = vmatprep.subr.mxu0 0.0
      %2895 = vmatpush1.msra.mxu0 %v2855
      %2896 = vmatprep.subr.mxu0 0.0
      %2897 = vmatpush1.msra.mxu0 %v2860
      %2898 = vmatprep.subr.mxu0 0.0
      %2899 = vmatpush1.msra.mxu0 %v2865
      %2900 = vmatprep.subr.mxu0 0.0
      %2901 = vmatpush1.msra.mxu0 0.0
      %2902 = vmatprep.subr.mxu0 0.0
      %2903 = vmatpush1.msra.mxu0 0.0
      %2904 = vmatprep.subr.mxu0 0.0
      %2905 = vmatpush1.msra.mxu0 0.0
      %2906 = vmatprep.subr.mxu0 0.0
      %2907 = vmatpush1.msra.mxu0 0.0
      %2908 = vmatprep.subr.mxu0 0.0
      %2909 = vmatpush1.msra.mxu0 0.0
      %2910 = vmatprep.subr.mxu0 0.0
      %2911 = vmatpush1.msra.mxu0 0.0
      %2912 = vmatprep.subr.mxu0 0.0
      %2913 = vmatpush1.msra.mxu0 0.0
      %2914 = vmatprep.subr.mxu0 0.0
      %2915 = vmatpush1.msra.mxu0 0.0
      %2916 = vmatprep.subr.mxu0 0.0
      %2917 = vmatpush1.msra.mxu0 0.0
      %2918 = vmatprep.subr.mxu0 0.0
      %2919 = vmatpush1.msra.mxu0 0.0
      %2920 = vmatprep.subr.mxu0 0.0
      %2921 = vmatpush1.msra.mxu0 0.0
      %2922 = vmatprep.subr.mxu0 0.0
      %2923 = vmatpush1.msra.mxu0 0.0
      %2924 = vmatprep.subr.mxu0 0.0
      %2925 = vmatpush1.msra.mxu0 0.0
      %2926 = vmatprep.subr.mxu0 0.0
      %2927 = vmatpush1.msra.mxu0 0.0
      %2928 = vmatprep.subr.mxu0 0.0
      %2929 = vmatpush1.msra.mxu0 0.0
      %2930 = vmatprep.subr.mxu0 0.0
      %2931 = vmatpush1.msra.mxu0 0.0
      %2932 = vmatprep.mubr.f32.mxu0 0.0
      %2933 = vmatmul.mubr.f32.gmra.mrb[0].mxu0 %v2281
      %v2934 = vpop.f32.mrb[0].mxu0
      %v2935 = vadd.f32 0.0, %v2934
      %v2936 = vpop.f32.mrb[0].mxu0
      %2937 = vmatprep.mubr.f32.mxu0 0.0
      %2938 = vmatmul.mubr.f32.gmra.mrb[0].mxu0 %v2282
      %v2939 = vpop.f32.mrb[0].mxu0
      %v2940 = vadd.f32 0.0, %v2939
      %v2941 = vpop.f32.mrb[0].mxu0
      %2942 = vmatprep.mubr.f32.mxu0 0.0
      %2943 = vmatmul.mubr.f32.gmra.mrb[0].mxu0 %v2283
      %v2944 = vpop.f32.mrb[0].mxu0
      %v2945 = vadd.f32 0.0, %v2944
      %v2946 = vpop.f32.mrb[0].mxu0
      %2947 = vmatprep.mubr.f32.mxu0 0.0
      %2948 = vmatmul.mubr.f32.gmra.mrb[0].mxu0 %v2284
      %v2949 = vpop.f32.mrb[0].mxu0
      %v2950 = vadd.f32 0.0, %v2949
      %v2951 = vpop.f32.mrb[0].mxu0
      %2952 = vmatprep.mubr.f32.mxu0 0.0
      %2953 = vmatmul.mubr.f32.gmra.mrb[0].mxu0 %v2285
      %v2954 = vpop.f32.mrb[0].mxu0
      %v2955 = vadd.f32 0.0, %v2954
      %v2956 = vpop.f32.mrb[0].mxu0
      %2957 = vmatprep.mubr.f32.mxu0 0.0
      %2958 = vmatmul.mubr.f32.gmra.mrb[0].mxu0 %v2286
      %v2959 = vpop.f32.mrb[0].mxu0
      %v2960 = vadd.f32 0.0, %v2959
      %v2961 = vpop.f32.mrb[0].mxu0
      %2962 = vmatprep.mubr.f32.mxu0 0.0
      %2963 = vmatmul.mubr.f32.gmra.mrb[0].mxu0 %v2287
      %v2964 = vpop.f32.mrb[0].mxu0
      %v2965 = vadd.f32 0.0, %v2964
      %v2966 = vpop.f32.mrb[0].mxu0
      %2967 = vmatprep.mubr.f32.mxu0 0.0
      %2968 = vmatmul.mubr.f32.gmra.mrb[0].mxu0 %v2288
      %v2969 = vpop.f32.mrb[0].mxu0
      %v2970 = vadd.f32 0.0, %v2969
      %v2971 = vpop.f32.mrb[0].mxu0
      %2972 = vmatprep.mubr.f32.mxu0 0.0
      %2973 = vmatmul.mubr.f32.gmra.mrb[0].mxu0 %v2289
      %v2974 = vpop.f32.mrb[0].mxu0
      %v2975 = vadd.f32 0.0, %v2974
      %v2976 = vpop.f32.mrb[0].mxu0
      %2977 = vmatprep.mubr.f32.mxu0 0.0
      %2978 = vmatmul.mubr.f32.gmra.mrb[0].mxu0 %v2290
      %v2979 = vpop.f32.mrb[0].mxu0
      %v2980 = vadd.f32 0.0, %v2979
      %v2981 = vpop.f32.mrb[0].mxu0
      %2982 = vmatprep.mubr.f32.mxu0 0.0
      %2983 = vmatmul.mubr.f32.gmra.mrb[0].mxu0 %v2291
      %v2984 = vpop.f32.mrb[0].mxu0
      %v2985 = vadd.f32 0.0, %v2984
      %v2986 = vpop.f32.mrb[0].mxu0
      %2987 = vmatprep.mubr.f32.mxu0 0.0
      %2988 = vmatmul.mubr.f32.gmra.mrb[0].mxu0 %v2292
      %v2989 = vpop.f32.mrb[0].mxu0
      %v2990 = vadd.f32 0.0, %v2989
      %v2991 = vpop.f32.mrb[0].mxu0
      %2992 = vmatprep.mubr.f32.mxu0 0.0
      %2993 = vmatmul.mubr.f32.gmra.mrb[0].mxu0 %v2293
      %v2994 = vpop.f32.mrb[0].mxu0
      %v2995 = vadd.f32 0.0, %v2994
      %v2996 = vpop.f32.mrb[0].mxu0
      %2997 = vmatprep.mubr.f32.mxu0 0.0
      %2998 = vmatmul.mubr.f32.gmra.mrb[0].mxu0 %v2294
      %v2999 = vpop.f32.mrb[0].mxu0
      %v3000 = vadd.f32 0.0, %v2999
      %v3001 = vpop.f32.mrb[0].mxu0
      %3002 = vmatprep.mubr.f32.mxu0 0.0
      %3003 = vmatmul.mubr.f32.gmra.mrb[0].mxu0 %v2295
      %v3004 = vpop.f32.mrb[0].mxu0
      %v3005 = vadd.f32 0.0, %v3004
      %v3006 = vpop.f32.mrb[0].mxu0
      %3007 = vmatprep.mubr.f32.mxu0 0.0
      %3008 = vmatmul.mubr.f32.gmra.mrb[0].mxu0 %v2296
      %v3009 = vpop.f32.mrb[0].mxu0
      %v3010 = vadd.f32 0.0, %v3009
      %v3011 = vpop.f32.mrb[0].mxu0
      %3012 = vdwg.mxu0
      %v3013 = vmul.f32 %v2935, 0.2
      %v3014 = vmul.f32 %v2940, 0.2
      %v3015 = vmul.f32 %v2945, 0.2
      %v3016 = vmul.f32 %v2950, 0.2
      %v3017 = vmul.f32 %v2955, 0.2
      %v3018 = vmul.f32 %v2960, 0.2
      %v3019 = vmul.f32 %v2965, 0.2
      %v3020 = vmul.f32 %v2970, 0.2
      %v3021 = vmul.f32 %v2975, 0.2
      %v3022 = vmul.f32 %v2980, 0.2
      %v3023 = vmul.f32 %v2985, 0.2
      %v3024 = vmul.f32 %v2990, 0.2
      %v3025 = vmul.f32 %v2995, 0.2
      %v3026 = vmul.f32 %v3000, 0.2
      %v3027 = vmul.f32 %v3005, 0.2
      %v3028 = vmul.f32 %v3010, 0.2
      %v3030 = vlaneseq
      %v3031 = vshrl.u32 %v3030, 7
      %v3032 = vsub.s32 0, %v3031
      %v3033 = vrot.slane %v247, %v3032
      %v3035 = vadd.f32 %v3013, %v3033
      %v3036 = vadd.f32 %v3014, %v3033
      %v3037 = vadd.f32 %v3015, %v3033
      %v3038 = vadd.f32 %v3016, %v3033
      %v3039 = vadd.f32 %v3017, %v3033
      %v3040 = vadd.f32 %v3018, %v3033
      %v3041 = vadd.f32 %v3019, %v3033
      %v3042 = vadd.f32 %v3020, %v3033
      %v3043 = vadd.f32 %v3021, %v3033
      %v3044 = vadd.f32 %v3022, %v3033
      %v3045 = vadd.f32 %v3023, %v3033
      %v3046 = vadd.f32 %v3024, %v3033
      %v3047 = vadd.f32 %v3025, %v3033
      %v3048 = vadd.f32 %v3026, %v3033
      %v3049 = vadd.f32 %v3027, %v3033
      %v3050 = vadd.f32 %v3028, %v3033
      %v3051 = vmul.f32 %v3035, 0.001
      %v3052 = vmul.f32 %v3036, 0.001
      %v3053 = vmul.f32 %v3037, 0.001
      %v3054 = vmul.f32 %v3038, 0.001
      %v3055 = vmul.f32 %v3039, 0.001
      %v3056 = vmul.f32 %v3040, 0.001
      %v3057 = vmul.f32 %v3041, 0.001
      %v3058 = vmul.f32 %v3042, 0.001
      %v3059 = vmul.f32 %v3043, 0.001
      %v3060 = vmul.f32 %v3044, 0.001
      %v3061 = vmul.f32 %v3045, 0.001
      %v3062 = vmul.f32 %v3046, 0.001
      %v3063 = vmul.f32 %v3047, 0.001
      %v3064 = vmul.f32 %v3048, 0.001
      %v3065 = vmul.f32 %v3049, 0.001
      %v3066 = vmul.f32 %v3050, 0.001
      %v3067 = vadd.f32 %v225, %v3051
      %v3068 = vadd.f32 %v226, %v3052
      %v3069 = vadd.f32 %v227, %v3053
      %v3070 = vadd.f32 %v228, %v3054
      %v3071 = vadd.f32 %v229, %v3055
      %v3072 = vadd.f32 %v230, %v3056
      %v3073 = vadd.f32 %v231, %v3057
      %v3074 = vadd.f32 %v232, %v3058
      %v3075 = vadd.f32 %v233, %v3059
      %v3076 = vadd.f32 %v234, %v3060
      %v3077 = vadd.f32 %v235, %v3061
      %v3078 = vadd.f32 %v236, %v3062
      %v3079 = vadd.f32 %v237, %v3063
      %v3080 = vadd.f32 %v238, %v3064
      %v3081 = vadd.f32 %v239, %v3065
      %v3082 = vadd.f32 %v240, %v3066
      %v3084 = vsel %vm250, %v3067, 0
      %v3087 = vsel %vm250, %v3068, 0
      %v3090 = vsel %vm250, %v3069, 0
      %v3093 = vsel %vm250, %v3070, 0
      %v3096 = vsel %vm250, %v3071, 0
      %v3099 = vsel %vm250, %v3072, 0
      %v3102 = vsel %vm250, %v3073, 0
      %v3105 = vsel %vm250, %v3074, 0
      %v3108 = vsel %vm250, %v3075, 0
      %v3111 = vsel %vm250, %v3076, 0
      %v3114 = vsel %vm250, %v3077, 0
      %v3117 = vsel %vm250, %v3078, 0
      %v3120 = vsel %vm250, %v3079, 0
      %v3123 = vsel %vm250, %v3080, 0
      %v3126 = vsel %vm250, %v3081, 0
      %v3129 = vsel %vm250, %v3082, 0
      %3131 = vmatprep.subr.mxu0 0.0
      %3132 = vmatpush1.xpose.msra.mxu0 %v3084
      %3133 = vmatprep.subr.mxu0 0.0
      %3134 = vmatpush1.xpose.msra.mxu0 %v3087
      %3135 = vmatprep.subr.mxu0 0.0
      %3136 = vmatpush1.xpose.msra.mxu0 %v3090
      %3137 = vmatprep.subr.mxu0 0.0
      %3138 = vmatpush1.xpose.msra.mxu0 %v3093
      %3139 = vmatprep.subr.mxu0 0.0
      %3140 = vmatpush1.xpose.msra.mxu0 %v3096
      %3141 = vmatprep.subr.mxu0 0.0
      %3142 = vmatpush1.xpose.msra.mxu0 %v3099
      %3143 = vmatprep.subr.mxu0 0.0
      %3144 = vmatpush1.xpose.msra.mxu0 %v3102
      %3145 = vmatprep.subr.mxu0 0.0
      %3146 = vmatpush1.xpose.msra.mxu0 %v3105
      %3147 = vmatprep.subr.mxu0 0.0
      %3148 = vmatpush1.xpose.msra.mxu0 %v3108
      %3149 = vmatprep.subr.mxu0 0.0
      %3150 = vmatpush1.xpose.msra.mxu0 %v3111
      %3151 = vmatprep.subr.mxu0 0.0
      %3152 = vmatpush1.xpose.msra.mxu0 %v3114
      %3153 = vmatprep.subr.mxu0 0.0
      %3154 = vmatpush1.xpose.msra.mxu0 %v3117
      %3155 = vmatprep.subr.mxu0 0.0
      %3156 = vmatpush1.xpose.msra.mxu0 %v3120
      %3157 = vmatprep.subr.mxu0 0.0
      %3158 = vmatpush1.xpose.msra.mxu0 %v3123
      %3159 = vmatprep.subr.mxu0 0.0
      %3160 = vmatpush1.xpose.msra.mxu0 %v3126
      %3161 = vmatprep.subr.mxu0 0.0
      %3162 = vmatpush1.xpose.msra.mxu0 %v3129
      %3163 = vmatprep.subr.mxu0 0.0
      %3164 = vmatpush1.xpose.msra.mxu0 0.0
      %3165 = vmatprep.subr.mxu0 0.0
      %3166 = vmatpush1.xpose.msra.mxu0 0.0
      %3167 = vmatprep.subr.mxu0 0.0
      %3168 = vmatpush1.xpose.msra.mxu0 0.0
      %3169 = vmatprep.subr.mxu0 0.0
      %3170 = vmatpush1.xpose.msra.mxu0 0.0
      %3171 = vmatprep.subr.mxu0 0.0
      %3172 = vmatpush1.xpose.msra.mxu0 0.0
      %3173 = vmatprep.subr.mxu0 0.0
      %3174 = vmatpush1.xpose.msra.mxu0 0.0
      %3175 = vmatprep.subr.mxu0 0.0
      %3176 = vmatpush1.xpose.msra.mxu0 0.0
      %3177 = vmatprep.subr.mxu0 0.0
      %3178 = vmatpush1.xpose.msra.mxu0 0.0
      %3179 = vmatprep.subr.mxu0 0.0
      %3180 = vmatpush1.xpose.msra.mxu0 0.0
      %3181 = vmatprep.subr.mxu0 0.0
      %3182 = vmatpush1.xpose.msra.mxu0 0.0
      %3183 = vmatprep.subr.mxu0 0.0
      %3184 = vmatpush1.xpose.msra.mxu0 0.0
      %3185 = vmatprep.subr.mxu0 0.0
      %3186 = vmatpush1.xpose.msra.mxu0 0.0
      %3187 = vmatprep.subr.mxu0 0.0
      %3188 = vmatpush1.xpose.msra.mxu0 0.0
      %3189 = vmatprep.subr.mxu0 0.0
      %3190 = vmatpush1.xpose.msra.mxu0 0.0
      %3191 = vmatprep.subr.mxu0 0.0
      %3192 = vmatpush1.xpose.msra.mxu0 0.0
      %3193 = vmatprep.subr.mxu0 0.0
      %3194 = vmatpush1.xpose.msra.mxu0 0.0
      %3195 = vmatprep.mubr.f32.mxu0 0.0
      %3196 = vmatmul.mubr.f32.gmra.mrb[0].mxu0 %v3084
      %v3197 = vpop.f32.mrb[0].mxu0
      %v3198 = vadd.f32 0.0, %v3197
      %v3199 = vpop.f32.mrb[0].mxu0
      %3200 = vmatprep.mubr.f32.mxu0 0.0
      %3201 = vmatmul.mubr.f32.gmra.mrb[0].mxu0 %v3087
      %v3202 = vpop.f32.mrb[0].mxu0
      %v3203 = vadd.f32 0.0, %v3202
      %v3204 = vpop.f32.mrb[0].mxu0
      %3205 = vmatprep.mubr.f32.mxu0 0.0
      %3206 = vmatmul.mubr.f32.gmra.mrb[0].mxu0 %v3090
      %v3207 = vpop.f32.mrb[0].mxu0
      %v3208 = vadd.f32 0.0, %v3207
      %v3209 = vpop.f32.mrb[0].mxu0
      %3210 = vmatprep.mubr.f32.mxu0 0.0
      %3211 = vmatmul.mubr.f32.gmra.mrb[0].mxu0 %v3093
      %v3212 = vpop.f32.mrb[0].mxu0
      %v3213 = vadd.f32 0.0, %v3212
      %v3214 = vpop.f32.mrb[0].mxu0
      %3215 = vmatprep.mubr.f32.mxu0 0.0
      %3216 = vmatmul.mubr.f32.gmra.mrb[0].mxu0 %v3096
      %v3217 = vpop.f32.mrb[0].mxu0
      %v3218 = vadd.f32 0.0, %v3217
      %v3219 = vpop.f32.mrb[0].mxu0
      %3220 = vmatprep.mubr.f32.mxu0 0.0
      %3221 = vmatmul.mubr.f32.gmra.mrb[0].mxu0 %v3099
      %v3222 = vpop.f32.mrb[0].mxu0
      %v3223 = vadd.f32 0.0, %v3222
      %v3224 = vpop.f32.mrb[0].mxu0
      %3225 = vmatprep.mubr.f32.mxu0 0.0
      %3226 = vmatmul.mubr.f32.gmra.mrb[0].mxu0 %v3102
      %v3227 = vpop.f32.mrb[0].mxu0
      %v3228 = vadd.f32 0.0, %v3227
      %v3229 = vpop.f32.mrb[0].mxu0
      %3230 = vmatprep.mubr.f32.mxu0 0.0
      %3231 = vmatmul.mubr.f32.gmra.mrb[0].mxu0 %v3105
      %v3232 = vpop.f32.mrb[0].mxu0
      %v3233 = vadd.f32 0.0, %v3232
      %v3234 = vpop.f32.mrb[0].mxu0
      %3235 = vmatprep.mubr.f32.mxu0 0.0
      %3236 = vmatmul.mubr.f32.gmra.mrb[0].mxu0 %v3108
      %v3237 = vpop.f32.mrb[0].mxu0
      %v3238 = vadd.f32 0.0, %v3237
      %v3239 = vpop.f32.mrb[0].mxu0
      %3240 = vmatprep.mubr.f32.mxu0 0.0
      %3241 = vmatmul.mubr.f32.gmra.mrb[0].mxu0 %v3111
      %v3242 = vpop.f32.mrb[0].mxu0
      %v3243 = vadd.f32 0.0, %v3242
      %v3244 = vpop.f32.mrb[0].mxu0
      %3245 = vmatprep.mubr.f32.mxu0 0.0
      %3246 = vmatmul.mubr.f32.gmra.mrb[0].mxu0 %v3114
      %v3247 = vpop.f32.mrb[0].mxu0
      %v3248 = vadd.f32 0.0, %v3247
      %v3249 = vpop.f32.mrb[0].mxu0
      %3250 = vmatprep.mubr.f32.mxu0 0.0
      %3251 = vmatmul.mubr.f32.gmra.mrb[0].mxu0 %v3117
      %v3252 = vpop.f32.mrb[0].mxu0
      %v3253 = vadd.f32 0.0, %v3252
      %v3254 = vpop.f32.mrb[0].mxu0
      %3255 = vmatprep.mubr.f32.mxu0 0.0
      %3256 = vmatmul.mubr.f32.gmra.mrb[0].mxu0 %v3120
      %v3257 = vpop.f32.mrb[0].mxu0
      %v3258 = vadd.f32 0.0, %v3257
      %v3259 = vpop.f32.mrb[0].mxu0
      %3260 = vmatprep.mubr.f32.mxu0 0.0
      %3261 = vmatmul.mubr.f32.gmra.mrb[0].mxu0 %v3123
      %v3262 = vpop.f32.mrb[0].mxu0
      %v3263 = vadd.f32 0.0, %v3262
      %v3264 = vpop.f32.mrb[0].mxu0
      %3265 = vmatprep.mubr.f32.mxu0 0.0
      %3266 = vmatmul.mubr.f32.gmra.mrb[0].mxu0 %v3126
      %v3267 = vpop.f32.mrb[0].mxu0
      %v3268 = vadd.f32 0.0, %v3267
      %v3269 = vpop.f32.mrb[0].mxu0
      %3270 = vmatprep.mubr.f32.mxu0 0.0
      %3271 = vmatmul.mubr.f32.gmra.mrb[0].mxu0 %v3129
      %v3272 = vpop.f32.mrb[0].mxu0
      %v3273 = vadd.f32 0.0, %v3272
      %v3274 = vpop.f32.mrb[0].mxu0
      %3275 = vdwg.mxu0
      %v3276 = vmul.f32 %v3067, %v3067
      %v3277 = vmul.f32 %v3068, %v3068
      %v3278 = vmul.f32 %v3069, %v3069
      %v3279 = vmul.f32 %v3070, %v3070
      %v3280 = vmul.f32 %v3071, %v3071
      %v3281 = vmul.f32 %v3072, %v3072
      %v3282 = vmul.f32 %v3073, %v3073
      %v3283 = vmul.f32 %v3074, %v3074
      %v3284 = vmul.f32 %v3075, %v3075
      %v3285 = vmul.f32 %v3076, %v3076
      %v3286 = vmul.f32 %v3077, %v3077
      %v3287 = vmul.f32 %v3078, %v3078
      %v3288 = vmul.f32 %v3079, %v3079
      %v3289 = vmul.f32 %v3080, %v3080
      %v3290 = vmul.f32 %v3081, %v3081
      %v3291 = vmul.f32 %v3082, %v3082
      %v3293 = vsel %vm250, %v3276, 0
      %v3296 = vsel %vm250, %v3277, 0
      %v3299 = vsel %vm250, %v3278, 0
      %v3302 = vsel %vm250, %v3279, 0
      %v3305 = vsel %vm250, %v3280, 0
      %v3308 = vsel %vm250, %v3281, 0
      %v3311 = vsel %vm250, %v3282, 0
      %v3314 = vsel %vm250, %v3283, 0
      %v3317 = vsel %vm250, %v3284, 0
      %v3320 = vsel %vm250, %v3285, 0
      %v3323 = vsel %vm250, %v3286, 0
      %v3326 = vsel %vm250, %v3287, 0
      %v3329 = vsel %vm250, %v3288, 0
      %v3332 = vsel %vm250, %v3289, 0
      %v3335 = vsel %vm250, %v3290, 0
      %v3338 = vsel %vm250, %v3291, 0
      %3340 = vmatprep.subr.mxu0 0.0
      %3341 = vmatpush1.xpose.msra.mxu0 %v3293
      %3342 = vmatprep.subr.mxu0 0.0
      %3343 = vmatpush1.xpose.msra.mxu0 %v3296
      %3344 = vmatprep.subr.mxu0 0.0
      %3345 = vmatpush1.xpose.msra.mxu0 %v3299
      %3346 = vmatprep.subr.mxu0 0.0
      %3347 = vmatpush1.xpose.msra.mxu0 %v3302
      %3348 = vmatprep.subr.mxu0 0.0
      %3349 = vmatpush1.xpose.msra.mxu0 %v3305
      %3350 = vmatprep.subr.mxu0 0.0
      %3351 = vmatpush1.xpose.msra.mxu0 %v3308
      %3352 = vmatprep.subr.mxu0 0.0
      %3353 = vmatpush1.xpose.msra.mxu0 %v3311
      %3354 = vmatprep.subr.mxu0 0.0
      %3355 = vmatpush1.xpose.msra.mxu0 %v3314
      %3356 = vmatprep.subr.mxu0 0.0
      %3357 = vmatpush1.xpose.msra.mxu0 %v3317
      %3358 = vmatprep.subr.mxu0 0.0
      %3359 = vmatpush1.xpose.msra.mxu0 %v3320
      %3360 = vmatprep.subr.mxu0 0.0
      %3361 = vmatpush1.xpose.msra.mxu0 %v3323
      %3362 = vmatprep.subr.mxu0 0.0
      %3363 = vmatpush1.xpose.msra.mxu0 %v3326
      %3364 = vmatprep.subr.mxu0 0.0
      %3365 = vmatpush1.xpose.msra.mxu0 %v3329
      %3366 = vmatprep.subr.mxu0 0.0
      %3367 = vmatpush1.xpose.msra.mxu0 %v3332
      %3368 = vmatprep.subr.mxu0 0.0
      %3369 = vmatpush1.xpose.msra.mxu0 %v3335
      %3370 = vmatprep.subr.mxu0 0.0
      %3371 = vmatpush1.xpose.msra.mxu0 %v3338
      %3372 = vmatprep.subr.mxu0 0.0
      %3373 = vmatpush1.xpose.msra.mxu0 0.0
      %3374 = vmatprep.subr.mxu0 0.0
      %3375 = vmatpush1.xpose.msra.mxu0 0.0
      %3376 = vmatprep.subr.mxu0 0.0
      %3377 = vmatpush1.xpose.msra.mxu0 0.0
      %3378 = vmatprep.subr.mxu0 0.0
      %3379 = vmatpush1.xpose.msra.mxu0 0.0
      %3380 = vmatprep.subr.mxu0 0.0
      %3381 = vmatpush1.xpose.msra.mxu0 0.0
      %3382 = vmatprep.subr.mxu0 0.0
      %3383 = vmatpush1.xpose.msra.mxu0 0.0
      %3384 = vmatprep.subr.mxu0 0.0
      %3385 = vmatpush1.xpose.msra.mxu0 0.0
      %3386 = vmatprep.subr.mxu0 0.0
      %3387 = vmatpush1.xpose.msra.mxu0 0.0
      %3388 = vmatprep.subr.mxu0 0.0
      %3389 = vmatpush1.xpose.msra.mxu0 0.0
      %3390 = vmatprep.subr.mxu0 0.0
      %3391 = vmatpush1.xpose.msra.mxu0 0.0
      %3392 = vmatprep.subr.mxu0 0.0
      %3393 = vmatpush1.xpose.msra.mxu0 0.0
      %3394 = vmatprep.subr.mxu0 0.0
      %3395 = vmatpush1.xpose.msra.mxu0 0.0
      %3396 = vmatprep.subr.mxu0 0.0
      %3397 = vmatpush1.xpose.msra.mxu0 0.0
      %3398 = vmatprep.subr.mxu0 0.0
      %3399 = vmatpush1.xpose.msra.mxu0 0.0
      %3400 = vmatprep.subr.mxu0 0.0
      %3401 = vmatpush1.xpose.msra.mxu0 0.0
      %3402 = vmatprep.subr.mxu0 0.0
      %3403 = vmatpush1.xpose.msra.mxu0 0.0
      %3404 = vmatprep.mubr.f32.mxu0 0.0
      %3405 = vmatmul.mubr.f32.gmra.mrb[0].mxu0 %v461
      %v3406 = vpop.f32.mrb[0].mxu0
      %v3407 = vadd.f32 0.0, %v3406
      %v3408 = vpop.f32.mrb[0].mxu0
      %3409 = vdwg.mxu0
      %v3410 = vmul.f32 %v3198, 2.0
      %v3411 = vmul.f32 %v3203, 2.0
      %v3412 = vmul.f32 %v3208, 2.0
      %v3413 = vmul.f32 %v3213, 2.0
      %v3414 = vmul.f32 %v3218, 2.0
      %v3415 = vmul.f32 %v3223, 2.0
      %v3416 = vmul.f32 %v3228, 2.0
      %v3417 = vmul.f32 %v3233, 2.0
      %v3418 = vmul.f32 %v3238, 2.0
      %v3419 = vmul.f32 %v3243, 2.0
      %v3420 = vmul.f32 %v3248, 2.0
      %v3421 = vmul.f32 %v3253, 2.0
      %v3422 = vmul.f32 %v3258, 2.0
      %v3423 = vmul.f32 %v3263, 2.0
      %v3424 = vmul.f32 %v3268, 2.0
      %v3425 = vmul.f32 %v3273, 2.0
      %v3426 = vlaneseq
      %v3427 = vshrl.u32 %v3426, 7
      %v3428 = vsub.s32 0, %v3427
      %v3429 = vrot.slane %v3407, %v3428
      %v3430 = vsub.f32 %v3429, %v3410
      %v3431 = vsub.f32 %v3429, %v3411
      %v3432 = vsub.f32 %v3429, %v3412
      %v3433 = vsub.f32 %v3429, %v3413
      %v3434 = vsub.f32 %v3429, %v3414
      %v3435 = vsub.f32 %v3429, %v3415
      %v3436 = vsub.f32 %v3429, %v3416
      %v3437 = vsub.f32 %v3429, %v3417
      %v3438 = vsub.f32 %v3429, %v3418
      %v3439 = vsub.f32 %v3429, %v3419
      %v3440 = vsub.f32 %v3429, %v3420
      %v3441 = vsub.f32 %v3429, %v3421
      %v3442 = vsub.f32 %v3429, %v3422
      %v3443 = vsub.f32 %v3429, %v3423
      %v3444 = vsub.f32 %v3429, %v3424
      %v3445 = vsub.f32 %v3429, %v3425
      %vm3462 = vcmp.lt.s32.totalorder %v3430, 0
      %vm3463 = vcmp.lt.s32.totalorder %v3431, 0
      %vm3464 = vcmp.lt.s32.totalorder %v3432, 0
      %vm3465 = vcmp.lt.s32.totalorder %v3433, 0
      %vm3466 = vcmp.lt.s32.totalorder %v3434, 0
      %vm3467 = vcmp.lt.s32.totalorder %v3435, 0
      %vm3468 = vcmp.lt.s32.totalorder %v3436, 0
      %vm3469 = vcmp.lt.s32.totalorder %v3437, 0
      %vm3470 = vcmp.lt.s32.totalorder %v3438, 0
      %vm3471 = vcmp.lt.s32.totalorder %v3439, 0
      %vm3472 = vcmp.lt.s32.totalorder %v3440, 0
      %vm3473 = vcmp.lt.s32.totalorder %v3441, 0
      %vm3474 = vcmp.lt.s32.totalorder %v3442, 0
      %vm3475 = vcmp.lt.s32.totalorder %v3443, 0
      %vm3476 = vcmp.lt.s32.totalorder %v3444, 0
      %vm3477 = vcmp.lt.s32.totalorder %v3445, 0
      %v3478 = vxor.u32 %v3430, 2147483647
      %v3479 = vxor.u32 %v3431, 2147483647
      %v3480 = vxor.u32 %v3432, 2147483647
      %v3481 = vxor.u32 %v3433, 2147483647
      %v3482 = vxor.u32 %v3434, 2147483647
      %v3483 = vxor.u32 %v3435, 2147483647
      %v3484 = vxor.u32 %v3436, 2147483647
      %v3485 = vxor.u32 %v3437, 2147483647
      %v3486 = vxor.u32 %v3438, 2147483647
      %v3487 = vxor.u32 %v3439, 2147483647
      %v3488 = vxor.u32 %v3440, 2147483647
      %v3489 = vxor.u32 %v3441, 2147483647
      %v3490 = vxor.u32 %v3442, 2147483647
      %v3491 = vxor.u32 %v3443, 2147483647
      %v3492 = vxor.u32 %v3444, 2147483647
      %v3493 = vxor.u32 %v3445, 2147483647
      %v3494 = vsel %vm3462, %v3478, %v3430
      %v3495 = vsel %vm3463, %v3479, %v3431
      %v3496 = vsel %vm3464, %v3480, %v3432
      %v3497 = vsel %vm3465, %v3481, %v3433
      %v3498 = vsel %vm3466, %v3482, %v3434
      %v3499 = vsel %vm3467, %v3483, %v3435
      %v3500 = vsel %vm3468, %v3484, %v3436
      %v3501 = vsel %vm3469, %v3485, %v3437
      %v3502 = vsel %vm3470, %v3486, %v3438
      %v3503 = vsel %vm3471, %v3487, %v3439
      %v3504 = vsel %vm3472, %v3488, %v3440
      %v3505 = vsel %vm3473, %v3489, %v3441
      %v3506 = vsel %vm3474, %v3490, %v3442
      %v3507 = vsel %vm3475, %v3491, %v3443
      %v3508 = vsel %vm3476, %v3492, %v3444
      %v3509 = vsel %vm3477, %v3493, %v3445
      %v3510 = vand.u32 %v3494, 4294967168
      %v3511 = vand.u32 %v3495, 4294967168
      %v3512 = vand.u32 %v3496, 4294967168
      %v3513 = vand.u32 %v3497, 4294967168
      %v3514 = vand.u32 %v3498, 4294967168
      %v3515 = vand.u32 %v3499, 4294967168
      %v3516 = vand.u32 %v3500, 4294967168
      %v3517 = vand.u32 %v3501, 4294967168
      %v3518 = vand.u32 %v3502, 4294967168
      %v3519 = vand.u32 %v3503, 4294967168
      %v3520 = vand.u32 %v3504, 4294967168
      %v3521 = vand.u32 %v3505, 4294967168
      %v3522 = vand.u32 %v3506, 4294967168
      %v3523 = vand.u32 %v3507, 4294967168
      %v3524 = vand.u32 %v3508, 4294967168
      %v3525 = vand.u32 %v3509, 4294967168
      %v3526 = vor.u32 %v3510, %v249
      %v3527 = vor.u32 %v3511, %v249
      %v3528 = vor.u32 %v3512, %v249
      %v3529 = vor.u32 %v3513, %v249
      %v3530 = vor.u32 %v3514, %v249
      %v3531 = vor.u32 %v3515, %v249
      %v3532 = vor.u32 %v3516, %v249
      %v3533 = vor.u32 %v3517, %v249
      %v3534 = vor.u32 %v3518, %v249
      %v3535 = vor.u32 %v3519, %v249
      %v3536 = vor.u32 %v3520, %v249
      %v3537 = vor.u32 %v3521, %v249
      %v3538 = vor.u32 %v3522, %v249
      %v3539 = vor.u32 %v3523, %v249
      %v3540 = vor.u32 %v3524, %v249
      %v3541 = vor.u32 %v3525, %v249
      %v3542 = vand.u32 %v3526, 65535
      %v3543 = vshra.s32 %v3526, 16
      %v3544 = vcvt.s32.f32 %v3542
      %v3545 = vcvt.s32.f32 %v3543
      %3546 = vmin.xlane.f32.xlu0 %v3545
      %v3547 = vpop.xlane.xlu0 %3546
      %vm3548 = vcmp.eq.f32.partialorder %v3545, %v3547
      %v3549 = vsel %vm3548, %v3544, inf
      %3550 = vmin.xlane.f32.xlu0 %v3549
      %v3551 = vpop.xlane.xlu0 %3550
      %v3552 = vcvt.f32.s32 %v3551
      %v3553 = vcvt.f32.s32 %v3547
      %v3554 = vshll.u32 %v3553, 16
      %v3555 = vadd.s32 %v3554, %v3552
      %v3556 = vand.u32 %v3527, 65535
      %v3557 = vshra.s32 %v3527, 16
      %v3558 = vcvt.s32.f32 %v3556
      %v3559 = vcvt.s32.f32 %v3557
      %3560 = vmin.xlane.f32.xlu0 %v3559
      %v3561 = vpop.xlane.xlu0 %3560
      %vm3562 = vcmp.eq.f32.partialorder %v3559, %v3561
      %v3563 = vsel %vm3562, %v3558, inf
      %3564 = vmin.xlane.f32.xlu0 %v3563
      %v3565 = vpop.xlane.xlu0 %3564
      %v3566 = vcvt.f32.s32 %v3565
      %v3567 = vcvt.f32.s32 %v3561
      %v3568 = vshll.u32 %v3567, 16
      %v3569 = vadd.s32 %v3568, %v3566
      %v3570 = vand.u32 %v3528, 65535
      %v3571 = vshra.s32 %v3528, 16
      %v3572 = vcvt.s32.f32 %v3570
      %v3573 = vcvt.s32.f32 %v3571
      %3574 = vmin.xlane.f32.xlu0 %v3573
      %v3575 = vpop.xlane.xlu0 %3574
      %vm3576 = vcmp.eq.f32.partialorder %v3573, %v3575
      %v3577 = vsel %vm3576, %v3572, inf
      %3578 = vmin.xlane.f32.xlu0 %v3577
      %v3579 = vpop.xlane.xlu0 %3578
      %v3580 = vcvt.f32.s32 %v3579
      %v3581 = vcvt.f32.s32 %v3575
      %v3582 = vshll.u32 %v3581, 16
      %v3583 = vadd.s32 %v3582, %v3580
      %v3584 = vand.u32 %v3529, 65535
      %v3585 = vshra.s32 %v3529, 16
      %v3586 = vcvt.s32.f32 %v3584
      %v3587 = vcvt.s32.f32 %v3585
      %3588 = vmin.xlane.f32.xlu0 %v3587
      %v3589 = vpop.xlane.xlu0 %3588
      %vm3590 = vcmp.eq.f32.partialorder %v3587, %v3589
      %v3591 = vsel %vm3590, %v3586, inf
      %3592 = vmin.xlane.f32.xlu0 %v3591
      %v3593 = vpop.xlane.xlu0 %3592
      %v3594 = vcvt.f32.s32 %v3593
      %v3595 = vcvt.f32.s32 %v3589
      %v3596 = vshll.u32 %v3595, 16
      %v3597 = vadd.s32 %v3596, %v3594
      %v3598 = vand.u32 %v3530, 65535
      %v3599 = vshra.s32 %v3530, 16
      %v3600 = vcvt.s32.f32 %v3598
      %v3601 = vcvt.s32.f32 %v3599
      %3602 = vmin.xlane.f32.xlu0 %v3601
      %v3603 = vpop.xlane.xlu0 %3602
      %vm3604 = vcmp.eq.f32.partialorder %v3601, %v3603
      %v3605 = vsel %vm3604, %v3600, inf
      %3606 = vmin.xlane.f32.xlu0 %v3605
      %v3607 = vpop.xlane.xlu0 %3606
      %v3608 = vcvt.f32.s32 %v3607
      %v3609 = vcvt.f32.s32 %v3603
      %v3610 = vshll.u32 %v3609, 16
      %v3611 = vadd.s32 %v3610, %v3608
      %v3612 = vand.u32 %v3531, 65535
      %v3613 = vshra.s32 %v3531, 16
      %v3614 = vcvt.s32.f32 %v3612
      %v3615 = vcvt.s32.f32 %v3613
      %3616 = vmin.xlane.f32.xlu0 %v3615
      %v3617 = vpop.xlane.xlu0 %3616
      %vm3618 = vcmp.eq.f32.partialorder %v3615, %v3617
      %v3619 = vsel %vm3618, %v3614, inf
      %3620 = vmin.xlane.f32.xlu0 %v3619
      %v3621 = vpop.xlane.xlu0 %3620
      %v3622 = vcvt.f32.s32 %v3621
      %v3623 = vcvt.f32.s32 %v3617
      %v3624 = vshll.u32 %v3623, 16
      %v3625 = vadd.s32 %v3624, %v3622
      %v3626 = vand.u32 %v3532, 65535
      %v3627 = vshra.s32 %v3532, 16
      %v3628 = vcvt.s32.f32 %v3626
      %v3629 = vcvt.s32.f32 %v3627
      %3630 = vmin.xlane.f32.xlu0 %v3629
      %v3631 = vpop.xlane.xlu0 %3630
      %vm3632 = vcmp.eq.f32.partialorder %v3629, %v3631
      %v3633 = vsel %vm3632, %v3628, inf
      %3634 = vmin.xlane.f32.xlu0 %v3633
      %v3635 = vpop.xlane.xlu0 %3634
      %v3636 = vcvt.f32.s32 %v3635
      %v3637 = vcvt.f32.s32 %v3631
      %v3638 = vshll.u32 %v3637, 16
      %v3639 = vadd.s32 %v3638, %v3636
      %v3640 = vand.u32 %v3533, 65535
      %v3641 = vshra.s32 %v3533, 16
      %v3642 = vcvt.s32.f32 %v3640
      %v3643 = vcvt.s32.f32 %v3641
      %3644 = vmin.xlane.f32.xlu0 %v3643
      %v3645 = vpop.xlane.xlu0 %3644
      %vm3646 = vcmp.eq.f32.partialorder %v3643, %v3645
      %v3647 = vsel %vm3646, %v3642, inf
      %3648 = vmin.xlane.f32.xlu0 %v3647
      %v3649 = vpop.xlane.xlu0 %3648
      %v3650 = vcvt.f32.s32 %v3649
      %v3651 = vcvt.f32.s32 %v3645
      %v3652 = vshll.u32 %v3651, 16
      %v3653 = vadd.s32 %v3652, %v3650
      %v3654 = vand.u32 %v3534, 65535
      %v3655 = vshra.s32 %v3534, 16
      %v3656 = vcvt.s32.f32 %v3654
      %v3657 = vcvt.s32.f32 %v3655
      %3658 = vmin.xlane.f32.xlu0 %v3657
      %v3659 = vpop.xlane.xlu0 %3658
      %vm3660 = vcmp.eq.f32.partialorder %v3657, %v3659
      %v3661 = vsel %vm3660, %v3656, inf
      %3662 = vmin.xlane.f32.xlu0 %v3661
      %v3663 = vpop.xlane.xlu0 %3662
      %v3664 = vcvt.f32.s32 %v3663
      %v3665 = vcvt.f32.s32 %v3659
      %v3666 = vshll.u32 %v3665, 16
      %v3667 = vadd.s32 %v3666, %v3664
      %v3668 = vand.u32 %v3535, 65535
      %v3669 = vshra.s32 %v3535, 16
      %v3670 = vcvt.s32.f32 %v3668
      %v3671 = vcvt.s32.f32 %v3669
      %3672 = vmin.xlane.f32.xlu0 %v3671
      %v3673 = vpop.xlane.xlu0 %3672
      %vm3674 = vcmp.eq.f32.partialorder %v3671, %v3673
      %v3675 = vsel %vm3674, %v3670, inf
      %3676 = vmin.xlane.f32.xlu0 %v3675
      %v3677 = vpop.xlane.xlu0 %3676
      %v3678 = vcvt.f32.s32 %v3677
      %v3679 = vcvt.f32.s32 %v3673
      %v3680 = vshll.u32 %v3679, 16
      %v3681 = vadd.s32 %v3680, %v3678
      %v3682 = vand.u32 %v3536, 65535
      %v3683 = vshra.s32 %v3536, 16
      %v3684 = vcvt.s32.f32 %v3682
      %v3685 = vcvt.s32.f32 %v3683
      %3686 = vmin.xlane.f32.xlu0 %v3685
      %v3687 = vpop.xlane.xlu0 %3686
      %vm3688 = vcmp.eq.f32.partialorder %v3685, %v3687
      %v3689 = vsel %vm3688, %v3684, inf
      %3690 = vmin.xlane.f32.xlu0 %v3689
      %v3691 = vpop.xlane.xlu0 %3690
      %v3692 = vcvt.f32.s32 %v3691
      %v3693 = vcvt.f32.s32 %v3687
      %v3694 = vshll.u32 %v3693, 16
      %v3695 = vadd.s32 %v3694, %v3692
      %v3696 = vand.u32 %v3537, 65535
      %v3697 = vshra.s32 %v3537, 16
      %v3698 = vcvt.s32.f32 %v3696
      %v3699 = vcvt.s32.f32 %v3697
      %3700 = vmin.xlane.f32.xlu0 %v3699
      %v3701 = vpop.xlane.xlu0 %3700
      %vm3702 = vcmp.eq.f32.partialorder %v3699, %v3701
      %v3703 = vsel %vm3702, %v3698, inf
      %3704 = vmin.xlane.f32.xlu0 %v3703
      %v3705 = vpop.xlane.xlu0 %3704
      %v3706 = vcvt.f32.s32 %v3705
      %v3707 = vcvt.f32.s32 %v3701
      %v3708 = vshll.u32 %v3707, 16
      %v3709 = vadd.s32 %v3708, %v3706
      %v3710 = vand.u32 %v3538, 65535
      %v3711 = vshra.s32 %v3538, 16
      %v3712 = vcvt.s32.f32 %v3710
      %v3713 = vcvt.s32.f32 %v3711
      %3714 = vmin.xlane.f32.xlu0 %v3713
      %v3715 = vpop.xlane.xlu0 %3714
      %vm3716 = vcmp.eq.f32.partialorder %v3713, %v3715
      %v3717 = vsel %vm3716, %v3712, inf
      %3718 = vmin.xlane.f32.xlu0 %v3717
      %v3719 = vpop.xlane.xlu0 %3718
      %v3720 = vcvt.f32.s32 %v3719
      %v3721 = vcvt.f32.s32 %v3715
      %v3722 = vshll.u32 %v3721, 16
      %v3723 = vadd.s32 %v3722, %v3720
      %v3724 = vand.u32 %v3539, 65535
      %v3725 = vshra.s32 %v3539, 16
      %v3726 = vcvt.s32.f32 %v3724
      %v3727 = vcvt.s32.f32 %v3725
      %3728 = vmin.xlane.f32.xlu0 %v3727
      %v3729 = vpop.xlane.xlu0 %3728
      %vm3730 = vcmp.eq.f32.partialorder %v3727, %v3729
      %v3731 = vsel %vm3730, %v3726, inf
      %3732 = vmin.xlane.f32.xlu0 %v3731
      %v3733 = vpop.xlane.xlu0 %3732
      %v3734 = vcvt.f32.s32 %v3733
      %v3735 = vcvt.f32.s32 %v3729
      %v3736 = vshll.u32 %v3735, 16
      %v3737 = vadd.s32 %v3736, %v3734
      %v3738 = vand.u32 %v3540, 65535
      %v3739 = vshra.s32 %v3540, 16
      %v3740 = vcvt.s32.f32 %v3738
      %v3741 = vcvt.s32.f32 %v3739
      %3742 = vmin.xlane.f32.xlu0 %v3741
      %v3743 = vpop.xlane.xlu0 %3742
      %vm3744 = vcmp.eq.f32.partialorder %v3741, %v3743
      %v3745 = vsel %vm3744, %v3740, inf
      %3746 = vmin.xlane.f32.xlu0 %v3745
      %v3747 = vpop.xlane.xlu0 %3746
      %v3748 = vcvt.f32.s32 %v3747
      %v3749 = vcvt.f32.s32 %v3743
      %v3750 = vshll.u32 %v3749, 16
      %v3751 = vadd.s32 %v3750, %v3748
      %v3752 = vand.u32 %v3541, 65535
      %v3753 = vshra.s32 %v3541, 16
      %v3754 = vcvt.s32.f32 %v3752
      %v3755 = vcvt.s32.f32 %v3753
      %3756 = vmin.xlane.f32.xlu0 %v3755
      %v3757 = vpop.xlane.xlu0 %3756
      %vm3758 = vcmp.eq.f32.partialorder %v3755, %v3757
      %v3759 = vsel %vm3758, %v3754, inf
      %3760 = vmin.xlane.f32.xlu0 %v3759
      %v3761 = vpop.xlane.xlu0 %3760
      %v3762 = vcvt.f32.s32 %v3761
      %v3763 = vcvt.f32.s32 %v3757
      %v3764 = vshll.u32 %v3763, 16
      %v3765 = vadd.s32 %v3764, %v3762
      %v3766 = vand.u32 %v3555, 127
      %v3767 = vand.u32 %v3569, 127
      %v3768 = vand.u32 %v3583, 127
      %v3769 = vand.u32 %v3597, 127
      %v3770 = vand.u32 %v3611, 127
      %v3771 = vand.u32 %v3625, 127
      %v3772 = vand.u32 %v3639, 127
      %v3773 = vand.u32 %v3653, 127
      %v3774 = vand.u32 %v3667, 127
      %v3775 = vand.u32 %v3681, 127
      %v3776 = vand.u32 %v3695, 127
      %v3777 = vand.u32 %v3709, 127
      %v3778 = vand.u32 %v3723, 127
      %v3779 = vand.u32 %v3737, 127
      %v3780 = vand.u32 %v3751, 127
      %v3781 = vand.u32 %v3765, 127
      %vm3782 = vcmp.eq.s32.totalorder %v249, %v3766
      %vm3783 = vcmp.eq.s32.totalorder %v249, %v3767
      %vm3784 = vcmp.eq.s32.totalorder %v249, %v3768
      %vm3785 = vcmp.eq.s32.totalorder %v249, %v3769
      %vm3786 = vcmp.eq.s32.totalorder %v249, %v3770
      %vm3787 = vcmp.eq.s32.totalorder %v249, %v3771
      %vm3788 = vcmp.eq.s32.totalorder %v249, %v3772
      %vm3789 = vcmp.eq.s32.totalorder %v249, %v3773
      %vm3790 = vcmp.eq.s32.totalorder %v249, %v3774
      %vm3791 = vcmp.eq.s32.totalorder %v249, %v3775
      %vm3792 = vcmp.eq.s32.totalorder %v249, %v3776
      %vm3793 = vcmp.eq.s32.totalorder %v249, %v3777
      %vm3794 = vcmp.eq.s32.totalorder %v249, %v3778
      %vm3795 = vcmp.eq.s32.totalorder %v249, %v3779
      %vm3796 = vcmp.eq.s32.totalorder %v249, %v3780
      %vm3797 = vcmp.eq.s32.totalorder %v249, %v3781
      %v3798 = vsel %vm3782, 1, 0
      %v3799 = vsel %vm3783, 1, 0
      %v3800 = vsel %vm3784, 1, 0
      %v3801 = vsel %vm3785, 1, 0
      %v3802 = vsel %vm3786, 1, 0
      %v3803 = vsel %vm3787, 1, 0
      %v3804 = vsel %vm3788, 1, 0
      %v3805 = vsel %vm3789, 1, 0
      %v3806 = vsel %vm3790, 1, 0
      %v3807 = vsel %vm3791, 1, 0
      %v3808 = vsel %vm3792, 1, 0
      %v3809 = vsel %vm3793, 1, 0
      %v3810 = vsel %vm3794, 1, 0
      %v3811 = vsel %vm3795, 1, 0
      %v3812 = vsel %vm3796, 1, 0
      %v3813 = vsel %vm3797, 1, 0
      %v3814 = vcvt.s32.f32 %v3798
      %v3815 = vcvt.s32.f32 %v3799
      %v3816 = vcvt.s32.f32 %v3800
      %v3817 = vcvt.s32.f32 %v3801
      %v3818 = vcvt.s32.f32 %v3802
      %v3819 = vcvt.s32.f32 %v3803
      %v3820 = vcvt.s32.f32 %v3804
      %v3821 = vcvt.s32.f32 %v3805
      %v3822 = vcvt.s32.f32 %v3806
      %v3823 = vcvt.s32.f32 %v3807
      %v3824 = vcvt.s32.f32 %v3808
      %v3825 = vcvt.s32.f32 %v3809
      %v3826 = vcvt.s32.f32 %v3810
      %v3827 = vcvt.s32.f32 %v3811
      %v3828 = vcvt.s32.f32 %v3812
      %v3829 = vcvt.s32.f32 %v3813
      %v3830 = vadd.f32 %v3814, 0.0
      %v3831 = vadd.f32 %v3815, 0.0
      %v3832 = vadd.f32 %v3816, 0.0
      %v3833 = vadd.f32 %v3817, 0.0
      %v3834 = vadd.f32 %v3818, 0.0
      %v3835 = vadd.f32 %v3819, 0.0
      %v3836 = vadd.f32 %v3820, 0.0
      %v3837 = vadd.f32 %v3821, 0.0
      %v3838 = vadd.f32 %v3822, 0.0
      %v3839 = vadd.f32 %v3823, 0.0
      %v3840 = vadd.f32 %v3824, 0.0
      %v3841 = vadd.f32 %v3825, 0.0
      %v3842 = vadd.f32 %v3826, 0.0
      %v3843 = vadd.f32 %v3827, 0.0
      %v3844 = vadd.f32 %v3828, 0.0
      %v3845 = vadd.f32 %v3829, 0.0
      %v3846 = vsel %vm3782, 2147483647, %v3526
      %v3847 = vsel %vm3783, 2147483647, %v3527
      %v3848 = vsel %vm3784, 2147483647, %v3528
      %v3849 = vsel %vm3785, 2147483647, %v3529
      %v3850 = vsel %vm3786, 2147483647, %v3530
      %v3851 = vsel %vm3787, 2147483647, %v3531
      %v3852 = vsel %vm3788, 2147483647, %v3532
      %v3853 = vsel %vm3789, 2147483647, %v3533
      %v3854 = vsel %vm3790, 2147483647, %v3534
      %v3855 = vsel %vm3791, 2147483647, %v3535
      %v3856 = vsel %vm3792, 2147483647, %v3536
      %v3857 = vsel %vm3793, 2147483647, %v3537
      %v3858 = vsel %vm3794, 2147483647, %v3538
      %v3859 = vsel %vm3795, 2147483647, %v3539
      %v3860 = vsel %vm3796, 2147483647, %v3540
      %v3861 = vsel %vm3797, 2147483647, %v3541
      %v3862 = vand.u32 %v3846, 65535
      %v3863 = vshra.s32 %v3846, 16
      %v3864 = vcvt.s32.f32 %v3862
      %v3865 = vcvt.s32.f32 %v3863
      %3866 = vmin.xlane.f32.xlu0 %v3865
      %v3867 = vpop.xlane.xlu0 %3866
      %vm3868 = vcmp.eq.f32.partialorder %v3865, %v3867
      %v3869 = vsel %vm3868, %v3864, inf
      %3870 = vmin.xlane.f32.xlu0 %v3869
      %v3871 = vpop.xlane.xlu0 %3870
      %v3872 = vcvt.f32.s32 %v3871
      %v3873 = vcvt.f32.s32 %v3867
      %v3874 = vshll.u32 %v3873, 16
      %v3875 = vadd.s32 %v3874, %v3872
      %v3876 = vand.u32 %v3847, 65535
      %v3877 = vshra.s32 %v3847, 16
      %v3878 = vcvt.s32.f32 %v3876
      %v3879 = vcvt.s32.f32 %v3877
      %3880 = vmin.xlane.f32.xlu0 %v3879
      %v3881 = vpop.xlane.xlu0 %3880
      %vm3882 = vcmp.eq.f32.partialorder %v3879, %v3881
      %v3883 = vsel %vm3882, %v3878, inf
      %3884 = vmin.xlane.f32.xlu0 %v3883
      %v3885 = vpop.xlane.xlu0 %3884
      %v3886 = vcvt.f32.s32 %v3885
      %v3887 = vcvt.f32.s32 %v3881
      %v3888 = vshll.u32 %v3887, 16
      %v3889 = vadd.s32 %v3888, %v3886
      %v3890 = vand.u32 %v3848, 65535
      %v3891 = vshra.s32 %v3848, 16
      %v3892 = vcvt.s32.f32 %v3890
      %v3893 = vcvt.s32.f32 %v3891
      %3894 = vmin.xlane.f32.xlu0 %v3893
      %v3895 = vpop.xlane.xlu0 %3894
      %vm3896 = vcmp.eq.f32.partialorder %v3893, %v3895
      %v3897 = vsel %vm3896, %v3892, inf
      %3898 = vmin.xlane.f32.xlu0 %v3897
      %v3899 = vpop.xlane.xlu0 %3898
      %v3900 = vcvt.f32.s32 %v3899
      %v3901 = vcvt.f32.s32 %v3895
      %v3902 = vshll.u32 %v3901, 16
      %v3903 = vadd.s32 %v3902, %v3900
      %v3904 = vand.u32 %v3849, 65535
      %v3905 = vshra.s32 %v3849, 16
      %v3906 = vcvt.s32.f32 %v3904
      %v3907 = vcvt.s32.f32 %v3905
      %3908 = vmin.xlane.f32.xlu0 %v3907
      %v3909 = vpop.xlane.xlu0 %3908
      %vm3910 = vcmp.eq.f32.partialorder %v3907, %v3909
      %v3911 = vsel %vm3910, %v3906, inf
      %3912 = vmin.xlane.f32.xlu0 %v3911
      %v3913 = vpop.xlane.xlu0 %3912
      %v3914 = vcvt.f32.s32 %v3913
      %v3915 = vcvt.f32.s32 %v3909
      %v3916 = vshll.u32 %v3915, 16
      %v3917 = vadd.s32 %v3916, %v3914
      %v3918 = vand.u32 %v3850, 65535
      %v3919 = vshra.s32 %v3850, 16
      %v3920 = vcvt.s32.f32 %v3918
      %v3921 = vcvt.s32.f32 %v3919
      %3922 = vmin.xlane.f32.xlu0 %v3921
      %v3923 = vpop.xlane.xlu0 %3922
      %vm3924 = vcmp.eq.f32.partialorder %v3921, %v3923
      %v3925 = vsel %vm3924, %v3920, inf
      %3926 = vmin.xlane.f32.xlu0 %v3925
      %v3927 = vpop.xlane.xlu0 %3926
      %v3928 = vcvt.f32.s32 %v3927
      %v3929 = vcvt.f32.s32 %v3923
      %v3930 = vshll.u32 %v3929, 16
      %v3931 = vadd.s32 %v3930, %v3928
      %v3932 = vand.u32 %v3851, 65535
      %v3933 = vshra.s32 %v3851, 16
      %v3934 = vcvt.s32.f32 %v3932
      %v3935 = vcvt.s32.f32 %v3933
      %3936 = vmin.xlane.f32.xlu0 %v3935
      %v3937 = vpop.xlane.xlu0 %3936
      %vm3938 = vcmp.eq.f32.partialorder %v3935, %v3937
      %v3939 = vsel %vm3938, %v3934, inf
      %3940 = vmin.xlane.f32.xlu0 %v3939
      %v3941 = vpop.xlane.xlu0 %3940
      %v3942 = vcvt.f32.s32 %v3941
      %v3943 = vcvt.f32.s32 %v3937
      %v3944 = vshll.u32 %v3943, 16
      %v3945 = vadd.s32 %v3944, %v3942
      %v3946 = vand.u32 %v3852, 65535
      %v3947 = vshra.s32 %v3852, 16
      %v3948 = vcvt.s32.f32 %v3946
      %v3949 = vcvt.s32.f32 %v3947
      %3950 = vmin.xlane.f32.xlu0 %v3949
      %v3951 = vpop.xlane.xlu0 %3950
      %vm3952 = vcmp.eq.f32.partialorder %v3949, %v3951
      %v3953 = vsel %vm3952, %v3948, inf
      %3954 = vmin.xlane.f32.xlu0 %v3953
      %v3955 = vpop.xlane.xlu0 %3954
      %v3956 = vcvt.f32.s32 %v3955
      %v3957 = vcvt.f32.s32 %v3951
      %v3958 = vshll.u32 %v3957, 16
      %v3959 = vadd.s32 %v3958, %v3956
      %v3960 = vand.u32 %v3853, 65535
      %v3961 = vshra.s32 %v3853, 16
      %v3962 = vcvt.s32.f32 %v3960
      %v3963 = vcvt.s32.f32 %v3961
      %3964 = vmin.xlane.f32.xlu0 %v3963
      %v3965 = vpop.xlane.xlu0 %3964
      %vm3966 = vcmp.eq.f32.partialorder %v3963, %v3965
      %v3967 = vsel %vm3966, %v3962, inf
      %3968 = vmin.xlane.f32.xlu0 %v3967
      %v3969 = vpop.xlane.xlu0 %3968
      %v3970 = vcvt.f32.s32 %v3969
      %v3971 = vcvt.f32.s32 %v3965
      %v3972 = vshll.u32 %v3971, 16
      %v3973 = vadd.s32 %v3972, %v3970
      %v3974 = vand.u32 %v3854, 65535
      %v3975 = vshra.s32 %v3854, 16
      %v3976 = vcvt.s32.f32 %v3974
      %v3977 = vcvt.s32.f32 %v3975
      %3978 = vmin.xlane.f32.xlu0 %v3977
      %v3979 = vpop.xlane.xlu0 %3978
      %vm3980 = vcmp.eq.f32.partialorder %v3977, %v3979
      %v3981 = vsel %vm3980, %v3976, inf
      %3982 = vmin.xlane.f32.xlu0 %v3981
      %v3983 = vpop.xlane.xlu0 %3982
      %v3984 = vcvt.f32.s32 %v3983
      %v3985 = vcvt.f32.s32 %v3979
      %v3986 = vshll.u32 %v3985, 16
      %v3987 = vadd.s32 %v3986, %v3984
      %v3988 = vand.u32 %v3855, 65535
      %v3989 = vshra.s32 %v3855, 16
      %v3990 = vcvt.s32.f32 %v3988
      %v3991 = vcvt.s32.f32 %v3989
      %3992 = vmin.xlane.f32.xlu0 %v3991
      %v3993 = vpop.xlane.xlu0 %3992
      %vm3994 = vcmp.eq.f32.partialorder %v3991, %v3993
      %v3995 = vsel %vm3994, %v3990, inf
      %3996 = vmin.xlane.f32.xlu0 %v3995
      %v3997 = vpop.xlane.xlu0 %3996
      %v3998 = vcvt.f32.s32 %v3997
      %v3999 = vcvt.f32.s32 %v3993
      %v4000 = vshll.u32 %v3999, 16
      %v4001 = vadd.s32 %v4000, %v3998
      %v4002 = vand.u32 %v3856, 65535
      %v4003 = vshra.s32 %v3856, 16
      %v4004 = vcvt.s32.f32 %v4002
      %v4005 = vcvt.s32.f32 %v4003
      %4006 = vmin.xlane.f32.xlu0 %v4005
      %v4007 = vpop.xlane.xlu0 %4006
      %vm4008 = vcmp.eq.f32.partialorder %v4005, %v4007
      %v4009 = vsel %vm4008, %v4004, inf
      %4010 = vmin.xlane.f32.xlu0 %v4009
      %v4011 = vpop.xlane.xlu0 %4010
      %v4012 = vcvt.f32.s32 %v4011
      %v4013 = vcvt.f32.s32 %v4007
      %v4014 = vshll.u32 %v4013, 16
      %v4015 = vadd.s32 %v4014, %v4012
      %v4016 = vand.u32 %v3857, 65535
      %v4017 = vshra.s32 %v3857, 16
      %v4018 = vcvt.s32.f32 %v4016
      %v4019 = vcvt.s32.f32 %v4017
      %4020 = vmin.xlane.f32.xlu0 %v4019
      %v4021 = vpop.xlane.xlu0 %4020
      %vm4022 = vcmp.eq.f32.partialorder %v4019, %v4021
      %v4023 = vsel %vm4022, %v4018, inf
      %4024 = vmin.xlane.f32.xlu0 %v4023
      %v4025 = vpop.xlane.xlu0 %4024
      %v4026 = vcvt.f32.s32 %v4025
      %v4027 = vcvt.f32.s32 %v4021
      %v4028 = vshll.u32 %v4027, 16
      %v4029 = vadd.s32 %v4028, %v4026
      %v4030 = vand.u32 %v3858, 65535
      %v4031 = vshra.s32 %v3858, 16
      %v4032 = vcvt.s32.f32 %v4030
      %v4033 = vcvt.s32.f32 %v4031
      %4034 = vmin.xlane.f32.xlu0 %v4033
      %v4035 = vpop.xlane.xlu0 %4034
      %vm4036 = vcmp.eq.f32.partialorder %v4033, %v4035
      %v4037 = vsel %vm4036, %v4032, inf
      %4038 = vmin.xlane.f32.xlu0 %v4037
      %v4039 = vpop.xlane.xlu0 %4038
      %v4040 = vcvt.f32.s32 %v4039
      %v4041 = vcvt.f32.s32 %v4035
      %v4042 = vshll.u32 %v4041, 16
      %v4043 = vadd.s32 %v4042, %v4040
      %v4044 = vand.u32 %v3859, 65535
      %v4045 = vshra.s32 %v3859, 16
      %v4046 = vcvt.s32.f32 %v4044
      %v4047 = vcvt.s32.f32 %v4045
      %4048 = vmin.xlane.f32.xlu0 %v4047
      %v4049 = vpop.xlane.xlu0 %4048
      %vm4050 = vcmp.eq.f32.partialorder %v4047, %v4049
      %v4051 = vsel %vm4050, %v4046, inf
      %4052 = vmin.xlane.f32.xlu0 %v4051
      %v4053 = vpop.xlane.xlu0 %4052
      %v4054 = vcvt.f32.s32 %v4053
      %v4055 = vcvt.f32.s32 %v4049
      %v4056 = vshll.u32 %v4055, 16
      %v4057 = vadd.s32 %v4056, %v4054
      %v4058 = vand.u32 %v3860, 65535
      %v4059 = vshra.s32 %v3860, 16
      %v4060 = vcvt.s32.f32 %v4058
      %v4061 = vcvt.s32.f32 %v4059
      %4062 = vmin.xlane.f32.xlu0 %v4061
      %v4063 = vpop.xlane.xlu0 %4062
      %vm4064 = vcmp.eq.f32.partialorder %v4061, %v4063
      %v4065 = vsel %vm4064, %v4060, inf
      %4066 = vmin.xlane.f32.xlu0 %v4065
      %v4067 = vpop.xlane.xlu0 %4066
      %v4068 = vcvt.f32.s32 %v4067
      %v4069 = vcvt.f32.s32 %v4063
      %v4070 = vshll.u32 %v4069, 16
      %v4071 = vadd.s32 %v4070, %v4068
      %v4072 = vand.u32 %v3861, 65535
      %v4073 = vshra.s32 %v3861, 16
      %v4074 = vcvt.s32.f32 %v4072
      %v4075 = vcvt.s32.f32 %v4073
      %4076 = vmin.xlane.f32.xlu0 %v4075
      %v4077 = vpop.xlane.xlu0 %4076
      %vm4078 = vcmp.eq.f32.partialorder %v4075, %v4077
      %v4079 = vsel %vm4078, %v4074, inf
      %4080 = vmin.xlane.f32.xlu0 %v4079
      %v4081 = vpop.xlane.xlu0 %4080
      %v4082 = vcvt.f32.s32 %v4081
      %v4083 = vcvt.f32.s32 %v4077
      %v4084 = vshll.u32 %v4083, 16
      %v4085 = vadd.s32 %v4084, %v4082
      %v4086 = vand.u32 %v3875, 127
      %v4087 = vand.u32 %v3889, 127
      %v4088 = vand.u32 %v3903, 127
      %v4089 = vand.u32 %v3917, 127
      %v4090 = vand.u32 %v3931, 127
      %v4091 = vand.u32 %v3945, 127
      %v4092 = vand.u32 %v3959, 127
      %v4093 = vand.u32 %v3973, 127
      %v4094 = vand.u32 %v3987, 127
      %v4095 = vand.u32 %v4001, 127
      %v4096 = vand.u32 %v4015, 127
      %v4097 = vand.u32 %v4029, 127
      %v4098 = vand.u32 %v4043, 127
      %v4099 = vand.u32 %v4057, 127
      %v4100 = vand.u32 %v4071, 127
      %v4101 = vand.u32 %v4085, 127
      %vm4102 = vcmp.eq.s32.totalorder %v249, %v4086
      %vm4103 = vcmp.eq.s32.totalorder %v249, %v4087
      %vm4104 = vcmp.eq.s32.totalorder %v249, %v4088
      %vm4105 = vcmp.eq.s32.totalorder %v249, %v4089
      %vm4106 = vcmp.eq.s32.totalorder %v249, %v4090
      %vm4107 = vcmp.eq.s32.totalorder %v249, %v4091
      %vm4108 = vcmp.eq.s32.totalorder %v249, %v4092
      %vm4109 = vcmp.eq.s32.totalorder %v249, %v4093
      %vm4110 = vcmp.eq.s32.totalorder %v249, %v4094
      %vm4111 = vcmp.eq.s32.totalorder %v249, %v4095
      %vm4112 = vcmp.eq.s32.totalorder %v249, %v4096
      %vm4113 = vcmp.eq.s32.totalorder %v249, %v4097
      %vm4114 = vcmp.eq.s32.totalorder %v249, %v4098
      %vm4115 = vcmp.eq.s32.totalorder %v249, %v4099
      %vm4116 = vcmp.eq.s32.totalorder %v249, %v4100
      %vm4117 = vcmp.eq.s32.totalorder %v249, %v4101
      %v4118 = vsel %vm4102, 1, 0
      %v4119 = vsel %vm4103, 1, 0
      %v4120 = vsel %vm4104, 1, 0
      %v4121 = vsel %vm4105, 1, 0
      %v4122 = vsel %vm4106, 1, 0
      %v4123 = vsel %vm4107, 1, 0
      %v4124 = vsel %vm4108, 1, 0
      %v4125 = vsel %vm4109, 1, 0
      %v4126 = vsel %vm4110, 1, 0
      %v4127 = vsel %vm4111, 1, 0
      %v4128 = vsel %vm4112, 1, 0
      %v4129 = vsel %vm4113, 1, 0
      %v4130 = vsel %vm4114, 1, 0
      %v4131 = vsel %vm4115, 1, 0
      %v4132 = vsel %vm4116, 1, 0
      %v4133 = vsel %vm4117, 1, 0
      %v4134 = vcvt.s32.f32 %v4118
      %v4135 = vcvt.s32.f32 %v4119
      %v4136 = vcvt.s32.f32 %v4120
      %v4137 = vcvt.s32.f32 %v4121
      %v4138 = vcvt.s32.f32 %v4122
      %v4139 = vcvt.s32.f32 %v4123
      %v4140 = vcvt.s32.f32 %v4124
      %v4141 = vcvt.s32.f32 %v4125
      %v4142 = vcvt.s32.f32 %v4126
      %v4143 = vcvt.s32.f32 %v4127
      %v4144 = vcvt.s32.f32 %v4128
      %v4145 = vcvt.s32.f32 %v4129
      %v4146 = vcvt.s32.f32 %v4130
      %v4147 = vcvt.s32.f32 %v4131
      %v4148 = vcvt.s32.f32 %v4132
      %v4149 = vcvt.s32.f32 %v4133
      %v4150 = vadd.f32 %v3830, %v4134
      %v4151 = vadd.f32 %v3831, %v4135
      %v4152 = vadd.f32 %v3832, %v4136
      %v4153 = vadd.f32 %v3833, %v4137
      %v4154 = vadd.f32 %v3834, %v4138
      %v4155 = vadd.f32 %v3835, %v4139
      %v4156 = vadd.f32 %v3836, %v4140
      %v4157 = vadd.f32 %v3837, %v4141
      %v4158 = vadd.f32 %v3838, %v4142
      %v4159 = vadd.f32 %v3839, %v4143
      %v4160 = vadd.f32 %v3840, %v4144
      %v4161 = vadd.f32 %v3841, %v4145
      %v4162 = vadd.f32 %v3842, %v4146
      %v4163 = vadd.f32 %v3843, %v4147
      %v4164 = vadd.f32 %v3844, %v4148
      %v4165 = vadd.f32 %v3845, %v4149
      %v4166 = vsel %vm4102, 2147483647, %v3846
      %v4167 = vsel %vm4103, 2147483647, %v3847
      %v4168 = vsel %vm4104, 2147483647, %v3848
      %v4169 = vsel %vm4105, 2147483647, %v3849
      %v4170 = vsel %vm4106, 2147483647, %v3850
      %v4171 = vsel %vm4107, 2147483647, %v3851
      %v4172 = vsel %vm4108, 2147483647, %v3852
      %v4173 = vsel %vm4109, 2147483647, %v3853
      %v4174 = vsel %vm4110, 2147483647, %v3854
      %v4175 = vsel %vm4111, 2147483647, %v3855
      %v4176 = vsel %vm4112, 2147483647, %v3856
      %v4177 = vsel %vm4113, 2147483647, %v3857
      %v4178 = vsel %vm4114, 2147483647, %v3858
      %v4179 = vsel %vm4115, 2147483647, %v3859
      %v4180 = vsel %vm4116, 2147483647, %v3860
      %v4181 = vsel %vm4117, 2147483647, %v3861
      %v4182 = vand.u32 %v4166, 65535
      %v4183 = vshra.s32 %v4166, 16
      %v4184 = vcvt.s32.f32 %v4182
      %v4185 = vcvt.s32.f32 %v4183
      %4186 = vmin.xlane.f32.xlu0 %v4185
      %v4187 = vpop.xlane.xlu0 %4186
      %vm4188 = vcmp.eq.f32.partialorder %v4185, %v4187
      %v4189 = vsel %vm4188, %v4184, inf
      %4190 = vmin.xlane.f32.xlu0 %v4189
      %v4191 = vpop.xlane.xlu0 %4190
      %v4192 = vcvt.f32.s32 %v4191
      %v4193 = vcvt.f32.s32 %v4187
      %v4194 = vshll.u32 %v4193, 16
      %v4195 = vadd.s32 %v4194, %v4192
      %v4196 = vand.u32 %v4167, 65535
      %v4197 = vshra.s32 %v4167, 16
      %v4198 = vcvt.s32.f32 %v4196
      %v4199 = vcvt.s32.f32 %v4197
      %4200 = vmin.xlane.f32.xlu0 %v4199
      %v4201 = vpop.xlane.xlu0 %4200
      %vm4202 = vcmp.eq.f32.partialorder %v4199, %v4201
      %v4203 = vsel %vm4202, %v4198, inf
      %4204 = vmin.xlane.f32.xlu0 %v4203
      %v4205 = vpop.xlane.xlu0 %4204
      %v4206 = vcvt.f32.s32 %v4205
      %v4207 = vcvt.f32.s32 %v4201
      %v4208 = vshll.u32 %v4207, 16
      %v4209 = vadd.s32 %v4208, %v4206
      %v4210 = vand.u32 %v4168, 65535
      %v4211 = vshra.s32 %v4168, 16
      %v4212 = vcvt.s32.f32 %v4210
      %v4213 = vcvt.s32.f32 %v4211
      %4214 = vmin.xlane.f32.xlu0 %v4213
      %v4215 = vpop.xlane.xlu0 %4214
      %vm4216 = vcmp.eq.f32.partialorder %v4213, %v4215
      %v4217 = vsel %vm4216, %v4212, inf
      %4218 = vmin.xlane.f32.xlu0 %v4217
      %v4219 = vpop.xlane.xlu0 %4218
      %v4220 = vcvt.f32.s32 %v4219
      %v4221 = vcvt.f32.s32 %v4215
      %v4222 = vshll.u32 %v4221, 16
      %v4223 = vadd.s32 %v4222, %v4220
      %v4224 = vand.u32 %v4169, 65535
      %v4225 = vshra.s32 %v4169, 16
      %v4226 = vcvt.s32.f32 %v4224
      %v4227 = vcvt.s32.f32 %v4225
      %4228 = vmin.xlane.f32.xlu0 %v4227
      %v4229 = vpop.xlane.xlu0 %4228
      %vm4230 = vcmp.eq.f32.partialorder %v4227, %v4229
      %v4231 = vsel %vm4230, %v4226, inf
      %4232 = vmin.xlane.f32.xlu0 %v4231
      %v4233 = vpop.xlane.xlu0 %4232
      %v4234 = vcvt.f32.s32 %v4233
      %v4235 = vcvt.f32.s32 %v4229
      %v4236 = vshll.u32 %v4235, 16
      %v4237 = vadd.s32 %v4236, %v4234
      %v4238 = vand.u32 %v4170, 65535
      %v4239 = vshra.s32 %v4170, 16
      %v4240 = vcvt.s32.f32 %v4238
      %v4241 = vcvt.s32.f32 %v4239
      %4242 = vmin.xlane.f32.xlu0 %v4241
      %v4243 = vpop.xlane.xlu0 %4242
      %vm4244 = vcmp.eq.f32.partialorder %v4241, %v4243
      %v4245 = vsel %vm4244, %v4240, inf
      %4246 = vmin.xlane.f32.xlu0 %v4245
      %v4247 = vpop.xlane.xlu0 %4246
      %v4248 = vcvt.f32.s32 %v4247
      %v4249 = vcvt.f32.s32 %v4243
      %v4250 = vshll.u32 %v4249, 16
      %v4251 = vadd.s32 %v4250, %v4248
      %v4252 = vand.u32 %v4171, 65535
      %v4253 = vshra.s32 %v4171, 16
      %v4254 = vcvt.s32.f32 %v4252
      %v4255 = vcvt.s32.f32 %v4253
      %4256 = vmin.xlane.f32.xlu0 %v4255
      %v4257 = vpop.xlane.xlu0 %4256
      %vm4258 = vcmp.eq.f32.partialorder %v4255, %v4257
      %v4259 = vsel %vm4258, %v4254, inf
      %4260 = vmin.xlane.f32.xlu0 %v4259
      %v4261 = vpop.xlane.xlu0 %4260
      %v4262 = vcvt.f32.s32 %v4261
      %v4263 = vcvt.f32.s32 %v4257
      %v4264 = vshll.u32 %v4263, 16
      %v4265 = vadd.s32 %v4264, %v4262
      %v4266 = vand.u32 %v4172, 65535
      %v4267 = vshra.s32 %v4172, 16
      %v4268 = vcvt.s32.f32 %v4266
      %v4269 = vcvt.s32.f32 %v4267
      %4270 = vmin.xlane.f32.xlu0 %v4269
      %v4271 = vpop.xlane.xlu0 %4270
      %vm4272 = vcmp.eq.f32.partialorder %v4269, %v4271
      %v4273 = vsel %vm4272, %v4268, inf
      %4274 = vmin.xlane.f32.xlu0 %v4273
      %v4275 = vpop.xlane.xlu0 %4274
      %v4276 = vcvt.f32.s32 %v4275
      %v4277 = vcvt.f32.s32 %v4271
      %v4278 = vshll.u32 %v4277, 16
      %v4279 = vadd.s32 %v4278, %v4276
      %v4280 = vand.u32 %v4173, 65535
      %v4281 = vshra.s32 %v4173, 16
      %v4282 = vcvt.s32.f32 %v4280
      %v4283 = vcvt.s32.f32 %v4281
      %4284 = vmin.xlane.f32.xlu0 %v4283
      %v4285 = vpop.xlane.xlu0 %4284
      %vm4286 = vcmp.eq.f32.partialorder %v4283, %v4285
      %v4287 = vsel %vm4286, %v4282, inf
      %4288 = vmin.xlane.f32.xlu0 %v4287
      %v4289 = vpop.xlane.xlu0 %4288
      %v4290 = vcvt.f32.s32 %v4289
      %v4291 = vcvt.f32.s32 %v4285
      %v4292 = vshll.u32 %v4291, 16
      %v4293 = vadd.s32 %v4292, %v4290
      %v4294 = vand.u32 %v4174, 65535
      %v4295 = vshra.s32 %v4174, 16
      %v4296 = vcvt.s32.f32 %v4294
      %v4297 = vcvt.s32.f32 %v4295
      %4298 = vmin.xlane.f32.xlu0 %v4297
      %v4299 = vpop.xlane.xlu0 %4298
      %vm4300 = vcmp.eq.f32.partialorder %v4297, %v4299
      %v4301 = vsel %vm4300, %v4296, inf
      %4302 = vmin.xlane.f32.xlu0 %v4301
      %v4303 = vpop.xlane.xlu0 %4302
      %v4304 = vcvt.f32.s32 %v4303
      %v4305 = vcvt.f32.s32 %v4299
      %v4306 = vshll.u32 %v4305, 16
      %v4307 = vadd.s32 %v4306, %v4304
      %v4308 = vand.u32 %v4175, 65535
      %v4309 = vshra.s32 %v4175, 16
      %v4310 = vcvt.s32.f32 %v4308
      %v4311 = vcvt.s32.f32 %v4309
      %4312 = vmin.xlane.f32.xlu0 %v4311
      %v4313 = vpop.xlane.xlu0 %4312
      %vm4314 = vcmp.eq.f32.partialorder %v4311, %v4313
      %v4315 = vsel %vm4314, %v4310, inf
      %4316 = vmin.xlane.f32.xlu0 %v4315
      %v4317 = vpop.xlane.xlu0 %4316
      %v4318 = vcvt.f32.s32 %v4317
      %v4319 = vcvt.f32.s32 %v4313
      %v4320 = vshll.u32 %v4319, 16
      %v4321 = vadd.s32 %v4320, %v4318
      %v4322 = vand.u32 %v4176, 65535
      %v4323 = vshra.s32 %v4176, 16
      %v4324 = vcvt.s32.f32 %v4322
      %v4325 = vcvt.s32.f32 %v4323
      %4326 = vmin.xlane.f32.xlu0 %v4325
      %v4327 = vpop.xlane.xlu0 %4326
      %vm4328 = vcmp.eq.f32.partialorder %v4325, %v4327
      %v4329 = vsel %vm4328, %v4324, inf
      %4330 = vmin.xlane.f32.xlu0 %v4329
      %v4331 = vpop.xlane.xlu0 %4330
      %v4332 = vcvt.f32.s32 %v4331
      %v4333 = vcvt.f32.s32 %v4327
      %v4334 = vshll.u32 %v4333, 16
      %v4335 = vadd.s32 %v4334, %v4332
      %v4336 = vand.u32 %v4177, 65535
      %v4337 = vshra.s32 %v4177, 16
      %v4338 = vcvt.s32.f32 %v4336
      %v4339 = vcvt.s32.f32 %v4337
      %4340 = vmin.xlane.f32.xlu0 %v4339
      %v4341 = vpop.xlane.xlu0 %4340
      %vm4342 = vcmp.eq.f32.partialorder %v4339, %v4341
      %v4343 = vsel %vm4342, %v4338, inf
      %4344 = vmin.xlane.f32.xlu0 %v4343
      %v4345 = vpop.xlane.xlu0 %4344
      %v4346 = vcvt.f32.s32 %v4345
      %v4347 = vcvt.f32.s32 %v4341
      %v4348 = vshll.u32 %v4347, 16
      %v4349 = vadd.s32 %v4348, %v4346
      %v4350 = vand.u32 %v4178, 65535
      %v4351 = vshra.s32 %v4178, 16
      %v4352 = vcvt.s32.f32 %v4350
      %v4353 = vcvt.s32.f32 %v4351
      %4354 = vmin.xlane.f32.xlu0 %v4353
      %v4355 = vpop.xlane.xlu0 %4354
      %vm4356 = vcmp.eq.f32.partialorder %v4353, %v4355
      %v4357 = vsel %vm4356, %v4352, inf
      %4358 = vmin.xlane.f32.xlu0 %v4357
      %v4359 = vpop.xlane.xlu0 %4358
      %v4360 = vcvt.f32.s32 %v4359
      %v4361 = vcvt.f32.s32 %v4355
      %v4362 = vshll.u32 %v4361, 16
      %v4363 = vadd.s32 %v4362, %v4360
      %v4364 = vand.u32 %v4179, 65535
      %v4365 = vshra.s32 %v4179, 16
      %v4366 = vcvt.s32.f32 %v4364
      %v4367 = vcvt.s32.f32 %v4365
      %4368 = vmin.xlane.f32.xlu0 %v4367
      %v4369 = vpop.xlane.xlu0 %4368
      %vm4370 = vcmp.eq.f32.partialorder %v4367, %v4369
      %v4371 = vsel %vm4370, %v4366, inf
      %4372 = vmin.xlane.f32.xlu0 %v4371
      %v4373 = vpop.xlane.xlu0 %4372
      %v4374 = vcvt.f32.s32 %v4373
      %v4375 = vcvt.f32.s32 %v4369
      %v4376 = vshll.u32 %v4375, 16
      %v4377 = vadd.s32 %v4376, %v4374
      %v4378 = vand.u32 %v4180, 65535
      %v4379 = vshra.s32 %v4180, 16
      %v4380 = vcvt.s32.f32 %v4378
      %v4381 = vcvt.s32.f32 %v4379
      %4382 = vmin.xlane.f32.xlu0 %v4381
      %v4383 = vpop.xlane.xlu0 %4382
      %vm4384 = vcmp.eq.f32.partialorder %v4381, %v4383
      %v4385 = vsel %vm4384, %v4380, inf
      %4386 = vmin.xlane.f32.xlu0 %v4385
      %v4387 = vpop.xlane.xlu0 %4386
      %v4388 = vcvt.f32.s32 %v4387
      %v4389 = vcvt.f32.s32 %v4383
      %v4390 = vshll.u32 %v4389, 16
      %v4391 = vadd.s32 %v4390, %v4388
      %v4392 = vand.u32 %v4181, 65535
      %v4393 = vshra.s32 %v4181, 16
      %v4394 = vcvt.s32.f32 %v4392
      %v4395 = vcvt.s32.f32 %v4393
      %4396 = vmin.xlane.f32.xlu0 %v4395
      %v4397 = vpop.xlane.xlu0 %4396
      %vm4398 = vcmp.eq.f32.partialorder %v4395, %v4397
      %v4399 = vsel %vm4398, %v4394, inf
      %4400 = vmin.xlane.f32.xlu0 %v4399
      %v4401 = vpop.xlane.xlu0 %4400
      %v4402 = vcvt.f32.s32 %v4401
      %v4403 = vcvt.f32.s32 %v4397
      %v4404 = vshll.u32 %v4403, 16
      %v4405 = vadd.s32 %v4404, %v4402
      %v4406 = vand.u32 %v4195, 127
      %v4407 = vand.u32 %v4209, 127
      %v4408 = vand.u32 %v4223, 127
      %v4409 = vand.u32 %v4237, 127
      %v4410 = vand.u32 %v4251, 127
      %v4411 = vand.u32 %v4265, 127
      %v4412 = vand.u32 %v4279, 127
      %v4413 = vand.u32 %v4293, 127
      %v4414 = vand.u32 %v4307, 127
      %v4415 = vand.u32 %v4321, 127
      %v4416 = vand.u32 %v4335, 127
      %v4417 = vand.u32 %v4349, 127
      %v4418 = vand.u32 %v4363, 127
      %v4419 = vand.u32 %v4377, 127
      %v4420 = vand.u32 %v4391, 127
      %v4421 = vand.u32 %v4405, 127
      %vm4422 = vcmp.eq.s32.totalorder %v249, %v4406
      %vm4423 = vcmp.eq.s32.totalorder %v249, %v4407
      %vm4424 = vcmp.eq.s32.totalorder %v249, %v4408
      %vm4425 = vcmp.eq.s32.totalorder %v249, %v4409
      %vm4426 = vcmp.eq.s32.totalorder %v249, %v4410
      %vm4427 = vcmp.eq.s32.totalorder %v249, %v4411
      %vm4428 = vcmp.eq.s32.totalorder %v249, %v4412
      %vm4429 = vcmp.eq.s32.totalorder %v249, %v4413
      %vm4430 = vcmp.eq.s32.totalorder %v249, %v4414
      %vm4431 = vcmp.eq.s32.totalorder %v249, %v4415
      %vm4432 = vcmp.eq.s32.totalorder %v249, %v4416
      %vm4433 = vcmp.eq.s32.totalorder %v249, %v4417
      %vm4434 = vcmp.eq.s32.totalorder %v249, %v4418
      %vm4435 = vcmp.eq.s32.totalorder %v249, %v4419
      %vm4436 = vcmp.eq.s32.totalorder %v249, %v4420
      %vm4437 = vcmp.eq.s32.totalorder %v249, %v4421
      %v4438 = vsel %vm4422, 1, 0
      %v4439 = vsel %vm4423, 1, 0
      %v4440 = vsel %vm4424, 1, 0
      %v4441 = vsel %vm4425, 1, 0
      %v4442 = vsel %vm4426, 1, 0
      %v4443 = vsel %vm4427, 1, 0
      %v4444 = vsel %vm4428, 1, 0
      %v4445 = vsel %vm4429, 1, 0
      %v4446 = vsel %vm4430, 1, 0
      %v4447 = vsel %vm4431, 1, 0
      %v4448 = vsel %vm4432, 1, 0
      %v4449 = vsel %vm4433, 1, 0
      %v4450 = vsel %vm4434, 1, 0
      %v4451 = vsel %vm4435, 1, 0
      %v4452 = vsel %vm4436, 1, 0
      %v4453 = vsel %vm4437, 1, 0
      %v4454 = vcvt.s32.f32 %v4438
      %v4455 = vcvt.s32.f32 %v4439
      %v4456 = vcvt.s32.f32 %v4440
      %v4457 = vcvt.s32.f32 %v4441
      %v4458 = vcvt.s32.f32 %v4442
      %v4459 = vcvt.s32.f32 %v4443
      %v4460 = vcvt.s32.f32 %v4444
      %v4461 = vcvt.s32.f32 %v4445
      %v4462 = vcvt.s32.f32 %v4446
      %v4463 = vcvt.s32.f32 %v4447
      %v4464 = vcvt.s32.f32 %v4448
      %v4465 = vcvt.s32.f32 %v4449
      %v4466 = vcvt.s32.f32 %v4450
      %v4467 = vcvt.s32.f32 %v4451
      %v4468 = vcvt.s32.f32 %v4452
      %v4469 = vcvt.s32.f32 %v4453
      %v4470 = vadd.f32 %v4150, %v4454
      %v4471 = vadd.f32 %v4151, %v4455
      %v4472 = vadd.f32 %v4152, %v4456
      %v4473 = vadd.f32 %v4153, %v4457
      %v4474 = vadd.f32 %v4154, %v4458
      %v4475 = vadd.f32 %v4155, %v4459
      %v4476 = vadd.f32 %v4156, %v4460
      %v4477 = vadd.f32 %v4157, %v4461
      %v4478 = vadd.f32 %v4158, %v4462
      %v4479 = vadd.f32 %v4159, %v4463
      %v4480 = vadd.f32 %v4160, %v4464
      %v4481 = vadd.f32 %v4161, %v4465
      %v4482 = vadd.f32 %v4162, %v4466
      %v4483 = vadd.f32 %v4163, %v4467
      %v4484 = vadd.f32 %v4164, %v4468
      %v4485 = vadd.f32 %v4165, %v4469
      %v4486 = vsel %vm4422, 2147483647, %v4166
      %v4487 = vsel %vm4423, 2147483647, %v4167
      %v4488 = vsel %vm4424, 2147483647, %v4168
      %v4489 = vsel %vm4425, 2147483647, %v4169
      %v4490 = vsel %vm4426, 2147483647, %v4170
      %v4491 = vsel %vm4427, 2147483647, %v4171
      %v4492 = vsel %vm4428, 2147483647, %v4172
      %v4493 = vsel %vm4429, 2147483647, %v4173
      %v4494 = vsel %vm4430, 2147483647, %v4174
      %v4495 = vsel %vm4431, 2147483647, %v4175
      %v4496 = vsel %vm4432, 2147483647, %v4176
      %v4497 = vsel %vm4433, 2147483647, %v4177
      %v4498 = vsel %vm4434, 2147483647, %v4178
      %v4499 = vsel %vm4435, 2147483647, %v4179
      %v4500 = vsel %vm4436, 2147483647, %v4180
      %v4501 = vsel %vm4437, 2147483647, %v4181
      %v4502 = vand.u32 %v4486, 65535
      %v4503 = vshra.s32 %v4486, 16
      %v4504 = vcvt.s32.f32 %v4502
      %v4505 = vcvt.s32.f32 %v4503
      %4506 = vmin.xlane.f32.xlu0 %v4505
      %v4507 = vpop.xlane.xlu0 %4506
      %vm4508 = vcmp.eq.f32.partialorder %v4505, %v4507
      %v4509 = vsel %vm4508, %v4504, inf
      %4510 = vmin.xlane.f32.xlu0 %v4509
      %v4511 = vpop.xlane.xlu0 %4510
      %v4512 = vcvt.f32.s32 %v4511
      %v4513 = vcvt.f32.s32 %v4507
      %v4514 = vshll.u32 %v4513, 16
      %v4515 = vadd.s32 %v4514, %v4512
      %v4516 = vand.u32 %v4487, 65535
      %v4517 = vshra.s32 %v4487, 16
      %v4518 = vcvt.s32.f32 %v4516
      %v4519 = vcvt.s32.f32 %v4517
      %4520 = vmin.xlane.f32.xlu0 %v4519
      %v4521 = vpop.xlane.xlu0 %4520
      %vm4522 = vcmp.eq.f32.partialorder %v4519, %v4521
      %v4523 = vsel %vm4522, %v4518, inf
      %4524 = vmin.xlane.f32.xlu0 %v4523
      %v4525 = vpop.xlane.xlu0 %4524
      %v4526 = vcvt.f32.s32 %v4525
      %v4527 = vcvt.f32.s32 %v4521
      %v4528 = vshll.u32 %v4527, 16
      %v4529 = vadd.s32 %v4528, %v4526
      %v4530 = vand.u32 %v4488, 65535
      %v4531 = vshra.s32 %v4488, 16
      %v4532 = vcvt.s32.f32 %v4530
      %v4533 = vcvt.s32.f32 %v4531
      %4534 = vmin.xlane.f32.xlu0 %v4533
      %v4535 = vpop.xlane.xlu0 %4534
      %vm4536 = vcmp.eq.f32.partialorder %v4533, %v4535
      %v4537 = vsel %vm4536, %v4532, inf
      %4538 = vmin.xlane.f32.xlu0 %v4537
      %v4539 = vpop.xlane.xlu0 %4538
      %v4540 = vcvt.f32.s32 %v4539
      %v4541 = vcvt.f32.s32 %v4535
      %v4542 = vshll.u32 %v4541, 16
      %v4543 = vadd.s32 %v4542, %v4540
      %v4544 = vand.u32 %v4489, 65535
      %v4545 = vshra.s32 %v4489, 16
      %v4546 = vcvt.s32.f32 %v4544
      %v4547 = vcvt.s32.f32 %v4545
      %4548 = vmin.xlane.f32.xlu0 %v4547
      %v4549 = vpop.xlane.xlu0 %4548
      %vm4550 = vcmp.eq.f32.partialorder %v4547, %v4549
      %v4551 = vsel %vm4550, %v4546, inf
      %4552 = vmin.xlane.f32.xlu0 %v4551
      %v4553 = vpop.xlane.xlu0 %4552
      %v4554 = vcvt.f32.s32 %v4553
      %v4555 = vcvt.f32.s32 %v4549
      %v4556 = vshll.u32 %v4555, 16
      %v4557 = vadd.s32 %v4556, %v4554
      %v4558 = vand.u32 %v4490, 65535
      %v4559 = vshra.s32 %v4490, 16
      %v4560 = vcvt.s32.f32 %v4558
      %v4561 = vcvt.s32.f32 %v4559
      %4562 = vmin.xlane.f32.xlu0 %v4561
      %v4563 = vpop.xlane.xlu0 %4562
      %vm4564 = vcmp.eq.f32.partialorder %v4561, %v4563
      %v4565 = vsel %vm4564, %v4560, inf
      %4566 = vmin.xlane.f32.xlu0 %v4565
      %v4567 = vpop.xlane.xlu0 %4566
      %v4568 = vcvt.f32.s32 %v4567
      %v4569 = vcvt.f32.s32 %v4563
      %v4570 = vshll.u32 %v4569, 16
      %v4571 = vadd.s32 %v4570, %v4568
      %v4572 = vand.u32 %v4491, 65535
      %v4573 = vshra.s32 %v4491, 16
      %v4574 = vcvt.s32.f32 %v4572
      %v4575 = vcvt.s32.f32 %v4573
      %4576 = vmin.xlane.f32.xlu0 %v4575
      %v4577 = vpop.xlane.xlu0 %4576
      %vm4578 = vcmp.eq.f32.partialorder %v4575, %v4577
      %v4579 = vsel %vm4578, %v4574, inf
      %4580 = vmin.xlane.f32.xlu0 %v4579
      %v4581 = vpop.xlane.xlu0 %4580
      %v4582 = vcvt.f32.s32 %v4581
      %v4583 = vcvt.f32.s32 %v4577
      %v4584 = vshll.u32 %v4583, 16
      %v4585 = vadd.s32 %v4584, %v4582
      %v4586 = vand.u32 %v4492, 65535
      %v4587 = vshra.s32 %v4492, 16
      %v4588 = vcvt.s32.f32 %v4586
      %v4589 = vcvt.s32.f32 %v4587
      %4590 = vmin.xlane.f32.xlu0 %v4589
      %v4591 = vpop.xlane.xlu0 %4590
      %vm4592 = vcmp.eq.f32.partialorder %v4589, %v4591
      %v4593 = vsel %vm4592, %v4588, inf
      %4594 = vmin.xlane.f32.xlu0 %v4593
      %v4595 = vpop.xlane.xlu0 %4594
      %v4596 = vcvt.f32.s32 %v4595
      %v4597 = vcvt.f32.s32 %v4591
      %v4598 = vshll.u32 %v4597, 16
      %v4599 = vadd.s32 %v4598, %v4596
      %v4600 = vand.u32 %v4493, 65535
      %v4601 = vshra.s32 %v4493, 16
      %v4602 = vcvt.s32.f32 %v4600
      %v4603 = vcvt.s32.f32 %v4601
      %4604 = vmin.xlane.f32.xlu0 %v4603
      %v4605 = vpop.xlane.xlu0 %4604
      %vm4606 = vcmp.eq.f32.partialorder %v4603, %v4605
      %v4607 = vsel %vm4606, %v4602, inf
      %4608 = vmin.xlane.f32.xlu0 %v4607
      %v4609 = vpop.xlane.xlu0 %4608
      %v4610 = vcvt.f32.s32 %v4609
      %v4611 = vcvt.f32.s32 %v4605
      %v4612 = vshll.u32 %v4611, 16
      %v4613 = vadd.s32 %v4612, %v4610
      %v4614 = vand.u32 %v4494, 65535
      %v4615 = vshra.s32 %v4494, 16
      %v4616 = vcvt.s32.f32 %v4614
      %v4617 = vcvt.s32.f32 %v4615
      %4618 = vmin.xlane.f32.xlu0 %v4617
      %v4619 = vpop.xlane.xlu0 %4618
      %vm4620 = vcmp.eq.f32.partialorder %v4617, %v4619
      %v4621 = vsel %vm4620, %v4616, inf
      %4622 = vmin.xlane.f32.xlu0 %v4621
      %v4623 = vpop.xlane.xlu0 %4622
      %v4624 = vcvt.f32.s32 %v4623
      %v4625 = vcvt.f32.s32 %v4619
      %v4626 = vshll.u32 %v4625, 16
      %v4627 = vadd.s32 %v4626, %v4624
      %v4628 = vand.u32 %v4495, 65535
      %v4629 = vshra.s32 %v4495, 16
      %v4630 = vcvt.s32.f32 %v4628
      %v4631 = vcvt.s32.f32 %v4629
      %4632 = vmin.xlane.f32.xlu0 %v4631
      %v4633 = vpop.xlane.xlu0 %4632
      %vm4634 = vcmp.eq.f32.partialorder %v4631, %v4633
      %v4635 = vsel %vm4634, %v4630, inf
      %4636 = vmin.xlane.f32.xlu0 %v4635
      %v4637 = vpop.xlane.xlu0 %4636
      %v4638 = vcvt.f32.s32 %v4637
      %v4639 = vcvt.f32.s32 %v4633
      %v4640 = vshll.u32 %v4639, 16
      %v4641 = vadd.s32 %v4640, %v4638
      %v4642 = vand.u32 %v4496, 65535
      %v4643 = vshra.s32 %v4496, 16
      %v4644 = vcvt.s32.f32 %v4642
      %v4645 = vcvt.s32.f32 %v4643
      %4646 = vmin.xlane.f32.xlu0 %v4645
      %v4647 = vpop.xlane.xlu0 %4646
      %vm4648 = vcmp.eq.f32.partialorder %v4645, %v4647
      %v4649 = vsel %vm4648, %v4644, inf
      %4650 = vmin.xlane.f32.xlu0 %v4649
      %v4651 = vpop.xlane.xlu0 %4650
      %v4652 = vcvt.f32.s32 %v4651
      %v4653 = vcvt.f32.s32 %v4647
      %v4654 = vshll.u32 %v4653, 16
      %v4655 = vadd.s32 %v4654, %v4652
      %v4656 = vand.u32 %v4497, 65535
      %v4657 = vshra.s32 %v4497, 16
      %v4658 = vcvt.s32.f32 %v4656
      %v4659 = vcvt.s32.f32 %v4657
      %4660 = vmin.xlane.f32.xlu0 %v4659
      %v4661 = vpop.xlane.xlu0 %4660
      %vm4662 = vcmp.eq.f32.partialorder %v4659, %v4661
      %v4663 = vsel %vm4662, %v4658, inf
      %4664 = vmin.xlane.f32.xlu0 %v4663
      %v4665 = vpop.xlane.xlu0 %4664
      %v4666 = vcvt.f32.s32 %v4665
      %v4667 = vcvt.f32.s32 %v4661
      %v4668 = vshll.u32 %v4667, 16
      %v4669 = vadd.s32 %v4668, %v4666
      %v4670 = vand.u32 %v4498, 65535
      %v4671 = vshra.s32 %v4498, 16
      %v4672 = vcvt.s32.f32 %v4670
      %v4673 = vcvt.s32.f32 %v4671
      %4674 = vmin.xlane.f32.xlu0 %v4673
      %v4675 = vpop.xlane.xlu0 %4674
      %vm4676 = vcmp.eq.f32.partialorder %v4673, %v4675
      %v4677 = vsel %vm4676, %v4672, inf
      %4678 = vmin.xlane.f32.xlu0 %v4677
      %v4679 = vpop.xlane.xlu0 %4678
      %v4680 = vcvt.f32.s32 %v4679
      %v4681 = vcvt.f32.s32 %v4675
      %v4682 = vshll.u32 %v4681, 16
      %v4683 = vadd.s32 %v4682, %v4680
      %v4684 = vand.u32 %v4499, 65535
      %v4685 = vshra.s32 %v4499, 16
      %v4686 = vcvt.s32.f32 %v4684
      %v4687 = vcvt.s32.f32 %v4685
      %4688 = vmin.xlane.f32.xlu0 %v4687
      %v4689 = vpop.xlane.xlu0 %4688
      %vm4690 = vcmp.eq.f32.partialorder %v4687, %v4689
      %v4691 = vsel %vm4690, %v4686, inf
      %4692 = vmin.xlane.f32.xlu0 %v4691
      %v4693 = vpop.xlane.xlu0 %4692
      %v4694 = vcvt.f32.s32 %v4693
      %v4695 = vcvt.f32.s32 %v4689
      %v4696 = vshll.u32 %v4695, 16
      %v4697 = vadd.s32 %v4696, %v4694
      %v4698 = vand.u32 %v4500, 65535
      %v4699 = vshra.s32 %v4500, 16
      %v4700 = vcvt.s32.f32 %v4698
      %v4701 = vcvt.s32.f32 %v4699
      %4702 = vmin.xlane.f32.xlu0 %v4701
      %v4703 = vpop.xlane.xlu0 %4702
      %vm4704 = vcmp.eq.f32.partialorder %v4701, %v4703
      %v4705 = vsel %vm4704, %v4700, inf
      %4706 = vmin.xlane.f32.xlu0 %v4705
      %v4707 = vpop.xlane.xlu0 %4706
      %v4708 = vcvt.f32.s32 %v4707
      %v4709 = vcvt.f32.s32 %v4703
      %v4710 = vshll.u32 %v4709, 16
      %v4711 = vadd.s32 %v4710, %v4708
      %v4712 = vand.u32 %v4501, 65535
      %v4713 = vshra.s32 %v4501, 16
      %v4714 = vcvt.s32.f32 %v4712
      %v4715 = vcvt.s32.f32 %v4713
      %4716 = vmin.xlane.f32.xlu0 %v4715
      %v4717 = vpop.xlane.xlu0 %4716
      %vm4718 = vcmp.eq.f32.partialorder %v4715, %v4717
      %v4719 = vsel %vm4718, %v4714, inf
      %4720 = vmin.xlane.f32.xlu0 %v4719
      %v4721 = vpop.xlane.xlu0 %4720
      %v4722 = vcvt.f32.s32 %v4721
      %v4723 = vcvt.f32.s32 %v4717
      %v4724 = vshll.u32 %v4723, 16
      %v4725 = vadd.s32 %v4724, %v4722
      %v4726 = vand.u32 %v4515, 127
      %v4727 = vand.u32 %v4529, 127
      %v4728 = vand.u32 %v4543, 127
      %v4729 = vand.u32 %v4557, 127
      %v4730 = vand.u32 %v4571, 127
      %v4731 = vand.u32 %v4585, 127
      %v4732 = vand.u32 %v4599, 127
      %v4733 = vand.u32 %v4613, 127
      %v4734 = vand.u32 %v4627, 127
      %v4735 = vand.u32 %v4641, 127
      %v4736 = vand.u32 %v4655, 127
      %v4737 = vand.u32 %v4669, 127
      %v4738 = vand.u32 %v4683, 127
      %v4739 = vand.u32 %v4697, 127
      %v4740 = vand.u32 %v4711, 127
      %v4741 = vand.u32 %v4725, 127
      %vm4742 = vcmp.eq.s32.totalorder %v249, %v4726
      %vm4743 = vcmp.eq.s32.totalorder %v249, %v4727
      %vm4744 = vcmp.eq.s32.totalorder %v249, %v4728
      %vm4745 = vcmp.eq.s32.totalorder %v249, %v4729
      %vm4746 = vcmp.eq.s32.totalorder %v249, %v4730
      %vm4747 = vcmp.eq.s32.totalorder %v249, %v4731
      %vm4748 = vcmp.eq.s32.totalorder %v249, %v4732
      %vm4749 = vcmp.eq.s32.totalorder %v249, %v4733
      %vm4750 = vcmp.eq.s32.totalorder %v249, %v4734
      %vm4751 = vcmp.eq.s32.totalorder %v249, %v4735
      %vm4752 = vcmp.eq.s32.totalorder %v249, %v4736
      %vm4753 = vcmp.eq.s32.totalorder %v249, %v4737
      %vm4754 = vcmp.eq.s32.totalorder %v249, %v4738
      %vm4755 = vcmp.eq.s32.totalorder %v249, %v4739
      %vm4756 = vcmp.eq.s32.totalorder %v249, %v4740
      %vm4757 = vcmp.eq.s32.totalorder %v249, %v4741
      %v4758 = vsel %vm4742, 1, 0
      %v4759 = vsel %vm4743, 1, 0
      %v4760 = vsel %vm4744, 1, 0
      %v4761 = vsel %vm4745, 1, 0
      %v4762 = vsel %vm4746, 1, 0
      %v4763 = vsel %vm4747, 1, 0
      %v4764 = vsel %vm4748, 1, 0
      %v4765 = vsel %vm4749, 1, 0
      %v4766 = vsel %vm4750, 1, 0
      %v4767 = vsel %vm4751, 1, 0
      %v4768 = vsel %vm4752, 1, 0
      %v4769 = vsel %vm4753, 1, 0
      %v4770 = vsel %vm4754, 1, 0
      %v4771 = vsel %vm4755, 1, 0
      %v4772 = vsel %vm4756, 1, 0
      %v4773 = vsel %vm4757, 1, 0
      %v4774 = vcvt.s32.f32 %v4758
      %v4775 = vcvt.s32.f32 %v4759
      %v4776 = vcvt.s32.f32 %v4760
      %v4777 = vcvt.s32.f32 %v4761
      %v4778 = vcvt.s32.f32 %v4762
      %v4779 = vcvt.s32.f32 %v4763
      %v4780 = vcvt.s32.f32 %v4764
      %v4781 = vcvt.s32.f32 %v4765
      %v4782 = vcvt.s32.f32 %v4766
      %v4783 = vcvt.s32.f32 %v4767
      %v4784 = vcvt.s32.f32 %v4768
      %v4785 = vcvt.s32.f32 %v4769
      %v4786 = vcvt.s32.f32 %v4770
      %v4787 = vcvt.s32.f32 %v4771
      %v4788 = vcvt.s32.f32 %v4772
      %v4789 = vcvt.s32.f32 %v4773
      %v4790 = vadd.f32 %v4470, %v4774
      %v4791 = vadd.f32 %v4471, %v4775
      %v4792 = vadd.f32 %v4472, %v4776
      %v4793 = vadd.f32 %v4473, %v4777
      %v4794 = vadd.f32 %v4474, %v4778
      %v4795 = vadd.f32 %v4475, %v4779
      %v4796 = vadd.f32 %v4476, %v4780
      %v4797 = vadd.f32 %v4477, %v4781
      %v4798 = vadd.f32 %v4478, %v4782
      %v4799 = vadd.f32 %v4479, %v4783
      %v4800 = vadd.f32 %v4480, %v4784
      %v4801 = vadd.f32 %v4481, %v4785
      %v4802 = vadd.f32 %v4482, %v4786
      %v4803 = vadd.f32 %v4483, %v4787
      %v4804 = vadd.f32 %v4484, %v4788
      %v4805 = vadd.f32 %v4485, %v4789
      %v4806 = vsel %vm4742, 2147483647, %v4486
      %v4807 = vsel %vm4743, 2147483647, %v4487
      %v4808 = vsel %vm4744, 2147483647, %v4488
      %v4809 = vsel %vm4745, 2147483647, %v4489
      %v4810 = vsel %vm4746, 2147483647, %v4490
      %v4811 = vsel %vm4747, 2147483647, %v4491
      %v4812 = vsel %vm4748, 2147483647, %v4492
      %v4813 = vsel %vm4749, 2147483647, %v4493
      %v4814 = vsel %vm4750, 2147483647, %v4494
      %v4815 = vsel %vm4751, 2147483647, %v4495
      %v4816 = vsel %vm4752, 2147483647, %v4496
      %v4817 = vsel %vm4753, 2147483647, %v4497
      %v4818 = vsel %vm4754, 2147483647, %v4498
      %v4819 = vsel %vm4755, 2147483647, %v4499
      %v4820 = vsel %vm4756, 2147483647, %v4500
      %v4821 = vsel %vm4757, 2147483647, %v4501
      %v4822 = vand.u32 %v4806, 65535
      %v4823 = vshra.s32 %v4806, 16
      %v4824 = vcvt.s32.f32 %v4822
      %v4825 = vcvt.s32.f32 %v4823
      %4826 = vmin.xlane.f32.xlu0 %v4825
      %v4827 = vpop.xlane.xlu0 %4826
      %vm4828 = vcmp.eq.f32.partialorder %v4825, %v4827
      %v4829 = vsel %vm4828, %v4824, inf
      %4830 = vmin.xlane.f32.xlu0 %v4829
      %v4831 = vpop.xlane.xlu0 %4830
      %v4832 = vcvt.f32.s32 %v4831
      %v4833 = vcvt.f32.s32 %v4827
      %v4834 = vshll.u32 %v4833, 16
      %v4835 = vadd.s32 %v4834, %v4832
      %v4836 = vand.u32 %v4807, 65535
      %v4837 = vshra.s32 %v4807, 16
      %v4838 = vcvt.s32.f32 %v4836
      %v4839 = vcvt.s32.f32 %v4837
      %4840 = vmin.xlane.f32.xlu0 %v4839
      %v4841 = vpop.xlane.xlu0 %4840
      %vm4842 = vcmp.eq.f32.partialorder %v4839, %v4841
      %v4843 = vsel %vm4842, %v4838, inf
      %4844 = vmin.xlane.f32.xlu0 %v4843
      %v4845 = vpop.xlane.xlu0 %4844
      %v4846 = vcvt.f32.s32 %v4845
      %v4847 = vcvt.f32.s32 %v4841
      %v4848 = vshll.u32 %v4847, 16
      %v4849 = vadd.s32 %v4848, %v4846
      %v4850 = vand.u32 %v4808, 65535
      %v4851 = vshra.s32 %v4808, 16
      %v4852 = vcvt.s32.f32 %v4850
      %v4853 = vcvt.s32.f32 %v4851
      %4854 = vmin.xlane.f32.xlu0 %v4853
      %v4855 = vpop.xlane.xlu0 %4854
      %vm4856 = vcmp.eq.f32.partialorder %v4853, %v4855
      %v4857 = vsel %vm4856, %v4852, inf
      %4858 = vmin.xlane.f32.xlu0 %v4857
      %v4859 = vpop.xlane.xlu0 %4858
      %v4860 = vcvt.f32.s32 %v4859
      %v4861 = vcvt.f32.s32 %v4855
      %v4862 = vshll.u32 %v4861, 16
      %v4863 = vadd.s32 %v4862, %v4860
      %v4864 = vand.u32 %v4809, 65535
      %v4865 = vshra.s32 %v4809, 16
      %v4866 = vcvt.s32.f32 %v4864
      %v4867 = vcvt.s32.f32 %v4865
      %4868 = vmin.xlane.f32.xlu0 %v4867
      %v4869 = vpop.xlane.xlu0 %4868
      %vm4870 = vcmp.eq.f32.partialorder %v4867, %v4869
      %v4871 = vsel %vm4870, %v4866, inf
      %4872 = vmin.xlane.f32.xlu0 %v4871
      %v4873 = vpop.xlane.xlu0 %4872
      %v4874 = vcvt.f32.s32 %v4873
      %v4875 = vcvt.f32.s32 %v4869
      %v4876 = vshll.u32 %v4875, 16
      %v4877 = vadd.s32 %v4876, %v4874
      %v4878 = vand.u32 %v4810, 65535
      %v4879 = vshra.s32 %v4810, 16
      %v4880 = vcvt.s32.f32 %v4878
      %v4881 = vcvt.s32.f32 %v4879
      %4882 = vmin.xlane.f32.xlu0 %v4881
      %v4883 = vpop.xlane.xlu0 %4882
      %vm4884 = vcmp.eq.f32.partialorder %v4881, %v4883
      %v4885 = vsel %vm4884, %v4880, inf
      %4886 = vmin.xlane.f32.xlu0 %v4885
      %v4887 = vpop.xlane.xlu0 %4886
      %v4888 = vcvt.f32.s32 %v4887
      %v4889 = vcvt.f32.s32 %v4883
      %v4890 = vshll.u32 %v4889, 16
      %v4891 = vadd.s32 %v4890, %v4888
      %v4892 = vand.u32 %v4811, 65535
      %v4893 = vshra.s32 %v4811, 16
      %v4894 = vcvt.s32.f32 %v4892
      %v4895 = vcvt.s32.f32 %v4893
      %4896 = vmin.xlane.f32.xlu0 %v4895
      %v4897 = vpop.xlane.xlu0 %4896
      %vm4898 = vcmp.eq.f32.partialorder %v4895, %v4897
      %v4899 = vsel %vm4898, %v4894, inf
      %4900 = vmin.xlane.f32.xlu0 %v4899
      %v4901 = vpop.xlane.xlu0 %4900
      %v4902 = vcvt.f32.s32 %v4901
      %v4903 = vcvt.f32.s32 %v4897
      %v4904 = vshll.u32 %v4903, 16
      %v4905 = vadd.s32 %v4904, %v4902
      %v4906 = vand.u32 %v4812, 65535
      %v4907 = vshra.s32 %v4812, 16
      %v4908 = vcvt.s32.f32 %v4906
      %v4909 = vcvt.s32.f32 %v4907
      %4910 = vmin.xlane.f32.xlu0 %v4909
      %v4911 = vpop.xlane.xlu0 %4910
      %vm4912 = vcmp.eq.f32.partialorder %v4909, %v4911
      %v4913 = vsel %vm4912, %v4908, inf
      %4914 = vmin.xlane.f32.xlu0 %v4913
      %v4915 = vpop.xlane.xlu0 %4914
      %v4916 = vcvt.f32.s32 %v4915
      %v4917 = vcvt.f32.s32 %v4911
      %v4918 = vshll.u32 %v4917, 16
      %v4919 = vadd.s32 %v4918, %v4916
      %v4920 = vand.u32 %v4813, 65535
      %v4921 = vshra.s32 %v4813, 16
      %v4922 = vcvt.s32.f32 %v4920
      %v4923 = vcvt.s32.f32 %v4921
      %4924 = vmin.xlane.f32.xlu0 %v4923
      %v4925 = vpop.xlane.xlu0 %4924
      %vm4926 = vcmp.eq.f32.partialorder %v4923, %v4925
      %v4927 = vsel %vm4926, %v4922, inf
      %4928 = vmin.xlane.f32.xlu0 %v4927
      %v4929 = vpop.xlane.xlu0 %4928
      %v4930 = vcvt.f32.s32 %v4929
      %v4931 = vcvt.f32.s32 %v4925
      %v4932 = vshll.u32 %v4931, 16
      %v4933 = vadd.s32 %v4932, %v4930
      %v4934 = vand.u32 %v4814, 65535
      %v4935 = vshra.s32 %v4814, 16
      %v4936 = vcvt.s32.f32 %v4934
      %v4937 = vcvt.s32.f32 %v4935
      %4938 = vmin.xlane.f32.xlu0 %v4937
      %v4939 = vpop.xlane.xlu0 %4938
      %vm4940 = vcmp.eq.f32.partialorder %v4937, %v4939
      %v4941 = vsel %vm4940, %v4936, inf
      %4942 = vmin.xlane.f32.xlu0 %v4941
      %v4943 = vpop.xlane.xlu0 %4942
      %v4944 = vcvt.f32.s32 %v4943
      %v4945 = vcvt.f32.s32 %v4939
      %v4946 = vshll.u32 %v4945, 16
      %v4947 = vadd.s32 %v4946, %v4944
      %v4948 = vand.u32 %v4815, 65535
      %v4949 = vshra.s32 %v4815, 16
      %v4950 = vcvt.s32.f32 %v4948
      %v4951 = vcvt.s32.f32 %v4949
      %4952 = vmin.xlane.f32.xlu0 %v4951
      %v4953 = vpop.xlane.xlu0 %4952
      %vm4954 = vcmp.eq.f32.partialorder %v4951, %v4953
      %v4955 = vsel %vm4954, %v4950, inf
      %4956 = vmin.xlane.f32.xlu0 %v4955
      %v4957 = vpop.xlane.xlu0 %4956
      %v4958 = vcvt.f32.s32 %v4957
      %v4959 = vcvt.f32.s32 %v4953
      %v4960 = vshll.u32 %v4959, 16
      %v4961 = vadd.s32 %v4960, %v4958
      %v4962 = vand.u32 %v4816, 65535
      %v4963 = vshra.s32 %v4816, 16
      %v4964 = vcvt.s32.f32 %v4962
      %v4965 = vcvt.s32.f32 %v4963
      %4966 = vmin.xlane.f32.xlu0 %v4965
      %v4967 = vpop.xlane.xlu0 %4966
      %vm4968 = vcmp.eq.f32.partialorder %v4965, %v4967
      %v4969 = vsel %vm4968, %v4964, inf
      %4970 = vmin.xlane.f32.xlu0 %v4969
      %v4971 = vpop.xlane.xlu0 %4970
      %v4972 = vcvt.f32.s32 %v4971
      %v4973 = vcvt.f32.s32 %v4967
      %v4974 = vshll.u32 %v4973, 16
      %v4975 = vadd.s32 %v4974, %v4972
      %v4976 = vand.u32 %v4817, 65535
      %v4977 = vshra.s32 %v4817, 16
      %v4978 = vcvt.s32.f32 %v4976
      %v4979 = vcvt.s32.f32 %v4977
      %4980 = vmin.xlane.f32.xlu0 %v4979
      %v4981 = vpop.xlane.xlu0 %4980
      %vm4982 = vcmp.eq.f32.partialorder %v4979, %v4981
      %v4983 = vsel %vm4982, %v4978, inf
      %4984 = vmin.xlane.f32.xlu0 %v4983
      %v4985 = vpop.xlane.xlu0 %4984
      %v4986 = vcvt.f32.s32 %v4985
      %v4987 = vcvt.f32.s32 %v4981
      %v4988 = vshll.u32 %v4987, 16
      %v4989 = vadd.s32 %v4988, %v4986
      %v4990 = vand.u32 %v4818, 65535
      %v4991 = vshra.s32 %v4818, 16
      %v4992 = vcvt.s32.f32 %v4990
      %v4993 = vcvt.s32.f32 %v4991
      %4994 = vmin.xlane.f32.xlu0 %v4993
      %v4995 = vpop.xlane.xlu0 %4994
      %vm4996 = vcmp.eq.f32.partialorder %v4993, %v4995
      %v4997 = vsel %vm4996, %v4992, inf
      %4998 = vmin.xlane.f32.xlu0 %v4997
      %v4999 = vpop.xlane.xlu0 %4998
      %v5000 = vcvt.f32.s32 %v4999
      %v5001 = vcvt.f32.s32 %v4995
      %v5002 = vshll.u32 %v5001, 16
      %v5003 = vadd.s32 %v5002, %v5000
      %v5004 = vand.u32 %v4819, 65535
      %v5005 = vshra.s32 %v4819, 16
      %v5006 = vcvt.s32.f32 %v5004
      %v5007 = vcvt.s32.f32 %v5005
      %5008 = vmin.xlane.f32.xlu0 %v5007
      %v5009 = vpop.xlane.xlu0 %5008
      %vm5010 = vcmp.eq.f32.partialorder %v5007, %v5009
      %v5011 = vsel %vm5010, %v5006, inf
      %5012 = vmin.xlane.f32.xlu0 %v5011
      %v5013 = vpop.xlane.xlu0 %5012
      %v5014 = vcvt.f32.s32 %v5013
      %v5015 = vcvt.f32.s32 %v5009
      %v5016 = vshll.u32 %v5015, 16
      %v5017 = vadd.s32 %v5016, %v5014
      %v5018 = vand.u32 %v4820, 65535
      %v5019 = vshra.s32 %v4820, 16
      %v5020 = vcvt.s32.f32 %v5018
      %v5021 = vcvt.s32.f32 %v5019
      %5022 = vmin.xlane.f32.xlu0 %v5021
      %v5023 = vpop.xlane.xlu0 %5022
      %vm5024 = vcmp.eq.f32.partialorder %v5021, %v5023
      %v5025 = vsel %vm5024, %v5020, inf
      %5026 = vmin.xlane.f32.xlu0 %v5025
      %v5027 = vpop.xlane.xlu0 %5026
      %v5028 = vcvt.f32.s32 %v5027
      %v5029 = vcvt.f32.s32 %v5023
      %v5030 = vshll.u32 %v5029, 16
      %v5031 = vadd.s32 %v5030, %v5028
      %v5032 = vand.u32 %v4821, 65535
      %v5033 = vshra.s32 %v4821, 16
      %v5034 = vcvt.s32.f32 %v5032
      %v5035 = vcvt.s32.f32 %v5033
      %5036 = vmin.xlane.f32.xlu0 %v5035
      %v5037 = vpop.xlane.xlu0 %5036
      %vm5038 = vcmp.eq.f32.partialorder %v5035, %v5037
      %v5039 = vsel %vm5038, %v5034, inf
      %5040 = vmin.xlane.f32.xlu0 %v5039
      %v5041 = vpop.xlane.xlu0 %5040
      %v5042 = vcvt.f32.s32 %v5041
      %v5043 = vcvt.f32.s32 %v5037
      %v5044 = vshll.u32 %v5043, 16
      %v5045 = vadd.s32 %v5044, %v5042
      %v5046 = vand.u32 %v4835, 127
      %v5047 = vand.u32 %v4849, 127
      %v5048 = vand.u32 %v4863, 127
      %v5049 = vand.u32 %v4877, 127
      %v5050 = vand.u32 %v4891, 127
      %v5051 = vand.u32 %v4905, 127
      %v5052 = vand.u32 %v4919, 127
      %v5053 = vand.u32 %v4933, 127
      %v5054 = vand.u32 %v4947, 127
      %v5055 = vand.u32 %v4961, 127
      %v5056 = vand.u32 %v4975, 127
      %v5057 = vand.u32 %v4989, 127
      %v5058 = vand.u32 %v5003, 127
      %v5059 = vand.u32 %v5017, 127
      %v5060 = vand.u32 %v5031, 127
      %v5061 = vand.u32 %v5045, 127
      %vm5062 = vcmp.eq.s32.totalorder %v249, %v5046
      %vm5063 = vcmp.eq.s32.totalorder %v249, %v5047
      %vm5064 = vcmp.eq.s32.totalorder %v249, %v5048
      %vm5065 = vcmp.eq.s32.totalorder %v249, %v5049
      %vm5066 = vcmp.eq.s32.totalorder %v249, %v5050
      %vm5067 = vcmp.eq.s32.totalorder %v249, %v5051
      %vm5068 = vcmp.eq.s32.totalorder %v249, %v5052
      %vm5069 = vcmp.eq.s32.totalorder %v249, %v5053
      %vm5070 = vcmp.eq.s32.totalorder %v249, %v5054
      %vm5071 = vcmp.eq.s32.totalorder %v249, %v5055
      %vm5072 = vcmp.eq.s32.totalorder %v249, %v5056
      %vm5073 = vcmp.eq.s32.totalorder %v249, %v5057
      %vm5074 = vcmp.eq.s32.totalorder %v249, %v5058
      %vm5075 = vcmp.eq.s32.totalorder %v249, %v5059
      %vm5076 = vcmp.eq.s32.totalorder %v249, %v5060
      %vm5077 = vcmp.eq.s32.totalorder %v249, %v5061
      %v5078 = vsel %vm5062, 1, 0
      %v5079 = vsel %vm5063, 1, 0
      %v5080 = vsel %vm5064, 1, 0
      %v5081 = vsel %vm5065, 1, 0
      %v5082 = vsel %vm5066, 1, 0
      %v5083 = vsel %vm5067, 1, 0
      %v5084 = vsel %vm5068, 1, 0
      %v5085 = vsel %vm5069, 1, 0
      %v5086 = vsel %vm5070, 1, 0
      %v5087 = vsel %vm5071, 1, 0
      %v5088 = vsel %vm5072, 1, 0
      %v5089 = vsel %vm5073, 1, 0
      %v5090 = vsel %vm5074, 1, 0
      %v5091 = vsel %vm5075, 1, 0
      %v5092 = vsel %vm5076, 1, 0
      %v5093 = vsel %vm5077, 1, 0
      %v5094 = vcvt.s32.f32 %v5078
      %v5095 = vcvt.s32.f32 %v5079
      %v5096 = vcvt.s32.f32 %v5080
      %v5097 = vcvt.s32.f32 %v5081
      %v5098 = vcvt.s32.f32 %v5082
      %v5099 = vcvt.s32.f32 %v5083
      %v5100 = vcvt.s32.f32 %v5084
      %v5101 = vcvt.s32.f32 %v5085
      %v5102 = vcvt.s32.f32 %v5086
      %v5103 = vcvt.s32.f32 %v5087
      %v5104 = vcvt.s32.f32 %v5088
      %v5105 = vcvt.s32.f32 %v5089
      %v5106 = vcvt.s32.f32 %v5090
      %v5107 = vcvt.s32.f32 %v5091
      %v5108 = vcvt.s32.f32 %v5092
      %v5109 = vcvt.s32.f32 %v5093
      %v5110 = vadd.f32 %v4790, %v5094
      %v5111 = vadd.f32 %v4791, %v5095
      %v5112 = vadd.f32 %v4792, %v5096
      %v5113 = vadd.f32 %v4793, %v5097
      %v5114 = vadd.f32 %v4794, %v5098
      %v5115 = vadd.f32 %v4795, %v5099
      %v5116 = vadd.f32 %v4796, %v5100
      %v5117 = vadd.f32 %v4797, %v5101
      %v5118 = vadd.f32 %v4798, %v5102
      %v5119 = vadd.f32 %v4799, %v5103
      %v5120 = vadd.f32 %v4800, %v5104
      %v5121 = vadd.f32 %v4801, %v5105
      %v5122 = vadd.f32 %v4802, %v5106
      %v5123 = vadd.f32 %v4803, %v5107
      %v5124 = vadd.f32 %v4804, %v5108
      %v5125 = vadd.f32 %v4805, %v5109
      %5126 = vmatprep.subr.mxu0 0.0
      %5127 = vmatpush1.msra.mxu0 %v3067
      %5128 = vmatprep.subr.mxu0 0.0
      %5129 = vmatpush1.msra.mxu0 %v3068
      %5130 = vmatprep.subr.mxu0 0.0
      %5131 = vmatpush1.msra.mxu0 %v3069
      %5132 = vmatprep.subr.mxu0 0.0
      %5133 = vmatpush1.msra.mxu0 %v3070
      %5134 = vmatprep.subr.mxu0 0.0
      %5135 = vmatpush1.msra.mxu0 %v3071
      %5136 = vmatprep.subr.mxu0 0.0
      %5137 = vmatpush1.msra.mxu0 %v3072
      %5138 = vmatprep.subr.mxu0 0.0
      %5139 = vmatpush1.msra.mxu0 %v3073
      %5140 = vmatprep.subr.mxu0 0.0
      %5141 = vmatpush1.msra.mxu0 %v3074
      %5142 = vmatprep.subr.mxu0 0.0
      %5143 = vmatpush1.msra.mxu0 %v3075
      %5144 = vmatprep.subr.mxu0 0.0
      %5145 = vmatpush1.msra.mxu0 %v3076
      %5146 = vmatprep.subr.mxu0 0.0
      %5147 = vmatpush1.msra.mxu0 %v3077
      %5148 = vmatprep.subr.mxu0 0.0
      %5149 = vmatpush1.msra.mxu0 %v3078
      %5150 = vmatprep.subr.mxu0 0.0
      %5151 = vmatpush1.msra.mxu0 %v3079
      %5152 = vmatprep.subr.mxu0 0.0
      %5153 = vmatpush1.msra.mxu0 %v3080
      %5154 = vmatprep.subr.mxu0 0.0
      %5155 = vmatpush1.msra.mxu0 %v3081
      %5156 = vmatprep.subr.mxu0 0.0
      %5157 = vmatpush1.msra.mxu0 %v3082
      %5158 = vmatprep.subr.mxu0 0.0
      %5159 = vmatpush1.msra.mxu0 0.0
      %5160 = vmatprep.subr.mxu0 0.0
      %5161 = vmatpush1.msra.mxu0 0.0
      %5162 = vmatprep.subr.mxu0 0.0
      %5163 = vmatpush1.msra.mxu0 0.0
      %5164 = vmatprep.subr.mxu0 0.0
      %5165 = vmatpush1.msra.mxu0 0.0
      %5166 = vmatprep.subr.mxu0 0.0
      %5167 = vmatpush1.msra.mxu0 0.0
      %5168 = vmatprep.subr.mxu0 0.0
      %5169 = vmatpush1.msra.mxu0 0.0
      %5170 = vmatprep.subr.mxu0 0.0
      %5171 = vmatpush1.msra.mxu0 0.0
      %5172 = vmatprep.subr.mxu0 0.0
      %5173 = vmatpush1.msra.mxu0 0.0
      %5174 = vmatprep.subr.mxu0 0.0
      %5175 = vmatpush1.msra.mxu0 0.0
      %5176 = vmatprep.subr.mxu0 0.0
      %5177 = vmatpush1.msra.mxu0 0.0
      %5178 = vmatprep.subr.mxu0 0.0
      %5179 = vmatpush1.msra.mxu0 0.0
      %5180 = vmatprep.subr.mxu0 0.0
      %5181 = vmatpush1.msra.mxu0 0.0
      %5182 = vmatprep.subr.mxu0 0.0
      %5183 = vmatpush1.msra.mxu0 0.0
      %5184 = vmatprep.subr.mxu0 0.0
      %5185 = vmatpush1.msra.mxu0 0.0
      %5186 = vmatprep.subr.mxu0 0.0
      %5187 = vmatpush1.msra.mxu0 0.0
      %5188 = vmatprep.subr.mxu0 0.0
      %5189 = vmatpush1.msra.mxu0 0.0
      %5190 = vmatprep.mubr.f32.mxu0 0.0
      %5191 = vmatmul.mubr.f32.gmra.mrb[0].mxu0 %v5110
      %v5192 = vpop.f32.mrb[0].mxu0
      %v5193 = vadd.f32 0.0, %v5192
      %v5194 = vpop.f32.mrb[0].mxu0
      %5195 = vmatprep.mubr.f32.mxu0 0.0
      %5196 = vmatmul.mubr.f32.gmra.mrb[0].mxu0 %v5111
      %v5197 = vpop.f32.mrb[0].mxu0
      %v5198 = vadd.f32 0.0, %v5197
      %v5199 = vpop.f32.mrb[0].mxu0
      %5200 = vmatprep.mubr.f32.mxu0 0.0
      %5201 = vmatmul.mubr.f32.gmra.mrb[0].mxu0 %v5112
      %v5202 = vpop.f32.mrb[0].mxu0
      %v5203 = vadd.f32 0.0, %v5202
      %v5204 = vpop.f32.mrb[0].mxu0
      %5205 = vmatprep.mubr.f32.mxu0 0.0
      %5206 = vmatmul.mubr.f32.gmra.mrb[0].mxu0 %v5113
      %v5207 = vpop.f32.mrb[0].mxu0
      %v5208 = vadd.f32 0.0, %v5207
      %v5209 = vpop.f32.mrb[0].mxu0
      %5210 = vmatprep.mubr.f32.mxu0 0.0
      %5211 = vmatmul.mubr.f32.gmra.mrb[0].mxu0 %v5114
      %v5212 = vpop.f32.mrb[0].mxu0
      %v5213 = vadd.f32 0.0, %v5212
      %v5214 = vpop.f32.mrb[0].mxu0
      %5215 = vmatprep.mubr.f32.mxu0 0.0
      %5216 = vmatmul.mubr.f32.gmra.mrb[0].mxu0 %v5115
      %v5217 = vpop.f32.mrb[0].mxu0
      %v5218 = vadd.f32 0.0, %v5217
      %v5219 = vpop.f32.mrb[0].mxu0
      %5220 = vmatprep.mubr.f32.mxu0 0.0
      %5221 = vmatmul.mubr.f32.gmra.mrb[0].mxu0 %v5116
      %v5222 = vpop.f32.mrb[0].mxu0
      %v5223 = vadd.f32 0.0, %v5222
      %v5224 = vpop.f32.mrb[0].mxu0
      %5225 = vmatprep.mubr.f32.mxu0 0.0
      %5226 = vmatmul.mubr.f32.gmra.mrb[0].mxu0 %v5117
      %v5227 = vpop.f32.mrb[0].mxu0
      %v5228 = vadd.f32 0.0, %v5227
      %v5229 = vpop.f32.mrb[0].mxu0
      %5230 = vmatprep.mubr.f32.mxu0 0.0
      %5231 = vmatmul.mubr.f32.gmra.mrb[0].mxu0 %v5118
      %v5232 = vpop.f32.mrb[0].mxu0
      %v5233 = vadd.f32 0.0, %v5232
      %v5234 = vpop.f32.mrb[0].mxu0
      %5235 = vmatprep.mubr.f32.mxu0 0.0
      %5236 = vmatmul.mubr.f32.gmra.mrb[0].mxu0 %v5119
      %v5237 = vpop.f32.mrb[0].mxu0
      %v5238 = vadd.f32 0.0, %v5237
      %v5239 = vpop.f32.mrb[0].mxu0
      %5240 = vmatprep.mubr.f32.mxu0 0.0
      %5241 = vmatmul.mubr.f32.gmra.mrb[0].mxu0 %v5120
      %v5242 = vpop.f32.mrb[0].mxu0
      %v5243 = vadd.f32 0.0, %v5242
      %v5244 = vpop.f32.mrb[0].mxu0
      %5245 = vmatprep.mubr.f32.mxu0 0.0
      %5246 = vmatmul.mubr.f32.gmra.mrb[0].mxu0 %v5121
      %v5247 = vpop.f32.mrb[0].mxu0
      %v5248 = vadd.f32 0.0, %v5247
      %v5249 = vpop.f32.mrb[0].mxu0
      %5250 = vmatprep.mubr.f32.mxu0 0.0
      %5251 = vmatmul.mubr.f32.gmra.mrb[0].mxu0 %v5122
      %v5252 = vpop.f32.mrb[0].mxu0
      %v5253 = vadd.f32 0.0, %v5252
      %v5254 = vpop.f32.mrb[0].mxu0
      %5255 = vmatprep.mubr.f32.mxu0 0.0
      %5256 = vmatmul.mubr.f32.gmra.mrb[0].mxu0 %v5123
      %v5257 = vpop.f32.mrb[0].mxu0
      %v5258 = vadd.f32 0.0, %v5257
      %v5259 = vpop.f32.mrb[0].mxu0
      %5260 = vmatprep.mubr.f32.mxu0 0.0
      %5261 = vmatmul.mubr.f32.gmra.mrb[0].mxu0 %v5124
      %v5262 = vpop.f32.mrb[0].mxu0
      %v5263 = vadd.f32 0.0, %v5262
      %v5264 = vpop.f32.mrb[0].mxu0
      %5265 = vmatprep.mubr.f32.mxu0 0.0
      %5266 = vmatmul.mubr.f32.gmra.mrb[0].mxu0 %v5125
      %v5267 = vpop.f32.mrb[0].mxu0
      %v5268 = vadd.f32 0.0, %v5267
      %v5269 = vpop.f32.mrb[0].mxu0
      %5270 = vdwg.mxu0
      %v5271 = vmul.f32 %v5193, 0.2
      %v5272 = vmul.f32 %v5198, 0.2
      %v5273 = vmul.f32 %v5203, 0.2
      %v5274 = vmul.f32 %v5208, 0.2
      %v5275 = vmul.f32 %v5213, 0.2
      %v5276 = vmul.f32 %v5218, 0.2
      %v5277 = vmul.f32 %v5223, 0.2
      %v5278 = vmul.f32 %v5228, 0.2
      %v5279 = vmul.f32 %v5233, 0.2
      %v5280 = vmul.f32 %v5238, 0.2
      %v5281 = vmul.f32 %v5243, 0.2
      %v5282 = vmul.f32 %v5248, 0.2
      %v5283 = vmul.f32 %v5253, 0.2
      %v5284 = vmul.f32 %v5258, 0.2
      %v5285 = vmul.f32 %v5263, 0.2
      %v5286 = vmul.f32 %v5268, 0.2
      %v5288 = vsel %vm2464, %v5271, 0
      %v5291 = vsel %vm2464, %v5272, 0
      %v5294 = vsel %vm2464, %v5273, 0
      %v5297 = vsel %vm2464, %v5274, 0
      %v5300 = vsel %vm2464, %v5275, 0
      %v5303 = vsel %vm2464, %v5276, 0
      %v5306 = vsel %vm2464, %v5277, 0
      %v5309 = vsel %vm2464, %v5278, 0
      %v5312 = vsel %vm2464, %v5279, 0
      %v5315 = vsel %vm2464, %v5280, 0
      %v5318 = vsel %vm2464, %v5281, 0
      %v5321 = vsel %vm2464, %v5282, 0
      %v5324 = vsel %vm2464, %v5283, 0
      %v5327 = vsel %vm2464, %v5284, 0
      %v5330 = vsel %vm2464, %v5285, 0
      %v5333 = vsel %vm2464, %v5286, 0
      %5335 = vmatprep.subr.mxu0 0.0
      %5336 = vmatpush1.msra.mxu0 %v241
      %5337 = vmatprep.subr.mxu0 0.0
      %5338 = vmatpush1.msra.mxu0 0.0
      %5339 = vmatprep.subr.mxu0 0.0
      %5340 = vmatpush1.msra.mxu0 0.0
      %5341 = vmatprep.subr.mxu0 0.0
      %5342 = vmatpush1.msra.mxu0 0.0
      %5343 = vmatprep.subr.mxu0 0.0
      %5344 = vmatpush1.msra.mxu0 0.0
      %5345 = vmatprep.subr.mxu0 0.0
      %5346 = vmatpush1.msra.mxu0 0.0
      %5347 = vmatprep.subr.mxu0 0.0
      %5348 = vmatpush1.msra.mxu0 0.0
      %5349 = vmatprep.subr.mxu0 0.0
      %5350 = vmatpush1.msra.mxu0 0.0
      %5351 = vmatprep.subr.mxu0 0.0
      %5352 = vmatpush1.msra.mxu0 0.0
      %5353 = vmatprep.subr.mxu0 0.0
      %5354 = vmatpush1.msra.mxu0 0.0
      %5355 = vmatprep.subr.mxu0 0.0
      %5356 = vmatpush1.msra.mxu0 0.0
      %5357 = vmatprep.subr.mxu0 0.0
      %5358 = vmatpush1.msra.mxu0 0.0
      %5359 = vmatprep.subr.mxu0 0.0
      %5360 = vmatpush1.msra.mxu0 0.0
      %5361 = vmatprep.subr.mxu0 0.0
      %5362 = vmatpush1.msra.mxu0 0.0
      %5363 = vmatprep.subr.mxu0 0.0
      %5364 = vmatpush1.msra.mxu0 0.0
      %5365 = vmatprep.subr.mxu0 0.0
      %5366 = vmatpush1.msra.mxu0 0.0
      %5367 = vmatprep.subr.mxu0 0.0
      %5368 = vmatpush1.msra.mxu0 0.0
      %5369 = vmatprep.subr.mxu0 0.0
      %5370 = vmatpush1.msra.mxu0 0.0
      %5371 = vmatprep.subr.mxu0 0.0
      %5372 = vmatpush1.msra.mxu0 0.0
      %5373 = vmatprep.subr.mxu0 0.0
      %5374 = vmatpush1.msra.mxu0 0.0
      %5375 = vmatprep.subr.mxu0 0.0
      %5376 = vmatpush1.msra.mxu0 0.0
      %5377 = vmatprep.subr.mxu0 0.0
      %5378 = vmatpush1.msra.mxu0 0.0
      %5379 = vmatprep.subr.mxu0 0.0
      %5380 = vmatpush1.msra.mxu0 0.0
      %5381 = vmatprep.subr.mxu0 0.0
      %5382 = vmatpush1.msra.mxu0 0.0
      %5383 = vmatprep.subr.mxu0 0.0
      %5384 = vmatpush1.msra.mxu0 0.0
      %5385 = vmatprep.subr.mxu0 0.0
      %5386 = vmatpush1.msra.mxu0 0.0
      %5387 = vmatprep.subr.mxu0 0.0
      %5388 = vmatpush1.msra.mxu0 0.0
      %5389 = vmatprep.subr.mxu0 0.0
      %5390 = vmatpush1.msra.mxu0 0.0
      %5391 = vmatprep.subr.mxu0 0.0
      %5392 = vmatpush1.msra.mxu0 0.0
      %5393 = vmatprep.subr.mxu0 0.0
      %5394 = vmatpush1.msra.mxu0 0.0
      %5395 = vmatprep.subr.mxu0 0.0
      %5396 = vmatpush1.msra.mxu0 0.0
      %5397 = vmatprep.subr.mxu0 0.0
      %5398 = vmatpush1.msra.mxu0 0.0
      %5399 = vmatprep.mubr.f32.mxu0 0.0
      %5400 = vmatmul.mubr.f32.gmra.mrb[0].mxu0 %v5288
      %v5401 = vpop.f32.mrb[0].mxu0
      %v5402 = vadd.f32 %v2462, %v5401
      %v5403 = vpop.f32.mrb[0].mxu0
      %5404 = vmatprep.mubr.f32.mxu0 0.0
      %5405 = vmatmul.mubr.f32.gmra.mrb[0].mxu0 %v5291
      %v5406 = vpop.f32.mrb[0].mxu0
      %v5407 = vadd.f32 %v2462, %v5406
      %v5408 = vpop.f32.mrb[0].mxu0
      %5409 = vmatprep.mubr.f32.mxu0 0.0
      %5410 = vmatmul.mubr.f32.gmra.mrb[0].mxu0 %v5294
      %v5411 = vpop.f32.mrb[0].mxu0
      %v5412 = vadd.f32 %v2462, %v5411
      %v5413 = vpop.f32.mrb[0].mxu0
      %5414 = vmatprep.mubr.f32.mxu0 0.0
      %5415 = vmatmul.mubr.f32.gmra.mrb[0].mxu0 %v5297
      %v5416 = vpop.f32.mrb[0].mxu0
      %v5417 = vadd.f32 %v2462, %v5416
      %v5418 = vpop.f32.mrb[0].mxu0
      %5419 = vmatprep.mubr.f32.mxu0 0.0
      %5420 = vmatmul.mubr.f32.gmra.mrb[0].mxu0 %v5300
      %v5421 = vpop.f32.mrb[0].mxu0
      %v5422 = vadd.f32 %v2462, %v5421
      %v5423 = vpop.f32.mrb[0].mxu0
      %5424 = vmatprep.mubr.f32.mxu0 0.0
      %5425 = vmatmul.mubr.f32.gmra.mrb[0].mxu0 %v5303
      %v5426 = vpop.f32.mrb[0].mxu0
      %v5427 = vadd.f32 %v2462, %v5426
      %v5428 = vpop.f32.mrb[0].mxu0
      %5429 = vmatprep.mubr.f32.mxu0 0.0
      %5430 = vmatmul.mubr.f32.gmra.mrb[0].mxu0 %v5306
      %v5431 = vpop.f32.mrb[0].mxu0
      %v5432 = vadd.f32 %v2462, %v5431
      %v5433 = vpop.f32.mrb[0].mxu0
      %5434 = vmatprep.mubr.f32.mxu0 0.0
      %5435 = vmatmul.mubr.f32.gmra.mrb[0].mxu0 %v5309
      %v5436 = vpop.f32.mrb[0].mxu0
      %v5437 = vadd.f32 %v2462, %v5436
      %v5438 = vpop.f32.mrb[0].mxu0
      %5439 = vmatprep.mubr.f32.mxu0 0.0
      %5440 = vmatmul.mubr.f32.gmra.mrb[0].mxu0 %v5312
      %v5441 = vpop.f32.mrb[0].mxu0
      %v5442 = vadd.f32 %v2462, %v5441
      %v5443 = vpop.f32.mrb[0].mxu0
      %5444 = vmatprep.mubr.f32.mxu0 0.0
      %5445 = vmatmul.mubr.f32.gmra.mrb[0].mxu0 %v5315
      %v5446 = vpop.f32.mrb[0].mxu0
      %v5447 = vadd.f32 %v2462, %v5446
      %v5448 = vpop.f32.mrb[0].mxu0
      %5449 = vmatprep.mubr.f32.mxu0 0.0
      %5450 = vmatmul.mubr.f32.gmra.mrb[0].mxu0 %v5318
      %v5451 = vpop.f32.mrb[0].mxu0
      %v5452 = vadd.f32 %v2462, %v5451
      %v5453 = vpop.f32.mrb[0].mxu0
      %5454 = vmatprep.mubr.f32.mxu0 0.0
      %5455 = vmatmul.mubr.f32.gmra.mrb[0].mxu0 %v5321
      %v5456 = vpop.f32.mrb[0].mxu0
      %v5457 = vadd.f32 %v2462, %v5456
      %v5458 = vpop.f32.mrb[0].mxu0
      %5459 = vmatprep.mubr.f32.mxu0 0.0
      %5460 = vmatmul.mubr.f32.gmra.mrb[0].mxu0 %v5324
      %v5461 = vpop.f32.mrb[0].mxu0
      %v5462 = vadd.f32 %v2462, %v5461
      %v5463 = vpop.f32.mrb[0].mxu0
      %5464 = vmatprep.mubr.f32.mxu0 0.0
      %5465 = vmatmul.mubr.f32.gmra.mrb[0].mxu0 %v5327
      %v5466 = vpop.f32.mrb[0].mxu0
      %v5467 = vadd.f32 %v2462, %v5466
      %v5468 = vpop.f32.mrb[0].mxu0
      %5469 = vmatprep.mubr.f32.mxu0 0.0
      %5470 = vmatmul.mubr.f32.gmra.mrb[0].mxu0 %v5330
      %v5471 = vpop.f32.mrb[0].mxu0
      %v5472 = vadd.f32 %v2462, %v5471
      %v5473 = vpop.f32.mrb[0].mxu0
      %5474 = vmatprep.mubr.f32.mxu0 0.0
      %5475 = vmatmul.mubr.f32.gmra.mrb[0].mxu0 %v5333
      %v5476 = vpop.f32.mrb[0].mxu0
      %v5477 = vadd.f32 %v2462, %v5476
      %v5478 = vpop.f32.mrb[0].mxu0
      %5479 = vdwg.mxu0
      %v5480 = vmax.f32 %v5402, 0.0
      %v5481 = vmax.f32 %v5407, 0.0
      %v5482 = vmax.f32 %v5412, 0.0
      %v5483 = vmax.f32 %v5417, 0.0
      %v5484 = vmax.f32 %v5422, 0.0
      %v5485 = vmax.f32 %v5427, 0.0
      %v5486 = vmax.f32 %v5432, 0.0
      %v5487 = vmax.f32 %v5437, 0.0
      %v5488 = vmax.f32 %v5442, 0.0
      %v5489 = vmax.f32 %v5447, 0.0
      %v5490 = vmax.f32 %v5452, 0.0
      %v5491 = vmax.f32 %v5457, 0.0
      %v5492 = vmax.f32 %v5462, 0.0
      %v5493 = vmax.f32 %v5467, 0.0
      %v5494 = vmax.f32 %v5472, 0.0
      %v5495 = vmax.f32 %v5477, 0.0
      %v5497 = vsel %vm2674, %v5480, 0
      %v5500 = vsel %vm2674, %v5481, 0
      %v5503 = vsel %vm2674, %v5482, 0
      %v5506 = vsel %vm2674, %v5483, 0
      %v5509 = vsel %vm2674, %v5484, 0
      %v5512 = vsel %vm2674, %v5485, 0
      %v5515 = vsel %vm2674, %v5486, 0
      %v5518 = vsel %vm2674, %v5487, 0
      %v5521 = vsel %vm2674, %v5488, 0
      %v5524 = vsel %vm2674, %v5489, 0
      %v5527 = vsel %vm2674, %v5490, 0
      %v5530 = vsel %vm2674, %v5491, 0
      %v5533 = vsel %vm2674, %v5492, 0
      %v5536 = vsel %vm2674, %v5493, 0
      %v5539 = vsel %vm2674, %v5494, 0
      %v5542 = vsel %vm2674, %v5495, 0
      %5544 = vmatprep.subr.mxu0 0.0
      %5545 = vmatpush1.msra.mxu0 %v243
      %5546 = vmatprep.subr.mxu0 0.0
      %5547 = vmatpush1.msra.mxu0 %v244
      %5548 = vmatprep.subr.mxu0 0.0
      %5549 = vmatpush1.msra.mxu0 %v245
      %5550 = vmatprep.subr.mxu0 0.0
      %5551 = vmatpush1.msra.mxu0 %v246
      %5552 = vmatprep.subr.mxu0 0.0
      %5553 = vmatpush1.msra.mxu0 0.0
      %5554 = vmatprep.subr.mxu0 0.0
      %5555 = vmatpush1.msra.mxu0 0.0
      %5556 = vmatprep.subr.mxu0 0.0
      %5557 = vmatpush1.msra.mxu0 0.0
      %5558 = vmatprep.subr.mxu0 0.0
      %5559 = vmatpush1.msra.mxu0 0.0
      %5560 = vmatprep.subr.mxu0 0.0
      %5561 = vmatpush1.msra.mxu0 0.0
      %5562 = vmatprep.subr.mxu0 0.0
      %5563 = vmatpush1.msra.mxu0 0.0
      %5564 = vmatprep.subr.mxu0 0.0
      %5565 = vmatpush1.msra.mxu0 0.0
      %5566 = vmatprep.subr.mxu0 0.0
      %5567 = vmatpush1.msra.mxu0 0.0
      %5568 = vmatprep.subr.mxu0 0.0
      %5569 = vmatpush1.msra.mxu0 0.0
      %5570 = vmatprep.subr.mxu0 0.0
      %5571 = vmatpush1.msra.mxu0 0.0
      %5572 = vmatprep.subr.mxu0 0.0
      %5573 = vmatpush1.msra.mxu0 0.0
      %5574 = vmatprep.subr.mxu0 0.0
      %5575 = vmatpush1.msra.mxu0 0.0
      %5576 = vmatprep.subr.mxu0 0.0
      %5577 = vmatpush1.msra.mxu0 0.0
      %5578 = vmatprep.subr.mxu0 0.0
      %5579 = vmatpush1.msra.mxu0 0.0
      %5580 = vmatprep.subr.mxu0 0.0
      %5581 = vmatpush1.msra.mxu0 0.0
      %5582 = vmatprep.subr.mxu0 0.0
      %5583 = vmatpush1.msra.mxu0 0.0
      %5584 = vmatprep.subr.mxu0 0.0
      %5585 = vmatpush1.msra.mxu0 0.0
      %5586 = vmatprep.subr.mxu0 0.0
      %5587 = vmatpush1.msra.mxu0 0.0
      %5588 = vmatprep.subr.mxu0 0.0
      %5589 = vmatpush1.msra.mxu0 0.0
      %5590 = vmatprep.subr.mxu0 0.0
      %5591 = vmatpush1.msra.mxu0 0.0
      %5592 = vmatprep.subr.mxu0 0.0
      %5593 = vmatpush1.msra.mxu0 0.0
      %5594 = vmatprep.subr.mxu0 0.0
      %5595 = vmatpush1.msra.mxu0 0.0
      %5596 = vmatprep.subr.mxu0 0.0
      %5597 = vmatpush1.msra.mxu0 0.0
      %5598 = vmatprep.subr.mxu0 0.0
      %5599 = vmatpush1.msra.mxu0 0.0
      %5600 = vmatprep.subr.mxu0 0.0
      %5601 = vmatpush1.msra.mxu0 0.0
      %5602 = vmatprep.subr.mxu0 0.0
      %5603 = vmatpush1.msra.mxu0 0.0
      %5604 = vmatprep.subr.mxu0 0.0
      %5605 = vmatpush1.msra.mxu0 0.0
      %5606 = vmatprep.subr.mxu0 0.0
      %5607 = vmatpush1.msra.mxu0 0.0
      %5608 = vmatprep.mubr.f32.mxu0 0.0
      %5609 = vmatmul.mubr.f32.gmra.mrb[0].mxu0 %v5497
      %v5610 = vpop.f32.mrb[0].mxu0
      %v5611 = vadd.f32 0.0, %v5610
      %v5612 = vpop.f32.mrb[0].mxu0
      %5613 = vmatprep.mubr.f32.mxu0 0.0
      %5614 = vmatmul.mubr.f32.gmra.mrb[0].mxu0 %v5500
      %v5615 = vpop.f32.mrb[0].mxu0
      %v5616 = vadd.f32 0.0, %v5615
      %v5617 = vpop.f32.mrb[0].mxu0
      %5618 = vmatprep.mubr.f32.mxu0 0.0
      %5619 = vmatmul.mubr.f32.gmra.mrb[0].mxu0 %v5503
      %v5620 = vpop.f32.mrb[0].mxu0
      %v5621 = vadd.f32 0.0, %v5620
      %v5622 = vpop.f32.mrb[0].mxu0
      %5623 = vmatprep.mubr.f32.mxu0 0.0
      %5624 = vmatmul.mubr.f32.gmra.mrb[0].mxu0 %v5506
      %v5625 = vpop.f32.mrb[0].mxu0
      %v5626 = vadd.f32 0.0, %v5625
      %v5627 = vpop.f32.mrb[0].mxu0
      %5628 = vmatprep.mubr.f32.mxu0 0.0
      %5629 = vmatmul.mubr.f32.gmra.mrb[0].mxu0 %v5509
      %v5630 = vpop.f32.mrb[0].mxu0
      %v5631 = vadd.f32 0.0, %v5630
      %v5632 = vpop.f32.mrb[0].mxu0
      %5633 = vmatprep.mubr.f32.mxu0 0.0
      %5634 = vmatmul.mubr.f32.gmra.mrb[0].mxu0 %v5512
      %v5635 = vpop.f32.mrb[0].mxu0
      %v5636 = vadd.f32 0.0, %v5635
      %v5637 = vpop.f32.mrb[0].mxu0
      %5638 = vmatprep.mubr.f32.mxu0 0.0
      %5639 = vmatmul.mubr.f32.gmra.mrb[0].mxu0 %v5515
      %v5640 = vpop.f32.mrb[0].mxu0
      %v5641 = vadd.f32 0.0, %v5640
      %v5642 = vpop.f32.mrb[0].mxu0
      %5643 = vmatprep.mubr.f32.mxu0 0.0
      %5644 = vmatmul.mubr.f32.gmra.mrb[0].mxu0 %v5518
      %v5645 = vpop.f32.mrb[0].mxu0
      %v5646 = vadd.f32 0.0, %v5645
      %v5647 = vpop.f32.mrb[0].mxu0
      %5648 = vmatprep.mubr.f32.mxu0 0.0
      %5649 = vmatmul.mubr.f32.gmra.mrb[0].mxu0 %v5521
      %v5650 = vpop.f32.mrb[0].mxu0
      %v5651 = vadd.f32 0.0, %v5650
      %v5652 = vpop.f32.mrb[0].mxu0
      %5653 = vmatprep.mubr.f32.mxu0 0.0
      %5654 = vmatmul.mubr.f32.gmra.mrb[0].mxu0 %v5524
      %v5655 = vpop.f32.mrb[0].mxu0
      %v5656 = vadd.f32 0.0, %v5655
      %v5657 = vpop.f32.mrb[0].mxu0
      %5658 = vmatprep.mubr.f32.mxu0 0.0
      %5659 = vmatmul.mubr.f32.gmra.mrb[0].mxu0 %v5527
      %v5660 = vpop.f32.mrb[0].mxu0
      %v5661 = vadd.f32 0.0, %v5660
      %v5662 = vpop.f32.mrb[0].mxu0
      %5663 = vmatprep.mubr.f32.mxu0 0.0
      %5664 = vmatmul.mubr.f32.gmra.mrb[0].mxu0 %v5530
      %v5665 = vpop.f32.mrb[0].mxu0
      %v5666 = vadd.f32 0.0, %v5665
      %v5667 = vpop.f32.mrb[0].mxu0
      %5668 = vmatprep.mubr.f32.mxu0 0.0
      %5669 = vmatmul.mubr.f32.gmra.mrb[0].mxu0 %v5533
      %v5670 = vpop.f32.mrb[0].mxu0
      %v5671 = vadd.f32 0.0, %v5670
      %v5672 = vpop.f32.mrb[0].mxu0
      %5673 = vmatprep.mubr.f32.mxu0 0.0
      %5674 = vmatmul.mubr.f32.gmra.mrb[0].mxu0 %v5536
      %v5675 = vpop.f32.mrb[0].mxu0
      %v5676 = vadd.f32 0.0, %v5675
      %v5677 = vpop.f32.mrb[0].mxu0
      %5678 = vmatprep.mubr.f32.mxu0 0.0
      %5679 = vmatmul.mubr.f32.gmra.mrb[0].mxu0 %v5539
      %v5680 = vpop.f32.mrb[0].mxu0
      %v5681 = vadd.f32 0.0, %v5680
      %v5682 = vpop.f32.mrb[0].mxu0
      %5683 = vmatprep.mubr.f32.mxu0 0.0
      %5684 = vmatmul.mubr.f32.gmra.mrb[0].mxu0 %v5542
      %v5685 = vpop.f32.mrb[0].mxu0
      %v5686 = vadd.f32 0.0, %v5685
      %v5687 = vpop.f32.mrb[0].mxu0
      %5688 = vdwg.mxu0
      %5689 = vmatprep.subr.mxu0 0.0
      %5690 = vmatpush1.msra.mxu0 %v5611
      %5691 = vmatprep.subr.mxu0 0.0
      %5692 = vmatpush1.msra.mxu0 %v5616
      %5693 = vmatprep.subr.mxu0 0.0
      %5694 = vmatpush1.msra.mxu0 %v5621
      %5695 = vmatprep.subr.mxu0 0.0
      %5696 = vmatpush1.msra.mxu0 %v5626
      %5697 = vmatprep.subr.mxu0 0.0
      %5698 = vmatpush1.msra.mxu0 %v5631
      %5699 = vmatprep.subr.mxu0 0.0
      %5700 = vmatpush1.msra.mxu0 %v5636
      %5701 = vmatprep.subr.mxu0 0.0
      %5702 = vmatpush1.msra.mxu0 %v5641
      %5703 = vmatprep.subr.mxu0 0.0
      %5704 = vmatpush1.msra.mxu0 %v5646
      %5705 = vmatprep.subr.mxu0 0.0
      %5706 = vmatpush1.msra.mxu0 %v5651
      %5707 = vmatprep.subr.mxu0 0.0
      %5708 = vmatpush1.msra.mxu0 %v5656
      %5709 = vmatprep.subr.mxu0 0.0
      %5710 = vmatpush1.msra.mxu0 %v5661
      %5711 = vmatprep.subr.mxu0 0.0
      %5712 = vmatpush1.msra.mxu0 %v5666
      %5713 = vmatprep.subr.mxu0 0.0
      %5714 = vmatpush1.msra.mxu0 %v5671
      %5715 = vmatprep.subr.mxu0 0.0
      %5716 = vmatpush1.msra.mxu0 %v5676
      %5717 = vmatprep.subr.mxu0 0.0
      %5718 = vmatpush1.msra.mxu0 %v5681
      %5719 = vmatprep.subr.mxu0 0.0
      %5720 = vmatpush1.msra.mxu0 %v5686
      %5721 = vmatprep.subr.mxu0 0.0
      %5722 = vmatpush1.msra.mxu0 0.0
      %5723 = vmatprep.subr.mxu0 0.0
      %5724 = vmatpush1.msra.mxu0 0.0
      %5725 = vmatprep.subr.mxu0 0.0
      %5726 = vmatpush1.msra.mxu0 0.0
      %5727 = vmatprep.subr.mxu0 0.0
      %5728 = vmatpush1.msra.mxu0 0.0
      %5729 = vmatprep.subr.mxu0 0.0
      %5730 = vmatpush1.msra.mxu0 0.0
      %5731 = vmatprep.subr.mxu0 0.0
      %5732 = vmatpush1.msra.mxu0 0.0
      %5733 = vmatprep.subr.mxu0 0.0
      %5734 = vmatpush1.msra.mxu0 0.0
      %5735 = vmatprep.subr.mxu0 0.0
      %5736 = vmatpush1.msra.mxu0 0.0
      %5737 = vmatprep.subr.mxu0 0.0
      %5738 = vmatpush1.msra.mxu0 0.0
      %5739 = vmatprep.subr.mxu0 0.0
      %5740 = vmatpush1.msra.mxu0 0.0
      %5741 = vmatprep.subr.mxu0 0.0
      %5742 = vmatpush1.msra.mxu0 0.0
      %5743 = vmatprep.subr.mxu0 0.0
      %5744 = vmatpush1.msra.mxu0 0.0
      %5745 = vmatprep.subr.mxu0 0.0
      %5746 = vmatpush1.msra.mxu0 0.0
      %5747 = vmatprep.subr.mxu0 0.0
      %5748 = vmatpush1.msra.mxu0 0.0
      %5749 = vmatprep.subr.mxu0 0.0
      %5750 = vmatpush1.msra.mxu0 0.0
      %5751 = vmatprep.subr.mxu0 0.0
      %5752 = vmatpush1.msra.mxu0 0.0
      %5753 = vmatprep.mubr.f32.mxu0 0.0
      %5754 = vmatmul.mubr.f32.gmra.mrb[0].mxu0 %v5110
      %v5755 = vpop.f32.mrb[0].mxu0
      %v5756 = vadd.f32 0.0, %v5755
      %v5757 = vpop.f32.mrb[0].mxu0
      %5758 = vmatprep.mubr.f32.mxu0 0.0
      %5759 = vmatmul.mubr.f32.gmra.mrb[0].mxu0 %v5111
      %v5760 = vpop.f32.mrb[0].mxu0
      %v5761 = vadd.f32 0.0, %v5760
      %v5762 = vpop.f32.mrb[0].mxu0
      %5763 = vmatprep.mubr.f32.mxu0 0.0
      %5764 = vmatmul.mubr.f32.gmra.mrb[0].mxu0 %v5112
      %v5765 = vpop.f32.mrb[0].mxu0
      %v5766 = vadd.f32 0.0, %v5765
      %v5767 = vpop.f32.mrb[0].mxu0
      %5768 = vmatprep.mubr.f32.mxu0 0.0
      %5769 = vmatmul.mubr.f32.gmra.mrb[0].mxu0 %v5113
      %v5770 = vpop.f32.mrb[0].mxu0
      %v5771 = vadd.f32 0.0, %v5770
      %v5772 = vpop.f32.mrb[0].mxu0
      %5773 = vmatprep.mubr.f32.mxu0 0.0
      %5774 = vmatmul.mubr.f32.gmra.mrb[0].mxu0 %v5114
      %v5775 = vpop.f32.mrb[0].mxu0
      %v5776 = vadd.f32 0.0, %v5775
      %v5777 = vpop.f32.mrb[0].mxu0
      %5778 = vmatprep.mubr.f32.mxu0 0.0
      %5779 = vmatmul.mubr.f32.gmra.mrb[0].mxu0 %v5115
      %v5780 = vpop.f32.mrb[0].mxu0
      %v5781 = vadd.f32 0.0, %v5780
      %v5782 = vpop.f32.mrb[0].mxu0
      %5783 = vmatprep.mubr.f32.mxu0 0.0
      %5784 = vmatmul.mubr.f32.gmra.mrb[0].mxu0 %v5116
      %v5785 = vpop.f32.mrb[0].mxu0
      %v5786 = vadd.f32 0.0, %v5785
      %v5787 = vpop.f32.mrb[0].mxu0
      %5788 = vmatprep.mubr.f32.mxu0 0.0
      %5789 = vmatmul.mubr.f32.gmra.mrb[0].mxu0 %v5117
      %v5790 = vpop.f32.mrb[0].mxu0
      %v5791 = vadd.f32 0.0, %v5790
      %v5792 = vpop.f32.mrb[0].mxu0
      %5793 = vmatprep.mubr.f32.mxu0 0.0
      %5794 = vmatmul.mubr.f32.gmra.mrb[0].mxu0 %v5118
      %v5795 = vpop.f32.mrb[0].mxu0
      %v5796 = vadd.f32 0.0, %v5795
      %v5797 = vpop.f32.mrb[0].mxu0
      %5798 = vmatprep.mubr.f32.mxu0 0.0
      %5799 = vmatmul.mubr.f32.gmra.mrb[0].mxu0 %v5119
      %v5800 = vpop.f32.mrb[0].mxu0
      %v5801 = vadd.f32 0.0, %v5800
      %v5802 = vpop.f32.mrb[0].mxu0
      %5803 = vmatprep.mubr.f32.mxu0 0.0
      %5804 = vmatmul.mubr.f32.gmra.mrb[0].mxu0 %v5120
      %v5805 = vpop.f32.mrb[0].mxu0
      %v5806 = vadd.f32 0.0, %v5805
      %v5807 = vpop.f32.mrb[0].mxu0
      %5808 = vmatprep.mubr.f32.mxu0 0.0
      %5809 = vmatmul.mubr.f32.gmra.mrb[0].mxu0 %v5121
      %v5810 = vpop.f32.mrb[0].mxu0
      %v5811 = vadd.f32 0.0, %v5810
      %v5812 = vpop.f32.mrb[0].mxu0
      %5813 = vmatprep.mubr.f32.mxu0 0.0
      %5814 = vmatmul.mubr.f32.gmra.mrb[0].mxu0 %v5122
      %v5815 = vpop.f32.mrb[0].mxu0
      %v5816 = vadd.f32 0.0, %v5815
      %v5817 = vpop.f32.mrb[0].mxu0
      %5818 = vmatprep.mubr.f32.mxu0 0.0
      %5819 = vmatmul.mubr.f32.gmra.mrb[0].mxu0 %v5123
      %v5820 = vpop.f32.mrb[0].mxu0
      %v5821 = vadd.f32 0.0, %v5820
      %v5822 = vpop.f32.mrb[0].mxu0
      %5823 = vmatprep.mubr.f32.mxu0 0.0
      %5824 = vmatmul.mubr.f32.gmra.mrb[0].mxu0 %v5124
      %v5825 = vpop.f32.mrb[0].mxu0
      %v5826 = vadd.f32 0.0, %v5825
      %v5827 = vpop.f32.mrb[0].mxu0
      %5828 = vmatprep.mubr.f32.mxu0 0.0
      %5829 = vmatmul.mubr.f32.gmra.mrb[0].mxu0 %v5125
      %v5830 = vpop.f32.mrb[0].mxu0
      %v5831 = vadd.f32 0.0, %v5830
      %v5832 = vpop.f32.mrb[0].mxu0
      %5833 = vdwg.mxu0
      %v5834 = vmul.f32 %v5756, 0.2
      %v5835 = vmul.f32 %v5761, 0.2
      %v5836 = vmul.f32 %v5766, 0.2
      %v5837 = vmul.f32 %v5771, 0.2
      %v5838 = vmul.f32 %v5776, 0.2
      %v5839 = vmul.f32 %v5781, 0.2
      %v5840 = vmul.f32 %v5786, 0.2
      %v5841 = vmul.f32 %v5791, 0.2
      %v5842 = vmul.f32 %v5796, 0.2
      %v5843 = vmul.f32 %v5801, 0.2
      %v5844 = vmul.f32 %v5806, 0.2
      %v5845 = vmul.f32 %v5811, 0.2
      %v5846 = vmul.f32 %v5816, 0.2
      %v5847 = vmul.f32 %v5821, 0.2
      %v5848 = vmul.f32 %v5826, 0.2
      %v5849 = vmul.f32 %v5831, 0.2
      %v5850 = vadd.f32 %v5834, %v3033
      %v5851 = vadd.f32 %v5835, %v3033
      %v5852 = vadd.f32 %v5836, %v3033
      %v5853 = vadd.f32 %v5837, %v3033
      %v5854 = vadd.f32 %v5838, %v3033
      %v5855 = vadd.f32 %v5839, %v3033
      %v5856 = vadd.f32 %v5840, %v3033
      %v5857 = vadd.f32 %v5841, %v3033
      %v5858 = vadd.f32 %v5842, %v3033
      %v5859 = vadd.f32 %v5843, %v3033
      %v5860 = vadd.f32 %v5844, %v3033
      %v5861 = vadd.f32 %v5845, %v3033
      %v5862 = vadd.f32 %v5846, %v3033
      %v5863 = vadd.f32 %v5847, %v3033
      %v5864 = vadd.f32 %v5848, %v3033
      %v5865 = vadd.f32 %v5849, %v3033
      %v5866 = vmul.f32 %v5850, 0.001
      %v5867 = vmul.f32 %v5851, 0.001
      %v5868 = vmul.f32 %v5852, 0.001
      %v5869 = vmul.f32 %v5853, 0.001
      %v5870 = vmul.f32 %v5854, 0.001
      %v5871 = vmul.f32 %v5855, 0.001
      %v5872 = vmul.f32 %v5856, 0.001
      %v5873 = vmul.f32 %v5857, 0.001
      %v5874 = vmul.f32 %v5858, 0.001
      %v5875 = vmul.f32 %v5859, 0.001
      %v5876 = vmul.f32 %v5860, 0.001
      %v5877 = vmul.f32 %v5861, 0.001
      %v5878 = vmul.f32 %v5862, 0.001
      %v5879 = vmul.f32 %v5863, 0.001
      %v5880 = vmul.f32 %v5864, 0.001
      %v5881 = vmul.f32 %v5865, 0.001
      %v5882 = vadd.f32 %v3067, %v5866
      %v5883 = vadd.f32 %v3068, %v5867
      %v5884 = vadd.f32 %v3069, %v5868
      %v5885 = vadd.f32 %v3070, %v5869
      %v5886 = vadd.f32 %v3071, %v5870
      %v5887 = vadd.f32 %v3072, %v5871
      %v5888 = vadd.f32 %v3073, %v5872
      %v5889 = vadd.f32 %v3074, %v5873
      %v5890 = vadd.f32 %v3075, %v5874
      %v5891 = vadd.f32 %v3076, %v5875
      %v5892 = vadd.f32 %v3077, %v5876
      %v5893 = vadd.f32 %v3078, %v5877
      %v5894 = vadd.f32 %v3079, %v5878
      %v5895 = vadd.f32 %v3080, %v5879
      %v5896 = vadd.f32 %v3081, %v5880
      %v5897 = vadd.f32 %v3082, %v5881
      %5898 = vst.msk [vmem:[%s224] sm:$0xff] %vm2464, %v5882
      %5899 = vst.msk [vmem:[%s224 + $0x8] sm:$0xff] %vm2464, %v5883
      %5900 = vst.msk [vmem:[%s224 + $0x10] sm:$0xff] %vm2464, %v5884
      %5901 = vst.msk [vmem:[%s224 + $0x18] sm:$0xff] %vm2464, %v5885
      %5902 = vst.msk [vmem:[%s224 + $0x20] sm:$0xff] %vm2464, %v5886
      %5903 = vst.msk [vmem:[%s224 + $0x28] sm:$0xff] %vm2464, %v5887
      %5904 = vst.msk [vmem:[%s224 + $0x30] sm:$0xff] %vm2464, %v5888
      %5905 = vst.msk [vmem:[%s224 + $0x38] sm:$0xff] %vm2464, %v5889
      %5906 = vst.msk [vmem:[%s224 + $0x40] sm:$0xff] %vm2464, %v5890
      %5907 = vst.msk [vmem:[%s224 + $0x48] sm:$0xff] %vm2464, %v5891
      %5908 = vst.msk [vmem:[%s224 + $0x50] sm:$0xff] %vm2464, %v5892
      %5909 = vst.msk [vmem:[%s224 + $0x58] sm:$0xff] %vm2464, %v5893
      %5910 = vst.msk [vmem:[%s224 + $0x60] sm:$0xff] %vm2464, %v5894
      %5911 = vst.msk [vmem:[%s224 + $0x68] sm:$0xff] %vm2464, %v5895
      %5912 = vst.msk [vmem:[%s224 + $0x70] sm:$0xff] %vm2464, %v5896
      %5913 = vst.msk [vmem:[%s224 + $0x78] sm:$0xff] %vm2464, %v5897
      %p5914 = scmp.lt.s32.totalorder %s16, 1
      %s5915 = scalar_select %p5914, %s16, 1
      %s5916 = smul.addr %s5915, 16
      %s5917 = smul.addr %s5916, 8
      %s5918 = scalar_lea.vmem %s5, %s5917
      // Predicated region
      $region41: #{tpu_custom_call.1} parent=39 // pred_check
        %p5919 = pneg %p144
      $region42: #{tpu_custom_call.1} parent=39 // pred_check_branch
        %5921 = sbr.rel (%p5919) target = $region44
      $region43: #{tpu_custom_call.1} parent=39 // pred_region
        _
      $region44: #{tpu_custom_call.1} parent=39 // pred_fallthru
        _
    $region40: #{tpu_custom_call.1} parent=5 // pred_fallthru
      _
    %p5922 = scmp.le.s32.totalorder 2, %s11
    // Predicated region
    $region45: #{tpu_custom_call.1} parent=5 // pred_check
      %p5923 = pneg %p5922
    $region46: #{tpu_custom_call.1} parent=5 // pred_check_branch
      %5925 = sbr.rel (%p5923) target = $region48
    $region47: #{tpu_custom_call.1} parent=5 // pred_region
      %s5926 = ssub.s32 %s11, 2
      // Predicated region
      $region49: #{tpu_custom_call.1} parent=47 // pred_check
        %p5927 = pneg %p150
      $region50: #{tpu_custom_call.1} parent=47 // pred_check_branch
        %5929 = sbr.rel (%p5927) target = $region52
      $region51: #{tpu_custom_call.1} parent=47 // pred_region
        %p5930 = scmp.lt.s32.totalorder %s17, 1
        %s5931 = scalar_select %p5930, %s17, 1
        %s5932 = smul.addr %s5931, 16
        %s5933 = smul.addr %s5932, 8
        %s5934 = scalar_lea.vmem %s5, %s5933
      $region52: #{tpu_custom_call.1} parent=47 // pred_fallthru
        _
    $region48: #{tpu_custom_call.1} parent=5 // pred_fallthru
      _
  $region6: #{tpu_custom_call.1} parent=0 // loop_footer
    %s15 = sadd.s32 1, %s11
  $region7: #{tpu_custom_call.1} parent=0 // loop_footer_branch
    %10 = sbr.rel target = $region3
  $region8: #{tpu_custom_call.1} parent=0 // loop_exit
    _

</llo_original>
